<compile_context>
chip_gen: v7x
topology: tpu7x:2x2x1
jax: 0.10.0
libtpu: 0.0.40
codegen_flags: <defaults>
</compile_context>

<pallas_src>
import jax
import jax.numpy as jnp
import numpy as np
from jax.experimental import pallas as pl
from jax.experimental.pallas import tpu as pltpu


TIME_CHUNK = 8          # timesteps per pipelined grid step (review: 8-16)
MAX_BATCH_TILE = 128    # recurrence batch tile (review: <=128 rows)


def _round_up(a, b):
    return -(-a // b) * b


# ----------------------------------------------------------------------------
# Kernel 1: bi-GRU recurrence with fused per-chunk input-to-hidden matmul.
# grid = (direction, batch_tile, time_chunk); h carried in VMEM scratch.
# ----------------------------------------------------------------------------
def gru_chunk_kernel(len_ref, x_ref, wih_ref, bias_ref, whh_ref, bhhn_ref,
                     h0_ref, h_ref, gi_scr, h_scr):
    d = pl.program_id(0)          # 0 = forward, 1 = backward
    c = pl.program_id(2)          # serial time-chunk index
    C = pl.num_programs(2)
    TC, Bt, E = x_ref.shape
    H = h_scr.shape[-1]

    # (Re)initialize the carried hidden state at the first chunk of each
    # (direction, batch-tile) pair; h0 broadcast happens in-kernel.
    @pl.when(c == 0)
    def _():
        h_scr[...] = jnp.broadcast_to(h0_ref[...], (Bt, H))

    # Fused input-to-hidden matmul for THIS chunk only (bf16 on MXU, f32 acc);
    # result lives in a VMEM scratch, never round-trips HBM.
    x2d = x_ref[...].reshape(TC * Bt, E)
    gi_scr[...] = (jnp.dot(x2d, wih_ref[...],
                           preferred_element_type=jnp.float32)
                   + bias_ref[...]).reshape(TC, Bt, 3 * H)

    lens = len_ref[...]                                   # (Bt, 1) int32
    bhhn = jnp.broadcast_to(bhhn_ref[...], (Bt, H))       # hoisted broadcast
    # First original-order timestep covered by this chunk (the x BlockSpec
    # already delivers chunks in reversed order for the backward direction).
    chunk_t0 = (d * (C - 1) + (1 - 2 * d) * c) * TC
    h = h_scr[...]

    def sigmoid_eup(v):
        # one EUP tanh instead of exp + divide
        return 0.5 * (1.0 + jnp.tanh(0.5 * v))

    def step(s, h):
        lt = d * (TC - 1) + (1 - 2 * d) * s               # reversed inside bwd chunk
        tt = chunk_t0 + lt                                # original time index
        gi = gi_scr[lt]                                   # (Bt, 3H) f32
        gh = jnp.dot(h.astype(jnp.bfloat16), whh_ref[...],
                     preferred_element_type=jnp.float32)  # (Bt, 3H) f32
        r = sigmoid_eup(gi[:, :H] + gh[:, :H])
        z = sigmoid_eup(gi[:, H:2 * H] + gh[:, H:2 * H])
        n = jnp.tanh(gi[:, 2 * H:] + r * (gh[:, 2 * H:] + bhhn))
        h_new = (1.0 - z) * n + z * h
        return jnp.where(tt < lens, h_new, h)             # packed-seq masking

    # partial unroll: LLO visibility without the vreg-spill cliff of a full
    # unroll over long chunks.
    h = jax.lax.fori_loop(0, TC, step, h, unroll=min(TC, 8))
    h_scr[...] = h

    @pl.when(c == C - 1)
    def _():
        h_ref[...] = h


# ----------------------------------------------------------------------------
# Kernel 2: classifier.  Concat of fwd/bwd hidden is fused into the first
# matmul; activations through the MXU in bf16, accumulation f32.
# ----------------------------------------------------------------------------
def classifier_kernel(h_ref, w1f_ref, w1b_ref, b1_ref, w2_ref, b2_ref,
                      w3_ref, b3_ref, w4_ref, b4_ref, out_ref):
    bf16 = jnp.bfloat16
    hf = h_ref[0].astype(bf16)            # forward final hidden  (Bt, H)
    hb = h_ref[1].astype(bf16)            # backward final hidden (Bt, H)
    # [hf | hb] @ W1  ==  hf @ W1[:H] + hb @ W1[H:]
    x = (jnp.dot(hf, w1f_ref[...], preferred_element_type=jnp.float32)
         + jnp.dot(hb, w1b_ref[...], preferred_element_type=jnp.float32)
         + b1_ref[...])
    x = jnp.maximum(x, 0.0).astype(bf16)
    x = jnp.maximum(jnp.dot(x, w2_ref[...], preferred_element_type=jnp.float32)
                    + b2_ref[...], 0.0).astype(bf16)
    x = jnp.maximum(jnp.dot(x, w3_ref[...], preferred_element_type=jnp.float32)
                    + b3_ref[...], 0.0).astype(bf16)
    logits = (jnp.dot(x, w4_ref[...], preferred_element_type=jnp.float32)
              + b4_ref[...])                              # (Bt, 2)
    m = jnp.max(logits, axis=1, keepdims=True)
    s = logits - m
    out_ref[...] = s - jnp.log(jnp.sum(jnp.exp(s), axis=1, keepdims=True))


# ----------------------------------------------------------------------------
# Parameter prep (once, outside the forward): bf16 casts, bias fusion,
# W1 split for the fused concat.
# ----------------------------------------------------------------------------
def prepare_params(vocab_vec, gru_params, h0_param, cls_params):
    w_ih, w_hh, b_ih, b_hh = gru_params       # (2,E,3H),(2,H,3H),(2,1,3H),(2,1,3H)
    H = w_hh.shape[1]
    bf16 = jnp.bfloat16
    # fuse b_hh_{r,z} into the gi bias; b_hh_n stays separate (it sits inside
    # the r * (...) term of the GRU n-gate).
    bias_pre = b_ih + jnp.concatenate(
        [b_hh[:, :, :2 * H], jnp.zeros_like(b_hh[:, :, 2 * H:])], axis=-1)
    b_hh_n = b_hh[:, :, 2 * H:]
    w1, b1, w2, b2, w3, b3, w4, b4 = cls_params
    return dict(
        vocab=vocab_vec.astype(bf16),
        w_ih=w_ih.astype(bf16),
        w_hh=w_hh.astype(bf16),
        bias_pre=bias_pre.astype(jnp.float32),
        b_hh_n=b_hh_n.astype(jnp.float32),
        h0=h0_param.astype(jnp.float32),          # (2, 1, H), broadcast in-kernel
        cls=(w1[:H].astype(bf16), w1[H:].astype(bf16), b1,
             w2.astype(bf16), b2, w3.astype(bf16), b3, w4.astype(bf16), b4),
    )


# ----------------------------------------------------------------------------
# Full forward pass.  Embedding gather / padding are plain-JAX glue.
# ----------------------------------------------------------------------------
@jax.jit
def baseline_gru_forward(seq, lengths, params):
    T, B = seq.shape
    H = params["h0"].shape[-1]
    E = params["vocab"].shape[-1]

    TC = TIME_CHUNK
    T_pad = _round_up(T, TC)
    B_tile = min(MAX_BATCH_TILE, _round_up(B, 8))
    Bp = _round_up(B, B_tile)

    if (T_pad, Bp) != (T, B):
        seq = jnp.pad(seq, ((0, T_pad - T), (0, Bp - B)))
        lengths = jnp.pad(lengths, (0, Bp - B))     # padded rows: length 0

    x = params["vocab"][seq]                        # (T_pad, Bp, E) bf16  (glue)
    len2d = lengths.astype(jnp.int32).reshape(Bp, 1)

    C = T_pad // TC
    nb = Bp // B_tile

    # explicit scoped-VMEM budget: double-buffered blocks + scratch + headroom
    blk = (2 * (TC * B_tile * E * 2)                # x chunk (bf16)
           + 2 * (E * 3 * H * 2)                    # W_ih (bf16)
           + 2 * (H * 3 * H * 2)                    # W_hh (bf16)
           + 2 * (3 * H + H + H) * 4                # biases + h0 (f32)
           + 2 * (B_tile * 128 * 4)                 # lengths (lane-padded)
           + 2 * (B_tile * H * 4))                  # h output (f32)
    scr = TC * B_tile * 3 * H * 4 + B_tile * H * 4  # gi + h scratch
    vmem_limit = int(min(blk + scr + (8 << 20), 64 << 20))

    # --- Kernel 1: recurrence with fused per-chunk gi matmul ----------------
    h_final = pl.pallas_call(
        gru_chunk_kernel,
        out_shape=jax.ShapeDtypeStruct((2, Bp, H), jnp.float32),
        grid=(2, nb, C),
        in_specs=[
            pl.BlockSpec((B_tile, 1), lambda d, b, c: (b, 0)),            # lengths
            pl.BlockSpec((TC, B_tile, E),                                  # x chunk
                         lambda d, b, c: (d * (C - 1) + (1 - 2 * d) * c, b, 0)),
            pl.BlockSpec((None, E, 3 * H), lambda d, b, c: (d, 0, 0)),    # W_ih
            pl.BlockSpec((None, 1, 3 * H), lambda d, b, c: (d, 0, 0)),    # bias_pre
            pl.BlockSpec((None, H, 3 * H), lambda d, b, c: (d, 0, 0)),    # W_hh
            pl.BlockSpec((None, 1, H), lambda d, b, c: (d, 0, 0)),        # b_hh_n
            pl.BlockSpec((None, 1, H), lambda d, b, c: (d, 0, 0)),        # h0
        ],
        out_specs=pl.BlockSpec((None, B_tile, H), lambda d, b, c: (d, b, 0)),
        scratch_shapes=[pltpu.VMEM((TC, B_tile, 3 * H), jnp.float32),     # gi chunk
                        pltpu.VMEM((B_tile, H), jnp.float32)],            # carried h
        compiler_params=pltpu.CompilerParams(
            dimension_semantics=("parallel", "parallel", "arbitrary"),
            vmem_limit_bytes=vmem_limit),
    )(len2d, x, params["w_ih"], params["bias_pre"], params["w_hh"],
      params["b_hh_n"], params["h0"])

    # --- Kernel 2: classifier (concat fused into first matmul) -------------
    # TODO(synk): on v7x, consider fusing the classifier into the recurrence's
    # last-chunk finalize so both TensorCores stay busy through the MLP.
    cls = params["cls"]
    w_specs = [pl.BlockSpec(p.shape, lambda b: (0, 0)) for p in cls]
    out = pl.pallas_call(
        classifier_kernel,
        out_shape=jax.ShapeDtypeStruct((Bp, 2), jnp.float32),
        grid=(nb,),
        in_specs=[pl.BlockSpec((2, B_tile, H), lambda b: (0, b, 0))] + w_specs,
        out_specs=pl.BlockSpec((B_tile, 2), lambda b: (b, 0)),
        compiler_params=pltpu.CompilerParams(
            dimension_semantics=("parallel",)),
    )(h_final, *cls)
    return out[:B]


# ----------------------------------------------------------------------------
# Pure-JAX f32 reference for a correctness sanity check.
# ----------------------------------------------------------------------------
def ref_forward(seq, lengths, vocab_vec, gru_params, h0_param, cls_params):
    w_ih, w_hh, b_ih, b_hh = gru_params
    T, B = seq.shape
    H = h0_param.shape[-1]
    x = vocab_vec[seq]

    def cell(d, xt, h):
        gi = xt @ w_ih[d] + b_ih[d]
        gh = h @ w_hh[d] + b_hh[d]
        r = jax.nn.sigmoid(gi[:, :H] + gh[:, :H])
        z = jax.nn.sigmoid(gi[:, H:2 * H] + gh[:, H:2 * H])
        n = jnp.tanh(gi[:, 2 * H:] + r * gh[:, 2 * H:])
        return (1.0 - z) * n + z * h

    hf = jnp.broadcast_to(h0_param[0], (B, H))
    for t in range(T):
        hf = jnp.where((t < lengths)[:, None], cell(0, x[t], hf), hf)
    hb = jnp.broadcast_to(h0_param[1], (B, H))
    for t in range(T - 1, -1, -1):
        hb = jnp.where((t < lengths)[:, None], cell(1, x[t], hb), hb)

    h_cat = jnp.concatenate([hf, hb], axis=-1)
    w1, b1, w2, b2, w3, b3, w4, b4 = cls_params
    a = jnp.maximum(h_cat @ w1 + b1, 0.0)
    a = jnp.maximum(a @ w2 + b2, 0.0)
    a = jnp.maximum(a @ w3 + b3, 0.0)
    logits = a @ w4 + b4
    return jax.nn.log_softmax(logits, axis=1)


if __name__ == "__main__":
    T, B = 8, 4                 # seq is (T, B), PyTorch batch_first=False
    VOCAB, E = 64, 128          # embedding_dim constructor arg
    H = 256                     # hidden_dim_gru (fixed by the module)

    key = jax.random.PRNGKey(0)
    keys = jax.random.split(key, 16)

    vocab_vec = 0.1 * jax.random.normal(keys[0], (VOCAB, E), jnp.float32)
    seq = jax.random.randint(keys[1], (T, B), 0, VOCAB, jnp.int32)
    lengths = jnp.array([T, T - 1, 5, 3], jnp.int32)   # sorted desc, max == T

    # GRU params, stored transposed (in, 3H) per direction; gate order r,z,n.
    k = 1.0 / np.sqrt(H)
    w_ih = jax.random.uniform(keys[2], (2, E, 3 * H), jnp.float32, -k, k)
    w_hh = jax.random.uniform(keys[3], (2, H, 3 * H), jnp.float32, -k, k)
    b_ih = jax.random.uniform(keys[4], (2, 1, 3 * H), jnp.float32, -k, k)
    b_hh = jax.random.uniform(keys[5], (2, 1, 3 * H), jnp.float32, -k, k)
    gru_params = (w_ih, w_hh, b_ih, b_hh)

    # Trainable initial hidden state (zeros, as in the module).
    h0_param = jnp.zeros((2, 1, H), jnp.float32)

    def linear_init(kw, kb, fin, fout):
        kk = 1.0 / np.sqrt(fin)
        w = jax.random.uniform(kw, (fin, fout), jnp.float32, -kk, kk)
        b = jax.random.uniform(kb, (1, fout), jnp.float32, -kk, kk)
        return w, b

    w1, b1 = linear_init(keys[6], keys[7], 2 * H, 512)
    w2, b2 = linear_init(keys[8], keys[9], 512, 256)
    w3, b3 = linear_init(keys[10], keys[11], 256, 256)
    w4, b4 = linear_init(keys[12], keys[13], 256, 2)
    cls_params = (w1, b1, w2, b2, w3, b3, w4, b4)

    params = prepare_params(vocab_vec, gru_params, h0_param, cls_params)
    out = baseline_gru_forward(seq, lengths, params)
    out = jax.block_until_ready(out)

    ref = ref_forward(seq, lengths, vocab_vec, gru_params, h0_param,
                      cls_params)
    # Kernel runs weights/activations in bf16 (f32 accumulation); reference
    # is pure f32, hence the slightly relaxed tolerance.
    np.testing.assert_allclose(np.asarray(out), np.asarray(ref),
                               rtol=2e-2, atol=2e-2)

    assert out.shape == (B, 2) and out.dtype == jnp.float32
    print("KERNEL_OK")
</pallas_src>

<mosaic_0001>
module attributes {stable_mosaic.version = 11 : i64} {
  func.func @classifier_kernel(%arg0: i32, %arg1: memref<2x8x256xf32, #tpu.memory_space<vmem>>, %arg2: memref<256x512xbf16, #tpu.memory_space<vmem>>, %arg3: memref<256x512xbf16, #tpu.memory_space<vmem>>, %arg4: memref<1x512xf32, #tpu.memory_space<vmem>>, %arg5: memref<512x256xbf16, #tpu.memory_space<vmem>>, %arg6: memref<1x256xf32, #tpu.memory_space<vmem>>, %arg7: memref<256x256xbf16, #tpu.memory_space<vmem>>, %arg8: memref<1x256xf32, #tpu.memory_space<vmem>>, %arg9: memref<256x2xbf16, #tpu.memory_space<vmem>>, %arg10: memref<1x2xf32, #tpu.memory_space<vmem>>, %arg11: memref<8x2xf32, #tpu.memory_space<vmem>>) attributes {dimension_semantics = [#tpu.dimension_semantics<parallel>], iteration_bounds = array<i64: 1>, scalar_prefetch = 0 : i64, scratch_operands = 0 : i64, tpu.core_type = #tpu.core_type<tc>, window_params = [{transform_indices = @transform_0, window_bounds = array<i64: 2, 8, 256>}, {pipeline_mode = #tpu.pipeline_mode<synchronous>, transform_indices = @transform_1, window_bounds = array<i64: 256, 512>}, {pipeline_mode = #tpu.pipeline_mode<synchronous>, transform_indices = @transform_2, window_bounds = array<i64: 256, 512>}, {pipeline_mode = #tpu.pipeline_mode<synchronous>, transform_indices = @transform_3, window_bounds = array<i64: 1, 512>}, {pipeline_mode = #tpu.pipeline_mode<synchronous>, transform_indices = @transform_4, window_bounds = array<i64: 512, 256>}, {pipeline_mode = #tpu.pipeline_mode<synchronous>, transform_indices = @transform_5, window_bounds = array<i64: 1, 256>}, {pipeline_mode = #tpu.pipeline_mode<synchronous>, transform_indices = @transform_6, window_bounds = array<i64: 256, 256>}, {pipeline_mode = #tpu.pipeline_mode<synchronous>, transform_indices = @transform_7, window_bounds = array<i64: 1, 256>}, {pipeline_mode = #tpu.pipeline_mode<synchronous>, transform_indices = @transform_8, window_bounds = array<i64: 256, 2>}, {pipeline_mode = #tpu.pipeline_mode<synchronous>, transform_indices = @transform_9, window_bounds = array<i64: 1, 2>}, {transform_indices = @transform_10, window_bounds = array<i64: 8, 2>}]} {
    %c0 = arith.constant 0 : index
    %c0_0 = arith.constant 0 : index
    %c0_1 = arith.constant 0 : index
    %0 = vector.load %arg1[%c0, %c0_0, %c0_1] : memref<2x8x256xf32, #tpu.memory_space<vmem>>, vector<1x8x256xf32>
    %1 = vector.shape_cast %0 : vector<1x8x256xf32> to vector<8x256xf32>
    %2 = arith.truncf %1 : vector<8x256xf32> to vector<8x256xbf16>
    %c1 = arith.constant 1 : index
    %c0_2 = arith.constant 0 : index
    %c0_3 = arith.constant 0 : index
    %3 = vector.load %arg1[%c1, %c0_2, %c0_3] : memref<2x8x256xf32, #tpu.memory_space<vmem>>, vector<1x8x256xf32>
    %4 = vector.shape_cast %3 : vector<1x8x256xf32> to vector<8x256xf32>
    %5 = arith.truncf %4 : vector<8x256xf32> to vector<8x256xbf16>
    %c0_4 = arith.constant 0 : index
    %c0_5 = arith.constant 0 : index
    %6 = vector.load %arg2[%c0_4, %c0_5] : memref<256x512xbf16, #tpu.memory_space<vmem>>, vector<256x512xbf16>
    %cst = arith.constant dense<0.000000e+00> : vector<8x512xf32>
    %7 = tpu.matmul %2, %6, %cst {dimension_numbers = #tpu.dot_dimension_numbers<[1], [0], [0], [1], [0, 0, 1, 1], [], []>} : vector<8x256xbf16>, vector<256x512xbf16>, vector<8x512xf32> -> vector<8x512xf32>
    %c0_6 = arith.constant 0 : index
    %c0_7 = arith.constant 0 : index
    %8 = vector.load %arg3[%c0_6, %c0_7] : memref<256x512xbf16, #tpu.memory_space<vmem>>, vector<256x512xbf16>
    %cst_8 = arith.constant dense<0.000000e+00> : vector<8x512xf32>
    %9 = tpu.matmul %5, %8, %cst_8 {dimension_numbers = #tpu.dot_dimension_numbers<[1], [0], [0], [1], [0, 0, 1, 1], [], []>} : vector<8x256xbf16>, vector<256x512xbf16>, vector<8x512xf32> -> vector<8x512xf32>
    %10 = arith.addf %7, %9 : vector<8x512xf32>
    %c0_9 = arith.constant 0 : index
    %c0_10 = arith.constant 0 : index
    %11 = vector.load %arg4[%c0_9, %c0_10] : memref<1x512xf32, #tpu.memory_space<vmem>>, vector<1x512xf32>
    %12 = vector.broadcast %11 : vector<1x512xf32> to vector<8x512xf32>
    %13 = arith.addf %10, %12 : vector<8x512xf32>
    %cst_11 = arith.constant 0.000000e+00 : f32
    %14 = vector.broadcast %cst_11 : f32 to vector<8x512xf32>
    %15 = arith.maximumf %13, %14 : vector<8x512xf32>
    %16 = arith.truncf %15 : vector<8x512xf32> to vector<8x512xbf16>
    %c0_12 = arith.constant 0 : index
    %c0_13 = arith.constant 0 : index
    %17 = vector.load %arg5[%c0_12, %c0_13] : memref<512x256xbf16, #tpu.memory_space<vmem>>, vector<512x256xbf16>
    %cst_14 = arith.constant dense<0.000000e+00> : vector<8x256xf32>
    %18 = tpu.matmul %16, %17, %cst_14 {dimension_numbers = #tpu.dot_dimension_numbers<[1], [0], [0], [1], [0, 0, 1, 1], [], []>} : vector<8x512xbf16>, vector<512x256xbf16>, vector<8x256xf32> -> vector<8x256xf32>
    %c0_15 = arith.constant 0 : index
    %c0_16 = arith.constant 0 : index
    %19 = vector.load %arg6[%c0_15, %c0_16] : memref<1x256xf32, #tpu.memory_space<vmem>>, vector<1x256xf32>
    %20 = vector.broadcast %19 : vector<1x256xf32> to vector<8x256xf32>
    %21 = arith.addf %18, %20 : vector<8x256xf32>
    %cst_17 = arith.constant 0.000000e+00 : f32
    %22 = vector.broadcast %cst_17 : f32 to vector<8x256xf32>
    %23 = arith.maximumf %21, %22 : vector<8x256xf32>
    %24 = arith.truncf %23 : vector<8x256xf32> to vector<8x256xbf16>
    %c0_18 = arith.constant 0 : index
    %c0_19 = arith.constant 0 : index
    %25 = vector.load %arg7[%c0_18, %c0_19] : memref<256x256xbf16, #tpu.memory_space<vmem>>, vector<256x256xbf16>
    %cst_20 = arith.constant dense<0.000000e+00> : vector<8x256xf32>
    %26 = tpu.matmul %24, %25, %cst_20 {dimension_numbers = #tpu.dot_dimension_numbers<[1], [0], [0], [1], [0, 0, 1, 1], [], []>} : vector<8x256xbf16>, vector<256x256xbf16>, vector<8x256xf32> -> vector<8x256xf32>
    %c0_21 = arith.constant 0 : index
    %c0_22 = arith.constant 0 : index
    %27 = vector.load %arg8[%c0_21, %c0_22] : memref<1x256xf32, #tpu.memory_space<vmem>>, vector<1x256xf32>
    %28 = vector.broadcast %27 : vector<1x256xf32> to vector<8x256xf32>
    %29 = arith.addf %26, %28 : vector<8x256xf32>
    %cst_23 = arith.constant 0.000000e+00 : f32
    %30 = vector.broadcast %cst_23 : f32 to vector<8x256xf32>
    %31 = arith.maximumf %29, %30 : vector<8x256xf32>
    %32 = arith.truncf %31 : vector<8x256xf32> to vector<8x256xbf16>
    %c0_24 = arith.constant 0 : index
    %c0_25 = arith.constant 0 : index
    %33 = vector.load %arg9[%c0_24, %c0_25] : memref<256x2xbf16, #tpu.memory_space<vmem>>, vector<256x2xbf16>
    %cst_26 = arith.constant dense<0.000000e+00> : vector<8x2xf32>
    %34 = tpu.matmul %32, %33, %cst_26 {dimension_numbers = #tpu.dot_dimension_numbers<[1], [0], [0], [1], [0, 0, 1, 1], [], []>} : vector<8x256xbf16>, vector<256x2xbf16>, vector<8x2xf32> -> vector<8x2xf32>
    %c0_27 = arith.constant 0 : index
    %c0_28 = arith.constant 0 : index
    %35 = vector.load %arg10[%c0_27, %c0_28] : memref<1x2xf32, #tpu.memory_space<vmem>>, vector<1x2xf32>
    %36 = vector.broadcast %35 : vector<1x2xf32> to vector<8x2xf32>
    %37 = arith.addf %34, %36 : vector<8x2xf32>
    %cst_29 = arith.constant dense<0xFF800000> : vector<8xf32>
    %38 = vector.multi_reduction <maximumf>, %37, %cst_29 [1] : vector<8x2xf32> to vector<8xf32>
    %39 = vector.shape_cast %38 : vector<8xf32> to vector<8x1xf32>
    %40 = vector.broadcast %39 : vector<8x1xf32> to vector<8x2xf32>
    %41 = arith.subf %37, %40 : vector<8x2xf32>
    %42 = math.exp %41 : vector<8x2xf32>
    %cst_30 = arith.constant dense<0.000000e+00> : vector<8xf32>
    %43 = vector.multi_reduction <add>, %42, %cst_30 [1] : vector<8x2xf32> to vector<8xf32>
    %44 = vector.shape_cast %43 : vector<8xf32> to vector<8x1xf32>
    %45 = math.log %44 : vector<8x1xf32>
    %46 = vector.broadcast %45 : vector<8x1xf32> to vector<8x2xf32>
    %47 = arith.subf %41, %46 : vector<8x2xf32>
    %c0_31 = arith.constant 0 : index
    %c0_32 = arith.constant 0 : index
    %48 = vector.load %arg11[%c0_31, %c0_32] : memref<8x2xf32, #tpu.memory_space<vmem>>, vector<8x2xf32>
    tpu.vector_store %arg11[%c0_31, %c0_32], %47 {strides = array<i32>} : memref<8x2xf32, #tpu.memory_space<vmem>>, vector<8x2xf32>,
    return
  }
  func.func @transform_0(%arg0: i32) -> (i32, i32, i32) {
    %c0_i32 = arith.constant 0 : i32
    %c0_i32_0 = arith.constant 0 : i32
    %c0_i32_1 = arith.constant 0 : i32
    return %c0_i32, %arg0, %c0_i32_0 : i32, i32, i32
  }
  func.func @transform_1(%arg0: i32) -> (i32, i32) {
    %c0_i32 = arith.constant 0 : i32
    %c0_i32_0 = arith.constant 0 : i32
    %c0_i32_1 = arith.constant 0 : i32
    return %c0_i32, %c0_i32_0 : i32, i32
  }
  func.func @transform_2(%arg0: i32) -> (i32, i32) {
    %c0_i32 = arith.constant 0 : i32
    %c0_i32_0 = arith.constant 0 : i32
    %c0_i32_1 = arith.constant 0 : i32
    return %c0_i32, %c0_i32_0 : i32, i32
  }
  func.func @transform_3(%arg0: i32) -> (i32, i32) {
    %c0_i32 = arith.constant 0 : i32
    %c0_i32_0 = arith.constant 0 : i32
    %c0_i32_1 = arith.constant 0 : i32
    return %c0_i32, %c0_i32_0 : i32, i32
  }
  func.func @transform_4(%arg0: i32) -> (i32, i32) {
    %c0_i32 = arith.constant 0 : i32
    %c0_i32_0 = arith.constant 0 : i32
    %c0_i32_1 = arith.constant 0 : i32
    return %c0_i32, %c0_i32_0 : i32, i32
  }
  func.func @transform_5(%arg0: i32) -> (i32, i32) {
    %c0_i32 = arith.constant 0 : i32
    %c0_i32_0 = arith.constant 0 : i32
    %c0_i32_1 = arith.constant 0 : i32
    return %c0_i32, %c0_i32_0 : i32, i32
  }
  func.func @transform_6(%arg0: i32) -> (i32, i32) {
    %c0_i32 = arith.constant 0 : i32
    %c0_i32_0 = arith.constant 0 : i32
    %c0_i32_1 = arith.constant 0 : i32
    return %c0_i32, %c0_i32_0 : i32, i32
  }
  func.func @transform_7(%arg0: i32) -> (i32, i32) {
    %c0_i32 = arith.constant 0 : i32
    %c0_i32_0 = arith.constant 0 : i32
    %c0_i32_1 = arith.constant 0 : i32
    return %c0_i32, %c0_i32_0 : i32, i32
  }
  func.func @transform_8(%arg0: i32) -> (i32, i32) {
    %c0_i32 = arith.constant 0 : i32
    %c0_i32_0 = arith.constant 0 : i32
    %c0_i32_1 = arith.constant 0 : i32
    return %c0_i32, %c0_i32_0 : i32, i32
  }
  func.func @transform_9(%arg0: i32) -> (i32, i32) {
    %c0_i32 = arith.constant 0 : i32
    %c0_i32_0 = arith.constant 0 : i32
    %c0_i32_1 = arith.constant 0 : i32
    return %c0_i32, %c0_i32_0 : i32, i32
  }
  func.func @transform_10(%arg0: i32) -> (i32, i32) {
    %c0_i32 = arith.constant 0 : i32
    %c0_i32_0 = arith.constant 0 : i32
    return %arg0, %c0_i32 : i32, i32
  }
}

module attributes {stable_mosaic.version = 11 : i64} {
  func.func @gru_chunk_kernel(%arg0: i32, %arg1: i32, %arg2: i32, %arg3: memref<8x1xi32, #tpu.memory_space<vmem>>, %arg4: memref<8x8x128xbf16, #tpu.memory_space<vmem>>, %arg5: memref<1x128x768xbf16, #tpu.memory_space<vmem>>, %arg6: memref<1x1x768xf32, #tpu.memory_space<vmem>>, %arg7: memref<1x256x768xbf16, #tpu.memory_space<vmem>>, %arg8: memref<1x1x256xf32, #tpu.memory_space<vmem>>, %arg9: memref<1x1x256xf32, #tpu.memory_space<vmem>>, %arg10: memref<1x8x256xf32, #tpu.memory_space<vmem>>, %arg11: memref<8x8x768xf32, #tpu.memory_space<vmem>>, %arg12: memref<8x256xf32, #tpu.memory_space<vmem>>) attributes {dimension_semantics = [#tpu.dimension_semantics<parallel>, #tpu.dimension_semantics<parallel>, #tpu.dimension_semantics<arbitrary>], iteration_bounds = array<i64: 2, 1, 1>, scalar_prefetch = 0 : i64, scratch_operands = 2 : i64, tpu.core_type = #tpu.core_type<tc>, window_params = [{transform_indices = @transform_0, window_bounds = array<i64: 8, 1>}, {transform_indices = @transform_1, window_bounds = array<i64: 8, 8, 128>}, {transform_indices = @transform_2, window_bounds = array<i64: 1, 128, 768>}, {transform_indices = @transform_3, window_bounds = array<i64: 1, 1, 768>}, {transform_indices = @transform_4, window_bounds = array<i64: 1, 256, 768>}, {transform_indices = @transform_5, window_bounds = array<i64: 1, 1, 256>}, {transform_indices = @transform_6, window_bounds = array<i64: 1, 1, 256>}, {transform_indices = @transform_7, window_bounds = array<i64: 1, 8, 256>}]} {
    %c0_i32 = arith.constant 0 : i32
    %0 = arith.cmpi eq, %arg2, %c0_i32 : i32
    %1 = arith.extui %0 : i1 to i32
    %c0_i32_0 = arith.constant 0 : i32
    %2 = arith.cmpi ne, %1, %c0_i32_0 : i32
    scf.if %2 {
      %c0_156 = arith.constant 0 : index
      %c0_157 = arith.constant 0 : index
      %c0_158 = arith.constant 0 : index
      %422 = vector.load %arg9[%c0_156, %c0_157, %c0_158] : memref<1x1x256xf32, #tpu.memory_space<vmem>>, vector<1x1x256xf32>
      %423 = vector.shape_cast %422 : vector<1x1x256xf32> to vector<1x256xf32>
      %424 = vector.shape_cast %423 : vector<1x256xf32> to vector<1x256xf32>
      %425 = vector.broadcast %424 : vector<1x256xf32> to vector<8x256xf32>
      %c0_159 = arith.constant 0 : index
      %c0_160 = arith.constant 0 : index
      %426 = vector.load %arg12[%c0_159, %c0_160] : memref<8x256xf32, #tpu.memory_space<vmem>>, vector<8x256xf32>
      tpu.vector_store %arg12[%c0_159, %c0_160], %425 {strides = array<i32>} : memref<8x256xf32, #tpu.memory_space<vmem>>, vector<8x256xf32>,
    } else {
    }
    %c0 = arith.constant 0 : index
    %c0_1 = arith.constant 0 : index
    %c0_2 = arith.constant 0 : index
    %3 = vector.load %arg4[%c0, %c0_1, %c0_2] : memref<8x8x128xbf16, #tpu.memory_space<vmem>>, vector<8x8x128xbf16>
    %4 = vector.shape_cast %3 : vector<8x8x128xbf16> to vector<64x128xbf16>
    %c0_3 = arith.constant 0 : index
    %c0_4 = arith.constant 0 : index
    %c0_5 = arith.constant 0 : index
    %5 = vector.load %arg5[%c0_3, %c0_4, %c0_5] : memref<1x128x768xbf16, #tpu.memory_space<vmem>>, vector<1x128x768xbf16>
    %6 = vector.shape_cast %5 : vector<1x128x768xbf16> to vector<128x768xbf16>
    %cst = arith.constant dense<0.000000e+00> : vector<64x768xf32>
    %7 = tpu.matmul %4, %6, %cst {dimension_numbers = #tpu.dot_dimension_numbers<[1], [0], [0], [1], [0, 0, 1, 1], [], []>} : vector<64x128xbf16>, vector<128x768xbf16>, vector<64x768xf32> -> vector<64x768xf32>
    %c0_6 = arith.constant 0 : index
    %c0_7 = arith.constant 0 : index
    %c0_8 = arith.constant 0 : index
    %8 = vector.load %arg6[%c0_6, %c0_7, %c0_8] : memref<1x1x768xf32, #tpu.memory_space<vmem>>, vector<1x1x768xf32>
    %9 = vector.shape_cast %8 : vector<1x1x768xf32> to vector<1x768xf32>
    %10 = vector.broadcast %9 : vector<1x768xf32> to vector<64x768xf32>
    %11 = arith.addf %7, %10 : vector<64x768xf32>
    %12 = vector.shape_cast %11 : vector<64x768xf32> to vector<8x8x768xf32>
    %c0_9 = arith.constant 0 : index
    %c0_10 = arith.constant 0 : index
    %c0_11 = arith.constant 0 : index
    %13 = vector.load %arg11[%c0_9, %c0_10, %c0_11] : memref<8x8x768xf32, #tpu.memory_space<vmem>>, vector<8x8x768xf32>
    tpu.vector_store %arg11[%c0_9, %c0_10, %c0_11], %12 {strides = array<i32>} : memref<8x8x768xf32, #tpu.memory_space<vmem>>, vector<8x8x768xf32>,
    %c0_12 = arith.constant 0 : index
    %c0_13 = arith.constant 0 : index
    %14 = vector.load %arg3[%c0_12, %c0_13] : memref<8x1xi32, #tpu.memory_space<vmem>>, vector<8x1xi32>
    %c0_14 = arith.constant 0 : index
    %c0_15 = arith.constant 0 : index
    %c0_16 = arith.constant 0 : index
    %15 = vector.load %arg8[%c0_14, %c0_15, %c0_16] : memref<1x1x256xf32, #tpu.memory_space<vmem>>, vector<1x1x256xf32>
    %16 = vector.shape_cast %15 : vector<1x1x256xf32> to vector<1x256xf32>
    %17 = vector.shape_cast %16 : vector<1x256xf32> to vector<1x256xf32>
    %18 = vector.broadcast %17 : vector<1x256xf32> to vector<8x256xf32>
    %c0_i32_17 = arith.constant 0 : i32
    %19 = arith.muli %arg0, %c0_i32_17 : i32
    %c2_i32 = arith.constant 2 : i32
    %20 = arith.muli %c2_i32, %arg0 : i32
    %c1_i32 = arith.constant 1 : i32
    %21 = arith.subi %c1_i32, %20 : i32
    %22 = arith.muli %21, %arg2 : i32
    %23 = arith.addi %19, %22 : i32
    %c8_i32 = arith.constant 8 : i32
    %24 = arith.muli %23, %c8_i32 : i32
    %c0_18 = arith.constant 0 : index
    %c0_19 = arith.constant 0 : index
    %25 = vector.load %arg12[%c0_18, %c0_19] : memref<8x256xf32, #tpu.memory_space<vmem>>, vector<8x256xf32>
    %c0_i32_20 = arith.constant 0 : i32
    %c7_i32 = arith.constant 7 : i32
    %26 = arith.muli %arg0, %c7_i32 : i32
    %c2_i32_21 = arith.constant 2 : i32
    %27 = arith.muli %c2_i32_21, %arg0 : i32
    %c1_i32_22 = arith.constant 1 : i32
    %28 = arith.subi %c1_i32_22, %27 : i32
    %29 = arith.muli %28, %c0_i32_20 : i32
    %30 = arith.addi %26, %29 : i32
    %31 = arith.addi %24, %30 : i32
    %32 = arith.index_cast %30 : i32 to index
    %c0_23 = arith.constant 0 : index
    %c0_24 = arith.constant 0 : index
    %33 = vector.load %arg11[%32, %c0_23, %c0_24] : memref<8x8x768xf32, #tpu.memory_space<vmem>>, vector<1x8x768xf32>
    %34 = vector.shape_cast %33 : vector<1x8x768xf32> to vector<8x768xf32>
    %35 = arith.truncf %25 : vector<8x256xf32> to vector<8x256xbf16>
    %c0_25 = arith.constant 0 : index
    %c0_26 = arith.constant 0 : index
    %c0_27 = arith.constant 0 : index
    %36 = vector.load %arg7[%c0_25, %c0_26, %c0_27] : memref<1x256x768xbf16, #tpu.memory_space<vmem>>, vector<1x256x768xbf16>
    %37 = vector.shape_cast %36 : vector<1x256x768xbf16> to vector<256x768xbf16>
    %cst_28 = arith.constant dense<0.000000e+00> : vector<8x768xf32>
    %38 = tpu.matmul %35, %37, %cst_28 {dimension_numbers = #tpu.dot_dimension_numbers<[1], [0], [0], [1], [0, 0, 1, 1], [], []>} : vector<8x256xbf16>, vector<256x768xbf16>, vector<8x768xf32> -> vector<8x768xf32>
    %39 = vector.extract_strided_slice %34 {offsets = [0, 0], sizes = [8, 256], strides = [1, 1]} : vector<8x768xf32> to vector<8x256xf32>
    %40 = vector.extract_strided_slice %38 {offsets = [0, 0], sizes = [8, 256], strides = [1, 1]} : vector<8x768xf32> to vector<8x256xf32>
    %41 = arith.addf %39, %40 : vector<8x256xf32>
    %cst_29 = arith.constant 5.000000e-01 : f32
    %42 = vector.broadcast %cst_29 : f32 to vector<8x256xf32>
    %43 = arith.mulf %42, %41 : vector<8x256xf32>
    %44 = math.tanh %43 : vector<8x256xf32>
    %cst_30 = arith.constant 1.000000e+00 : f32
    %45 = vector.broadcast %cst_30 : f32 to vector<8x256xf32>
    %46 = arith.addf %45, %44 : vector<8x256xf32>
    %cst_31 = arith.constant 5.000000e-01 : f32
    %47 = vector.broadcast %cst_31 : f32 to vector<8x256xf32>
    %48 = arith.mulf %47, %46 : vector<8x256xf32>
    %49 = vector.extract_strided_slice %34 {offsets = [0, 256], sizes = [8, 256], strides = [1, 1]} : vector<8x768xf32> to vector<8x256xf32>
    %50 = vector.extract_strided_slice %38 {offsets = [0, 256], sizes = [8, 256], strides = [1, 1]} : vector<8x768xf32> to vector<8x256xf32>
    %51 = arith.addf %49, %50 : vector<8x256xf32>
    %cst_32 = arith.constant 5.000000e-01 : f32
    %52 = vector.broadcast %cst_32 : f32 to vector<8x256xf32>
    %53 = arith.mulf %52, %51 : vector<8x256xf32>
    %54 = math.tanh %53 : vector<8x256xf32>
    %cst_33 = arith.constant 1.000000e+00 : f32
    %55 = vector.broadcast %cst_33 : f32 to vector<8x256xf32>
    %56 = arith.addf %55, %54 : vector<8x256xf32>
    %cst_34 = arith.constant 5.000000e-01 : f32
    %57 = vector.broadcast %cst_34 : f32 to vector<8x256xf32>
    %58 = arith.mulf %57, %56 : vector<8x256xf32>
    %59 = vector.extract_strided_slice %34 {offsets = [0, 512], sizes = [8, 256], strides = [1, 1]} : vector<8x768xf32> to vector<8x256xf32>
    %60 = vector.extract_strided_slice %38 {offsets = [0, 512], sizes = [8, 256], strides = [1, 1]} : vector<8x768xf32> to vector<8x256xf32>
    %61 = arith.addf %60, %18 : vector<8x256xf32>
    %62 = arith.mulf %48, %61 : vector<8x256xf32>
    %63 = arith.addf %59, %62 : vector<8x256xf32>
    %64 = math.tanh %63 : vector<8x256xf32>
    %cst_35 = arith.constant 1.000000e+00 : f32
    %65 = vector.broadcast %cst_35 : f32 to vector<8x256xf32>
    %66 = arith.subf %65, %58 : vector<8x256xf32>
    %67 = arith.mulf %66, %64 : vector<8x256xf32>
    %68 = arith.mulf %58, %25 : vector<8x256xf32>
    %69 = arith.addf %67, %68 : vector<8x256xf32>
    %70 = vector.broadcast %31 : i32 to vector<8x1xi32>
    %71 = arith.cmpi slt, %70, %14 : vector<8x1xi32>
    %72 = vector.shape_cast %71 : vector<8x1xi1> to vector<8x1xi1>
    %73 = vector.broadcast %72 : vector<8x1xi1> to vector<8x256xi1>
    %74 = arith.select %73, %69, %25 : vector<8x256xi1>, vector<8x256xf32>
    %c1_i32_36 = arith.constant 1 : i32
    %c7_i32_37 = arith.constant 7 : i32
    %75 = arith.muli %arg0, %c7_i32_37 : i32
    %c2_i32_38 = arith.constant 2 : i32
    %76 = arith.muli %c2_i32_38, %arg0 : i32
    %c1_i32_39 = arith.constant 1 : i32
    %77 = arith.subi %c1_i32_39, %76 : i32
    %78 = arith.muli %77, %c1_i32_36 : i32
    %79 = arith.addi %75, %78 : i32
    %80 = arith.addi %24, %79 : i32
    %81 = arith.index_cast %79 : i32 to index
    %c0_40 = arith.constant 0 : index
    %c0_41 = arith.constant 0 : index
    %82 = vector.load %arg11[%81, %c0_40, %c0_41] : memref<8x8x768xf32, #tpu.memory_space<vmem>>, vector<1x8x768xf32>
    %83 = vector.shape_cast %82 : vector<1x8x768xf32> to vector<8x768xf32>
    %84 = arith.truncf %74 : vector<8x256xf32> to vector<8x256xbf16>
    %c0_42 = arith.constant 0 : index
    %c0_43 = arith.constant 0 : index
    %c0_44 = arith.constant 0 : index
    %85 = vector.load %arg7[%c0_42, %c0_43, %c0_44] : memref<1x256x768xbf16, #tpu.memory_space<vmem>>, vector<1x256x768xbf16>
    %86 = vector.shape_cast %85 : vector<1x256x768xbf16> to vector<256x768xbf16>
    %cst_45 = arith.constant dense<0.000000e+00> : vector<8x768xf32>
    %87 = tpu.matmul %84, %86, %cst_45 {dimension_numbers = #tpu.dot_dimension_numbers<[1], [0], [0], [1], [0, 0, 1, 1], [], []>} : vector<8x256xbf16>, vector<256x768xbf16>, vector<8x768xf32> -> vector<8x768xf32>
    %88 = vector.extract_strided_slice %83 {offsets = [0, 0], sizes = [8, 256], strides = [1, 1]} : vector<8x768xf32> to vector<8x256xf32>
    %89 = vector.extract_strided_slice %87 {offsets = [0, 0], sizes = [8, 256], strides = [1, 1]} : vector<8x768xf32> to vector<8x256xf32>
    %90 = arith.addf %88, %89 : vector<8x256xf32>
    %cst_46 = arith.constant 5.000000e-01 : f32
    %91 = vector.broadcast %cst_46 : f32 to vector<8x256xf32>
    %92 = arith.mulf %91, %90 : vector<8x256xf32>
    %93 = math.tanh %92 : vector<8x256xf32>
    %cst_47 = arith.constant 1.000000e+00 : f32
    %94 = vector.broadcast %cst_47 : f32 to vector<8x256xf32>
    %95 = arith.addf %94, %93 : vector<8x256xf32>
    %cst_48 = arith.constant 5.000000e-01 : f32
    %96 = vector.broadcast %cst_48 : f32 to vector<8x256xf32>
    %97 = arith.mulf %96, %95 : vector<8x256xf32>
    %98 = vector.extract_strided_slice %83 {offsets = [0, 256], sizes = [8, 256], strides = [1, 1]} : vector<8x768xf32> to vector<8x256xf32>
    %99 = vector.extract_strided_slice %87 {offsets = [0, 256], sizes = [8, 256], strides = [1, 1]} : vector<8x768xf32> to vector<8x256xf32>
    %100 = arith.addf %98, %99 : vector<8x256xf32>
    %cst_49 = arith.constant 5.000000e-01 : f32
    %101 = vector.broadcast %cst_49 : f32 to vector<8x256xf32>
    %102 = arith.mulf %101, %100 : vector<8x256xf32>
    %103 = math.tanh %102 : vector<8x256xf32>
    %cst_50 = arith.constant 1.000000e+00 : f32
    %104 = vector.broadcast %cst_50 : f32 to vector<8x256xf32>
    %105 = arith.addf %104, %103 : vector<8x256xf32>
    %cst_51 = arith.constant 5.000000e-01 : f32
    %106 = vector.broadcast %cst_51 : f32 to vector<8x256xf32>
    %107 = arith.mulf %106, %105 : vector<8x256xf32>
    %108 = vector.extract_strided_slice %83 {offsets = [0, 512], sizes = [8, 256], strides = [1, 1]} : vector<8x768xf32> to vector<8x256xf32>
    %109 = vector.extract_strided_slice %87 {offsets = [0, 512], sizes = [8, 256], strides = [1, 1]} : vector<8x768xf32> to vector<8x256xf32>
    %110 = arith.addf %109, %18 : vector<8x256xf32>
    %111 = arith.mulf %97, %110 : vector<8x256xf32>
    %112 = arith.addf %108, %111 : vector<8x256xf32>
    %113 = math.tanh %112 : vector<8x256xf32>
    %cst_52 = arith.constant 1.000000e+00 : f32
    %114 = vector.broadcast %cst_52 : f32 to vector<8x256xf32>
    %115 = arith.subf %114, %107 : vector<8x256xf32>
    %116 = arith.mulf %115, %113 : vector<8x256xf32>
    %117 = arith.mulf %107, %74 : vector<8x256xf32>
    %118 = arith.addf %116, %117 : vector<8x256xf32>
    %119 = vector.broadcast %80 : i32 to vector<8x1xi32>
    %120 = arith.cmpi slt, %119, %14 : vector<8x1xi32>
    %121 = vector.shape_cast %120 : vector<8x1xi1> to vector<8x1xi1>
    %122 = vector.broadcast %121 : vector<8x1xi1> to vector<8x256xi1>
    %123 = arith.select %122, %118, %74 : vector<8x256xi1>, vector<8x256xf32>
    %c2_i32_53 = arith.constant 2 : i32
    %c7_i32_54 = arith.constant 7 : i32
    %124 = arith.muli %arg0, %c7_i32_54 : i32
    %c2_i32_55 = arith.constant 2 : i32
    %125 = arith.muli %c2_i32_55, %arg0 : i32
    %c1_i32_56 = arith.constant 1 : i32
    %126 = arith.subi %c1_i32_56, %125 : i32
    %127 = arith.muli %126, %c2_i32_53 : i32
    %128 = arith.addi %124, %127 : i32
    %129 = arith.addi %24, %128 : i32
    %130 = arith.index_cast %128 : i32 to index
    %c0_57 = arith.constant 0 : index
    %c0_58 = arith.constant 0 : index
    %131 = vector.load %arg11[%130, %c0_57, %c0_58] : memref<8x8x768xf32, #tpu.memory_space<vmem>>, vector<1x8x768xf32>
    %132 = vector.shape_cast %131 : vector<1x8x768xf32> to vector<8x768xf32>
    %133 = arith.truncf %123 : vector<8x256xf32> to vector<8x256xbf16>
    %c0_59 = arith.constant 0 : index
    %c0_60 = arith.constant 0 : index
    %c0_61 = arith.constant 0 : index
    %134 = vector.load %arg7[%c0_59, %c0_60, %c0_61] : memref<1x256x768xbf16, #tpu.memory_space<vmem>>, vector<1x256x768xbf16>
    %135 = vector.shape_cast %134 : vector<1x256x768xbf16> to vector<256x768xbf16>
    %cst_62 = arith.constant dense<0.000000e+00> : vector<8x768xf32>
    %136 = tpu.matmul %133, %135, %cst_62 {dimension_numbers = #tpu.dot_dimension_numbers<[1], [0], [0], [1], [0, 0, 1, 1], [], []>} : vector<8x256xbf16>, vector<256x768xbf16>, vector<8x768xf32> -> vector<8x768xf32>
    %137 = vector.extract_strided_slice %132 {offsets = [0, 0], sizes = [8, 256], strides = [1, 1]} : vector<8x768xf32> to vector<8x256xf32>
    %138 = vector.extract_strided_slice %136 {offsets = [0, 0], sizes = [8, 256], strides = [1, 1]} : vector<8x768xf32> to vector<8x256xf32>
    %139 = arith.addf %137, %138 : vector<8x256xf32>
    %cst_63 = arith.constant 5.000000e-01 : f32
    %140 = vector.broadcast %cst_63 : f32 to vector<8x256xf32>
    %141 = arith.mulf %140, %139 : vector<8x256xf32>
    %142 = math.tanh %141 : vector<8x256xf32>
    %cst_64 = arith.constant 1.000000e+00 : f32
    %143 = vector.broadcast %cst_64 : f32 to vector<8x256xf32>
    %144 = arith.addf %143, %142 : vector<8x256xf32>
    %cst_65 = arith.constant 5.000000e-01 : f32
    %145 = vector.broadcast %cst_65 : f32 to vector<8x256xf32>
    %146 = arith.mulf %145, %144 : vector<8x256xf32>
    %147 = vector.extract_strided_slice %132 {offsets = [0, 256], sizes = [8, 256], strides = [1, 1]} : vector<8x768xf32> to vector<8x256xf32>
    %148 = vector.extract_strided_slice %136 {offsets = [0, 256], sizes = [8, 256], strides = [1, 1]} : vector<8x768xf32> to vector<8x256xf32>
    %149 = arith.addf %147, %148 : vector<8x256xf32>
    %cst_66 = arith.constant 5.000000e-01 : f32
    %150 = vector.broadcast %cst_66 : f32 to vector<8x256xf32>
    %151 = arith.mulf %150, %149 : vector<8x256xf32>
    %152 = math.tanh %151 : vector<8x256xf32>
    %cst_67 = arith.constant 1.000000e+00 : f32
    %153 = vector.broadcast %cst_67 : f32 to vector<8x256xf32>
    %154 = arith.addf %153, %152 : vector<8x256xf32>
    %cst_68 = arith.constant 5.000000e-01 : f32
    %155 = vector.broadcast %cst_68 : f32 to vector<8x256xf32>
    %156 = arith.mulf %155, %154 : vector<8x256xf32>
    %157 = vector.extract_strided_slice %132 {offsets = [0, 512], sizes = [8, 256], strides = [1, 1]} : vector<8x768xf32> to vector<8x256xf32>
    %158 = vector.extract_strided_slice %136 {offsets = [0, 512], sizes = [8, 256], strides = [1, 1]} : vector<8x768xf32> to vector<8x256xf32>
    %159 = arith.addf %158, %18 : vector<8x256xf32>
    %160 = arith.mulf %146, %159 : vector<8x256xf32>
    %161 = arith.addf %157, %160 : vector<8x256xf32>
    %162 = math.tanh %161 : vector<8x256xf32>
    %cst_69 = arith.constant 1.000000e+00 : f32
    %163 = vector.broadcast %cst_69 : f32 to vector<8x256xf32>
    %164 = arith.subf %163, %156 : vector<8x256xf32>
    %165 = arith.mulf %164, %162 : vector<8x256xf32>
    %166 = arith.mulf %156, %123 : vector<8x256xf32>
    %167 = arith.addf %165, %166 : vector<8x256xf32>
    %168 = vector.broadcast %129 : i32 to vector<8x1xi32>
    %169 = arith.cmpi slt, %168, %14 : vector<8x1xi32>
    %170 = vector.shape_cast %169 : vector<8x1xi1> to vector<8x1xi1>
    %171 = vector.broadcast %170 : vector<8x1xi1> to vector<8x256xi1>
    %172 = arith.select %171, %167, %123 : vector<8x256xi1>, vector<8x256xf32>
    %c3_i32 = arith.constant 3 : i32
    %c7_i32_70 = arith.constant 7 : i32
    %173 = arith.muli %arg0, %c7_i32_70 : i32
    %c2_i32_71 = arith.constant 2 : i32
    %174 = arith.muli %c2_i32_71, %arg0 : i32
    %c1_i32_72 = arith.constant 1 : i32
    %175 = arith.subi %c1_i32_72, %174 : i32
    %176 = arith.muli %175, %c3_i32 : i32
    %177 = arith.addi %173, %176 : i32
    %178 = arith.addi %24, %177 : i32
    %179 = arith.index_cast %177 : i32 to index
    %c0_73 = arith.constant 0 : index
    %c0_74 = arith.constant 0 : index
    %180 = vector.load %arg11[%179, %c0_73, %c0_74] : memref<8x8x768xf32, #tpu.memory_space<vmem>>, vector<1x8x768xf32>
    %181 = vector.shape_cast %180 : vector<1x8x768xf32> to vector<8x768xf32>
    %182 = arith.truncf %172 : vector<8x256xf32> to vector<8x256xbf16>
    %c0_75 = arith.constant 0 : index
    %c0_76 = arith.constant 0 : index
    %c0_77 = arith.constant 0 : index
    %183 = vector.load %arg7[%c0_75, %c0_76, %c0_77] : memref<1x256x768xbf16, #tpu.memory_space<vmem>>, vector<1x256x768xbf16>
    %184 = vector.shape_cast %183 : vector<1x256x768xbf16> to vector<256x768xbf16>
    %cst_78 = arith.constant dense<0.000000e+00> : vector<8x768xf32>
    %185 = tpu.matmul %182, %184, %cst_78 {dimension_numbers = #tpu.dot_dimension_numbers<[1], [0], [0], [1], [0, 0, 1, 1], [], []>} : vector<8x256xbf16>, vector<256x768xbf16>, vector<8x768xf32> -> vector<8x768xf32>
    %186 = vector.extract_strided_slice %181 {offsets = [0, 0], sizes = [8, 256], strides = [1, 1]} : vector<8x768xf32> to vector<8x256xf32>
    %187 = vector.extract_strided_slice %185 {offsets = [0, 0], sizes = [8, 256], strides = [1, 1]} : vector<8x768xf32> to vector<8x256xf32>
    %188 = arith.addf %186, %187 : vector<8x256xf32>
    %cst_79 = arith.constant 5.000000e-01 : f32
    %189 = vector.broadcast %cst_79 : f32 to vector<8x256xf32>
    %190 = arith.mulf %189, %188 : vector<8x256xf32>
    %191 = math.tanh %190 : vector<8x256xf32>
    %cst_80 = arith.constant 1.000000e+00 : f32
    %192 = vector.broadcast %cst_80 : f32 to vector<8x256xf32>
    %193 = arith.addf %192, %191 : vector<8x256xf32>
    %cst_81 = arith.constant 5.000000e-01 : f32
    %194 = vector.broadcast %cst_81 : f32 to vector<8x256xf32>
    %195 = arith.mulf %194, %193 : vector<8x256xf32>
    %196 = vector.extract_strided_slice %181 {offsets = [0, 256], sizes = [8, 256], strides = [1, 1]} : vector<8x768xf32> to vector<8x256xf32>
    %197 = vector.extract_strided_slice %185 {offsets = [0, 256], sizes = [8, 256], strides = [1, 1]} : vector<8x768xf32> to vector<8x256xf32>
    %198 = arith.addf %196, %197 : vector<8x256xf32>
    %cst_82 = arith.constant 5.000000e-01 : f32
    %199 = vector.broadcast %cst_82 : f32 to vector<8x256xf32>
    %200 = arith.mulf %199, %198 : vector<8x256xf32>
    %201 = math.tanh %200 : vector<8x256xf32>
    %cst_83 = arith.constant 1.000000e+00 : f32
    %202 = vector.broadcast %cst_83 : f32 to vector<8x256xf32>
    %203 = arith.addf %202, %201 : vector<8x256xf32>
    %cst_84 = arith.constant 5.000000e-01 : f32
    %204 = vector.broadcast %cst_84 : f32 to vector<8x256xf32>
    %205 = arith.mulf %204, %203 : vector<8x256xf32>
    %206 = vector.extract_strided_slice %181 {offsets = [0, 512], sizes = [8, 256], strides = [1, 1]} : vector<8x768xf32> to vector<8x256xf32>
    %207 = vector.extract_strided_slice %185 {offsets = [0, 512], sizes = [8, 256], strides = [1, 1]} : vector<8x768xf32> to vector<8x256xf32>
    %208 = arith.addf %207, %18 : vector<8x256xf32>
    %209 = arith.mulf %195, %208 : vector<8x256xf32>
    %210 = arith.addf %206, %209 : vector<8x256xf32>
    %211 = math.tanh %210 : vector<8x256xf32>
    %cst_85 = arith.constant 1.000000e+00 : f32
    %212 = vector.broadcast %cst_85 : f32 to vector<8x256xf32>
    %213 = arith.subf %212, %205 : vector<8x256xf32>
    %214 = arith.mulf %213, %211 : vector<8x256xf32>
    %215 = arith.mulf %205, %172 : vector<8x256xf32>
    %216 = arith.addf %214, %215 : vector<8x256xf32>
    %217 = vector.broadcast %178 : i32 to vector<8x1xi32>
    %218 = arith.cmpi slt, %217, %14 : vector<8x1xi32>
    %219 = vector.shape_cast %218 : vector<8x1xi1> to vector<8x1xi1>
    %220 = vector.broadcast %219 : vector<8x1xi1> to vector<8x256xi1>
    %221 = arith.select %220, %216, %172 : vector<8x256xi1>, vector<8x256xf32>
    %c4_i32 = arith.constant 4 : i32
    %c7_i32_86 = arith.constant 7 : i32
    %222 = arith.muli %arg0, %c7_i32_86 : i32
    %c2_i32_87 = arith.constant 2 : i32
    %223 = arith.muli %c2_i32_87, %arg0 : i32
    %c1_i32_88 = arith.constant 1 : i32
    %224 = arith.subi %c1_i32_88, %223 : i32
    %225 = arith.muli %224, %c4_i32 : i32
    %226 = arith.addi %222, %225 : i32
    %227 = arith.addi %24, %226 : i32
    %228 = arith.index_cast %226 : i32 to index
    %c0_89 = arith.constant 0 : index
    %c0_90 = arith.constant 0 : index
    %229 = vector.load %arg11[%228, %c0_89, %c0_90] : memref<8x8x768xf32, #tpu.memory_space<vmem>>, vector<1x8x768xf32>
    %230 = vector.shape_cast %229 : vector<1x8x768xf32> to vector<8x768xf32>
    %231 = arith.truncf %221 : vector<8x256xf32> to vector<8x256xbf16>
    %c0_91 = arith.constant 0 : index
    %c0_92 = arith.constant 0 : index
    %c0_93 = arith.constant 0 : index
    %232 = vector.load %arg7[%c0_91, %c0_92, %c0_93] : memref<1x256x768xbf16, #tpu.memory_space<vmem>>, vector<1x256x768xbf16>
    %233 = vector.shape_cast %232 : vector<1x256x768xbf16> to vector<256x768xbf16>
    %cst_94 = arith.constant dense<0.000000e+00> : vector<8x768xf32>
    %234 = tpu.matmul %231, %233, %cst_94 {dimension_numbers = #tpu.dot_dimension_numbers<[1], [0], [0], [1], [0, 0, 1, 1], [], []>} : vector<8x256xbf16>, vector<256x768xbf16>, vector<8x768xf32> -> vector<8x768xf32>
    %235 = vector.extract_strided_slice %230 {offsets = [0, 0], sizes = [8, 256], strides = [1, 1]} : vector<8x768xf32> to vector<8x256xf32>
    %236 = vector.extract_strided_slice %234 {offsets = [0, 0], sizes = [8, 256], strides = [1, 1]} : vector<8x768xf32> to vector<8x256xf32>
    %237 = arith.addf %235, %236 : vector<8x256xf32>
    %cst_95 = arith.constant 5.000000e-01 : f32
    %238 = vector.broadcast %cst_95 : f32 to vector<8x256xf32>
    %239 = arith.mulf %238, %237 : vector<8x256xf32>
    %240 = math.tanh %239 : vector<8x256xf32>
    %cst_96 = arith.constant 1.000000e+00 : f32
    %241 = vector.broadcast %cst_96 : f32 to vector<8x256xf32>
    %242 = arith.addf %241, %240 : vector<8x256xf32>
    %cst_97 = arith.constant 5.000000e-01 : f32
    %243 = vector.broadcast %cst_97 : f32 to vector<8x256xf32>
    %244 = arith.mulf %243, %242 : vector<8x256xf32>
    %245 = vector.extract_strided_slice %230 {offsets = [0, 256], sizes = [8, 256], strides = [1, 1]} : vector<8x768xf32> to vector<8x256xf32>
    %246 = vector.extract_strided_slice %234 {offsets = [0, 256], sizes = [8, 256], strides = [1, 1]} : vector<8x768xf32> to vector<8x256xf32>
    %247 = arith.addf %245, %246 : vector<8x256xf32>
    %cst_98 = arith.constant 5.000000e-01 : f32
    %248 = vector.broadcast %cst_98 : f32 to vector<8x256xf32>
    %249 = arith.mulf %248, %247 : vector<8x256xf32>
    %250 = math.tanh %249 : vector<8x256xf32>
    %cst_99 = arith.constant 1.000000e+00 : f32
    %251 = vector.broadcast %cst_99 : f32 to vector<8x256xf32>
    %252 = arith.addf %251, %250 : vector<8x256xf32>
    %cst_100 = arith.constant 5.000000e-01 : f32
    %253 = vector.broadcast %cst_100 : f32 to vector<8x256xf32>
    %254 = arith.mulf %253, %252 : vector<8x256xf32>
    %255 = vector.extract_strided_slice %230 {offsets = [0, 512], sizes = [8, 256], strides = [1, 1]} : vector<8x768xf32> to vector<8x256xf32>
    %256 = vector.extract_strided_slice %234 {offsets = [0, 512], sizes = [8, 256], strides = [1, 1]} : vector<8x768xf32> to vector<8x256xf32>
    %257 = arith.addf %256, %18 : vector<8x256xf32>
    %258 = arith.mulf %244, %257 : vector<8x256xf32>
    %259 = arith.addf %255, %258 : vector<8x256xf32>
    %260 = math.tanh %259 : vector<8x256xf32>
    %cst_101 = arith.constant 1.000000e+00 : f32
    %261 = vector.broadcast %cst_101 : f32 to vector<8x256xf32>
    %262 = arith.subf %261, %254 : vector<8x256xf32>
    %263 = arith.mulf %262, %260 : vector<8x256xf32>
    %264 = arith.mulf %254, %221 : vector<8x256xf32>
    %265 = arith.addf %263, %264 : vector<8x256xf32>
    %266 = vector.broadcast %227 : i32 to vector<8x1xi32>
    %267 = arith.cmpi slt, %266, %14 : vector<8x1xi32>
    %268 = vector.shape_cast %267 : vector<8x1xi1> to vector<8x1xi1>
    %269 = vector.broadcast %268 : vector<8x1xi1> to vector<8x256xi1>
    %270 = arith.select %269, %265, %221 : vector<8x256xi1>, vector<8x256xf32>
    %c5_i32 = arith.constant 5 : i32
    %c7_i32_102 = arith.constant 7 : i32
    %271 = arith.muli %arg0, %c7_i32_102 : i32
    %c2_i32_103 = arith.constant 2 : i32
    %272 = arith.muli %c2_i32_103, %arg0 : i32
    %c1_i32_104 = arith.constant 1 : i32
    %273 = arith.subi %c1_i32_104, %272 : i32
    %274 = arith.muli %273, %c5_i32 : i32
    %275 = arith.addi %271, %274 : i32
    %276 = arith.addi %24, %275 : i32
    %277 = arith.index_cast %275 : i32 to index
    %c0_105 = arith.constant 0 : index
    %c0_106 = arith.constant 0 : index
    %278 = vector.load %arg11[%277, %c0_105, %c0_106] : memref<8x8x768xf32, #tpu.memory_space<vmem>>, vector<1x8x768xf32>
    %279 = vector.shape_cast %278 : vector<1x8x768xf32> to vector<8x768xf32>
    %280 = arith.truncf %270 : vector<8x256xf32> to vector<8x256xbf16>
    %c0_107 = arith.constant 0 : index
    %c0_108 = arith.constant 0 : index
    %c0_109 = arith.constant 0 : index
    %281 = vector.load %arg7[%c0_107, %c0_108, %c0_109] : memref<1x256x768xbf16, #tpu.memory_space<vmem>>, vector<1x256x768xbf16>
    %282 = vector.shape_cast %281 : vector<1x256x768xbf16> to vector<256x768xbf16>
    %cst_110 = arith.constant dense<0.000000e+00> : vector<8x768xf32>
    %283 = tpu.matmul %280, %282, %cst_110 {dimension_numbers = #tpu.dot_dimension_numbers<[1], [0], [0], [1], [0, 0, 1, 1], [], []>} : vector<8x256xbf16>, vector<256x768xbf16>, vector<8x768xf32> -> vector<8x768xf32>
    %284 = vector.extract_strided_slice %279 {offsets = [0, 0], sizes = [8, 256], strides = [1, 1]} : vector<8x768xf32> to vector<8x256xf32>
    %285 = vector.extract_strided_slice %283 {offsets = [0, 0], sizes = [8, 256], strides = [1, 1]} : vector<8x768xf32> to vector<8x256xf32>
    %286 = arith.addf %284, %285 : vector<8x256xf32>
    %cst_111 = arith.constant 5.000000e-01 : f32
    %287 = vector.broadcast %cst_111 : f32 to vector<8x256xf32>
    %288 = arith.mulf %287, %286 : vector<8x256xf32>
    %289 = math.tanh %288 : vector<8x256xf32>
    %cst_112 = arith.constant 1.000000e+00 : f32
    %290 = vector.broadcast %cst_112 : f32 to vector<8x256xf32>
    %291 = arith.addf %290, %289 : vector<8x256xf32>
    %cst_113 = arith.constant 5.000000e-01 : f32
    %292 = vector.broadcast %cst_113 : f32 to vector<8x256xf32>
    %293 = arith.mulf %292, %291 : vector<8x256xf32>
    %294 = vector.extract_strided_slice %279 {offsets = [0, 256], sizes = [8, 256], strides = [1, 1]} : vector<8x768xf32> to vector<8x256xf32>
    %295 = vector.extract_strided_slice %283 {offsets = [0, 256], sizes = [8, 256], strides = [1, 1]} : vector<8x768xf32> to vector<8x256xf32>
    %296 = arith.addf %294, %295 : vector<8x256xf32>
    %cst_114 = arith.constant 5.000000e-01 : f32
    %297 = vector.broadcast %cst_114 : f32 to vector<8x256xf32>
    %298 = arith.mulf %297, %296 : vector<8x256xf32>
    %299 = math.tanh %298 : vector<8x256xf32>
    %cst_115 = arith.constant 1.000000e+00 : f32
    %300 = vector.broadcast %cst_115 : f32 to vector<8x256xf32>
    %301 = arith.addf %300, %299 : vector<8x256xf32>
    %cst_116 = arith.constant 5.000000e-01 : f32
    %302 = vector.broadcast %cst_116 : f32 to vector<8x256xf32>
    %303 = arith.mulf %302, %301 : vector<8x256xf32>
    %304 = vector.extract_strided_slice %279 {offsets = [0, 512], sizes = [8, 256], strides = [1, 1]} : vector<8x768xf32> to vector<8x256xf32>
    %305 = vector.extract_strided_slice %283 {offsets = [0, 512], sizes = [8, 256], strides = [1, 1]} : vector<8x768xf32> to vector<8x256xf32>
    %306 = arith.addf %305, %18 : vector<8x256xf32>
    %307 = arith.mulf %293, %306 : vector<8x256xf32>
    %308 = arith.addf %304, %307 : vector<8x256xf32>
    %309 = math.tanh %308 : vector<8x256xf32>
    %cst_117 = arith.constant 1.000000e+00 : f32
    %310 = vector.broadcast %cst_117 : f32 to vector<8x256xf32>
    %311 = arith.subf %310, %303 : vector<8x256xf32>
    %312 = arith.mulf %311, %309 : vector<8x256xf32>
    %313 = arith.mulf %303, %270 : vector<8x256xf32>
    %314 = arith.addf %312, %313 : vector<8x256xf32>
    %315 = vector.broadcast %276 : i32 to vector<8x1xi32>
    %316 = arith.cmpi slt, %315, %14 : vector<8x1xi32>
    %317 = vector.shape_cast %316 : vector<8x1xi1> to vector<8x1xi1>
    %318 = vector.broadcast %317 : vector<8x1xi1> to vector<8x256xi1>
    %319 = arith.select %318, %314, %270 : vector<8x256xi1>, vector<8x256xf32>
    %c6_i32 = arith.constant 6 : i32
    %c7_i32_118 = arith.constant 7 : i32
    %320 = arith.muli %arg0, %c7_i32_118 : i32
    %c2_i32_119 = arith.constant 2 : i32
    %321 = arith.muli %c2_i32_119, %arg0 : i32
    %c1_i32_120 = arith.constant 1 : i32
    %322 = arith.subi %c1_i32_120, %321 : i32
    %323 = arith.muli %322, %c6_i32 : i32
    %324 = arith.addi %320, %323 : i32
    %325 = arith.addi %24, %324 : i32
    %326 = arith.index_cast %324 : i32 to index
    %c0_121 = arith.constant 0 : index
    %c0_122 = arith.constant 0 : index
    %327 = vector.load %arg11[%326, %c0_121, %c0_122] : memref<8x8x768xf32, #tpu.memory_space<vmem>>, vector<1x8x768xf32>
    %328 = vector.shape_cast %327 : vector<1x8x768xf32> to vector<8x768xf32>
    %329 = arith.truncf %319 : vector<8x256xf32> to vector<8x256xbf16>
    %c0_123 = arith.constant 0 : index
    %c0_124 = arith.constant 0 : index
    %c0_125 = arith.constant 0 : index
    %330 = vector.load %arg7[%c0_123, %c0_124, %c0_125] : memref<1x256x768xbf16, #tpu.memory_space<vmem>>, vector<1x256x768xbf16>
    %331 = vector.shape_cast %330 : vector<1x256x768xbf16> to vector<256x768xbf16>
    %cst_126 = arith.constant dense<0.000000e+00> : vector<8x768xf32>
    %332 = tpu.matmul %329, %331, %cst_126 {dimension_numbers = #tpu.dot_dimension_numbers<[1], [0], [0], [1], [0, 0, 1, 1], [], []>} : vector<8x256xbf16>, vector<256x768xbf16>, vector<8x768xf32> -> vector<8x768xf32>
    %333 = vector.extract_strided_slice %328 {offsets = [0, 0], sizes = [8, 256], strides = [1, 1]} : vector<8x768xf32> to vector<8x256xf32>
    %334 = vector.extract_strided_slice %332 {offsets = [0, 0], sizes = [8, 256], strides = [1, 1]} : vector<8x768xf32> to vector<8x256xf32>
    %335 = arith.addf %333, %334 : vector<8x256xf32>
    %cst_127 = arith.constant 5.000000e-01 : f32
    %336 = vector.broadcast %cst_127 : f32 to vector<8x256xf32>
    %337 = arith.mulf %336, %335 : vector<8x256xf32>
    %338 = math.tanh %337 : vector<8x256xf32>
    %cst_128 = arith.constant 1.000000e+00 : f32
    %339 = vector.broadcast %cst_128 : f32 to vector<8x256xf32>
    %340 = arith.addf %339, %338 : vector<8x256xf32>
    %cst_129 = arith.constant 5.000000e-01 : f32
    %341 = vector.broadcast %cst_129 : f32 to vector<8x256xf32>
    %342 = arith.mulf %341, %340 : vector<8x256xf32>
    %343 = vector.extract_strided_slice %328 {offsets = [0, 256], sizes = [8, 256], strides = [1, 1]} : vector<8x768xf32> to vector<8x256xf32>
    %344 = vector.extract_strided_slice %332 {offsets = [0, 256], sizes = [8, 256], strides = [1, 1]} : vector<8x768xf32> to vector<8x256xf32>
    %345 = arith.addf %343, %344 : vector<8x256xf32>
    %cst_130 = arith.constant 5.000000e-01 : f32
    %346 = vector.broadcast %cst_130 : f32 to vector<8x256xf32>
    %347 = arith.mulf %346, %345 : vector<8x256xf32>
    %348 = math.tanh %347 : vector<8x256xf32>
    %cst_131 = arith.constant 1.000000e+00 : f32
    %349 = vector.broadcast %cst_131 : f32 to vector<8x256xf32>
    %350 = arith.addf %349, %348 : vector<8x256xf32>
    %cst_132 = arith.constant 5.000000e-01 : f32
    %351 = vector.broadcast %cst_132 : f32 to vector<8x256xf32>
    %352 = arith.mulf %351, %350 : vector<8x256xf32>
    %353 = vector.extract_strided_slice %328 {offsets = [0, 512], sizes = [8, 256], strides = [1, 1]} : vector<8x768xf32> to vector<8x256xf32>
    %354 = vector.extract_strided_slice %332 {offsets = [0, 512], sizes = [8, 256], strides = [1, 1]} : vector<8x768xf32> to vector<8x256xf32>
    %355 = arith.addf %354, %18 : vector<8x256xf32>
    %356 = arith.mulf %342, %355 : vector<8x256xf32>
    %357 = arith.addf %353, %356 : vector<8x256xf32>
    %358 = math.tanh %357 : vector<8x256xf32>
    %cst_133 = arith.constant 1.000000e+00 : f32
    %359 = vector.broadcast %cst_133 : f32 to vector<8x256xf32>
    %360 = arith.subf %359, %352 : vector<8x256xf32>
    %361 = arith.mulf %360, %358 : vector<8x256xf32>
    %362 = arith.mulf %352, %319 : vector<8x256xf32>
    %363 = arith.addf %361, %362 : vector<8x256xf32>
    %364 = vector.broadcast %325 : i32 to vector<8x1xi32>
    %365 = arith.cmpi slt, %364, %14 : vector<8x1xi32>
    %366 = vector.shape_cast %365 : vector<8x1xi1> to vector<8x1xi1>
    %367 = vector.broadcast %366 : vector<8x1xi1> to vector<8x256xi1>
    %368 = arith.select %367, %363, %319 : vector<8x256xi1>, vector<8x256xf32>
    %c7_i32_134 = arith.constant 7 : i32
    %c7_i32_135 = arith.constant 7 : i32
    %369 = arith.muli %arg0, %c7_i32_135 : i32
    %c2_i32_136 = arith.constant 2 : i32
    %370 = arith.muli %c2_i32_136, %arg0 : i32
    %c1_i32_137 = arith.constant 1 : i32
    %371 = arith.subi %c1_i32_137, %370 : i32
    %372 = arith.muli %371, %c7_i32_134 : i32
    %373 = arith.addi %369, %372 : i32
    %374 = arith.addi %24, %373 : i32
    %375 = arith.index_cast %373 : i32 to index
    %c0_138 = arith.constant 0 : index
    %c0_139 = arith.constant 0 : index
    %376 = vector.load %arg11[%375, %c0_138, %c0_139] : memref<8x8x768xf32, #tpu.memory_space<vmem>>, vector<1x8x768xf32>
    %377 = vector.shape_cast %376 : vector<1x8x768xf32> to vector<8x768xf32>
    %378 = arith.truncf %368 : vector<8x256xf32> to vector<8x256xbf16>
    %c0_140 = arith.constant 0 : index
    %c0_141 = arith.constant 0 : index
    %c0_142 = arith.constant 0 : index
    %379 = vector.load %arg7[%c0_140, %c0_141, %c0_142] : memref<1x256x768xbf16, #tpu.memory_space<vmem>>, vector<1x256x768xbf16>
    %380 = vector.shape_cast %379 : vector<1x256x768xbf16> to vector<256x768xbf16>
    %cst_143 = arith.constant dense<0.000000e+00> : vector<8x768xf32>
    %381 = tpu.matmul %378, %380, %cst_143 {dimension_numbers = #tpu.dot_dimension_numbers<[1], [0], [0], [1], [0, 0, 1, 1], [], []>} : vector<8x256xbf16>, vector<256x768xbf16>, vector<8x768xf32> -> vector<8x768xf32>
    %382 = vector.extract_strided_slice %377 {offsets = [0, 0], sizes = [8, 256], strides = [1, 1]} : vector<8x768xf32> to vector<8x256xf32>
    %383 = vector.extract_strided_slice %381 {offsets = [0, 0], sizes = [8, 256], strides = [1, 1]} : vector<8x768xf32> to vector<8x256xf32>
    %384 = arith.addf %382, %383 : vector<8x256xf32>
    %cst_144 = arith.constant 5.000000e-01 : f32
    %385 = vector.broadcast %cst_144 : f32 to vector<8x256xf32>
    %386 = arith.mulf %385, %384 : vector<8x256xf32>
    %387 = math.tanh %386 : vector<8x256xf32>
    %cst_145 = arith.constant 1.000000e+00 : f32
    %388 = vector.broadcast %cst_145 : f32 to vector<8x256xf32>
    %389 = arith.addf %388, %387 : vector<8x256xf32>
    %cst_146 = arith.constant 5.000000e-01 : f32
    %390 = vector.broadcast %cst_146 : f32 to vector<8x256xf32>
    %391 = arith.mulf %390, %389 : vector<8x256xf32>
    %392 = vector.extract_strided_slice %377 {offsets = [0, 256], sizes = [8, 256], strides = [1, 1]} : vector<8x768xf32> to vector<8x256xf32>
    %393 = vector.extract_strided_slice %381 {offsets = [0, 256], sizes = [8, 256], strides = [1, 1]} : vector<8x768xf32> to vector<8x256xf32>
    %394 = arith.addf %392, %393 : vector<8x256xf32>
    %cst_147 = arith.constant 5.000000e-01 : f32
    %395 = vector.broadcast %cst_147 : f32 to vector<8x256xf32>
    %396 = arith.mulf %395, %394 : vector<8x256xf32>
    %397 = math.tanh %396 : vector<8x256xf32>
    %cst_148 = arith.constant 1.000000e+00 : f32
    %398 = vector.broadcast %cst_148 : f32 to vector<8x256xf32>
    %399 = arith.addf %398, %397 : vector<8x256xf32>
    %cst_149 = arith.constant 5.000000e-01 : f32
    %400 = vector.broadcast %cst_149 : f32 to vector<8x256xf32>
    %401 = arith.mulf %400, %399 : vector<8x256xf32>
    %402 = vector.extract_strided_slice %377 {offsets = [0, 512], sizes = [8, 256], strides = [1, 1]} : vector<8x768xf32> to vector<8x256xf32>
    %403 = vector.extract_strided_slice %381 {offsets = [0, 512], sizes = [8, 256], strides = [1, 1]} : vector<8x768xf32> to vector<8x256xf32>
    %404 = arith.addf %403, %18 : vector<8x256xf32>
    %405 = arith.mulf %391, %404 : vector<8x256xf32>
    %406 = arith.addf %402, %405 : vector<8x256xf32>
    %407 = math.tanh %406 : vector<8x256xf32>
    %cst_150 = arith.constant 1.000000e+00 : f32
    %408 = vector.broadcast %cst_150 : f32 to vector<8x256xf32>
    %409 = arith.subf %408, %401 : vector<8x256xf32>
    %410 = arith.mulf %409, %407 : vector<8x256xf32>
    %411 = arith.mulf %401, %368 : vector<8x256xf32>
    %412 = arith.addf %410, %411 : vector<8x256xf32>
    %413 = vector.broadcast %374 : i32 to vector<8x1xi32>
    %414 = arith.cmpi slt, %413, %14 : vector<8x1xi32>
    %415 = vector.shape_cast %414 : vector<8x1xi1> to vector<8x1xi1>
    %416 = vector.broadcast %415 : vector<8x1xi1> to vector<8x256xi1>
    %417 = arith.select %416, %412, %368 : vector<8x256xi1>, vector<8x256xf32>
    %c8_i32_151 = arith.constant 8 : i32
    %c0_152 = arith.constant 0 : index
    %c0_153 = arith.constant 0 : index
    %418 = vector.load %arg12[%c0_152, %c0_153] : memref<8x256xf32, #tpu.memory_space<vmem>>, vector<8x256xf32>
    tpu.vector_store %arg12[%c0_152, %c0_153], %417 {strides = array<i32>} : memref<8x256xf32, #tpu.memory_space<vmem>>, vector<8x256xf32>,
    %c0_i32_154 = arith.constant 0 : i32
    %419 = arith.cmpi eq, %arg2, %c0_i32_154 : i32
    %420 = arith.extui %419 : i1 to i32
    %c0_i32_155 = arith.constant 0 : i32
    %421 = arith.cmpi ne, %420, %c0_i32_155 : i32
    scf.if %421 {
      %c0_156 = arith.constant 0 : index
      %c0_157 = arith.constant 0 : index
      %c0_158 = arith.constant 0 : index
      %422 = vector.load %arg10[%c0_156, %c0_157, %c0_158] : memref<1x8x256xf32, #tpu.memory_space<vmem>>, vector<1x8x256xf32>
      %423 = vector.shape_cast %422 : vector<1x8x256xf32> to vector<8x256xf32>
      %424 = vector.shape_cast %417 : vector<8x256xf32> to vector<1x8x256xf32>
      tpu.vector_store %arg10[%c0_156, %c0_157, %c0_158], %424 {strides = array<i32>} : memref<1x8x256xf32, #tpu.memory_space<vmem>>, vector<1x8x256xf32>,
    } else {
    }
    return
  }
  func.func @transform_0(%arg0: i32, %arg1: i32, %arg2: i32) -> (i32, i32) {
    %c0_i32 = arith.constant 0 : i32
    %c0_i32_0 = arith.constant 0 : i32
    return %arg1, %c0_i32 : i32, i32
  }
  func.func @transform_1(%arg0: i32, %arg1: i32, %arg2: i32) -> (i32, i32, i32) {
    %c0_i32 = arith.constant 0 : i32
    %0 = arith.muli %arg0, %c0_i32 : i32
    %c2_i32 = arith.constant 2 : i32
    %1 = arith.muli %c2_i32, %arg0 : i32
    %c1_i32 = arith.constant 1 : i32
    %2 = arith.subi %c1_i32, %1 : i32
    %3 = arith.muli %2, %arg2 : i32
    %4 = arith.addi %0, %3 : i32
    %c0_i32_0 = arith.constant 0 : i32
    %c0_i32_1 = arith.constant 0 : i32
    return %4, %arg1, %c0_i32_0 : i32, i32, i32
  }
  func.func @transform_2(%arg0: i32, %arg1: i32, %arg2: i32) -> (i32, i32, i32) {
    %c0_i32 = arith.constant 0 : i32
    %c0_i32_0 = arith.constant 0 : i32
    %c0_i32_1 = arith.constant 0 : i32
    return %arg0, %c0_i32, %c0_i32_0 : i32, i32, i32
  }
  func.func @transform_3(%arg0: i32, %arg1: i32, %arg2: i32) -> (i32, i32, i32) {
    %c0_i32 = arith.constant 0 : i32
    %c0_i32_0 = arith.constant 0 : i32
    %c0_i32_1 = arith.constant 0 : i32
    return %arg0, %c0_i32, %c0_i32_0 : i32, i32, i32
  }
  func.func @transform_4(%arg0: i32, %arg1: i32, %arg2: i32) -> (i32, i32, i32) {
    %c0_i32 = arith.constant 0 : i32
    %c0_i32_0 = arith.constant 0 : i32
    %c0_i32_1 = arith.constant 0 : i32
    return %arg0, %c0_i32, %c0_i32_0 : i32, i32, i32
  }
  func.func @transform_5(%arg0: i32, %arg1: i32, %arg2: i32) -> (i32, i32, i32) {
    %c0_i32 = arith.constant 0 : i32
    %c0_i32_0 = arith.constant 0 : i32
    %c0_i32_1 = arith.constant 0 : i32
    return %arg0, %c0_i32, %c0_i32_0 : i32, i32, i32
  }
  func.func @transform_6(%arg0: i32, %arg1: i32, %arg2: i32) -> (i32, i32, i32) {
    %c0_i32 = arith.constant 0 : i32
    %c0_i32_0 = arith.constant 0 : i32
    %c0_i32_1 = arith.constant 0 : i32
    return %arg0, %c0_i32, %c0_i32_0 : i32, i32, i32
  }
  func.func @transform_7(%arg0: i32, %arg1: i32, %arg2: i32) -> (i32, i32, i32) {
    %c0_i32 = arith.constant 0 : i32
    %c0_i32_0 = arith.constant 0 : i32
    return %arg0, %arg1, %c0_i32 : i32, i32, i32
  }
}

</mosaic_0001>

<llo_original>
// kernel: baseline_gru_forward.3
$region0: #{baseline_gru_forward.3}
  #allocation0 [shape = 'u32[]', space=smem, size = 0x4, offset = 0x4, fixed_abs, tag = 'smem constant byte address 0x4 - core index']
  #allocation1 [shape = 'u32[144,128]{1,0:T(1,128)}', space=vmem, size = 0x12000, scoped, tag = 'internal scratch']
  %s0 = inlined_call_operand.vmem [shape: f32[2,8,256], index: 0, kind: input, shape index: {}]
  %s1 = inlined_call_operand.vmem [shape: bf16[256,512], index: 1, kind: input, shape index: {}]
  %s2 = inlined_call_operand.vmem [shape: bf16[256,512], index: 2, kind: input, shape index: {}]
  %s3 = inlined_call_operand.vmem [shape: f32[1,512], index: 3, kind: input, shape index: {}]
  %s4 = inlined_call_operand.vmem [shape: bf16[512,256], index: 4, kind: input, shape index: {}]
  %s5 = inlined_call_operand.vmem [shape: f32[1,256], index: 5, kind: input, shape index: {}]
  %s6 = inlined_call_operand.vmem [shape: bf16[256,256], index: 6, kind: input, shape index: {}]
  %s7 = inlined_call_operand.vmem [shape: f32[1,256], index: 7, kind: input, shape index: {}]
  %s8 = inlined_call_operand.vmem [shape: bf16[256,2], index: 8, kind: input, shape index: {}]
  %s9 = inlined_call_operand.vmem [shape: f32[1,2], index: 9, kind: input, shape index: {}]
  %s10 = inlined_call_operand.vmem [shape: f32[8,2], index: 10, kind: output, shape index: {}]
  %s11 = sld [smem:[#allocation0]]
  $region50: #{baseline_gru_forward.3} parent=0
    _
  %s13 = ssub.s32 1, %s11
  %s14 = scalar_select 0, %s13, %s11
  // Predicated region
  $region2: #{baseline_gru_forward.3} parent=0 // pred_check
    _
  $region3: #{baseline_gru_forward.3} parent=0 // pred_check_branch
    %16 = sbr.rel (0) target = $region5
  $region4: #{baseline_gru_forward.3} parent=0 // pred_region
    _
  $region5: #{baseline_gru_forward.3} parent=0 // pred_fallthru
    _
  // Predicated region
  $region6: #{baseline_gru_forward.3} parent=0 // pred_check
    _
  $region7: #{baseline_gru_forward.3} parent=0 // pred_check_branch
    %18 = sbr.rel (0) target = $region9
  $region8: #{baseline_gru_forward.3} parent=0 // pred_region
    _
  $region9: #{baseline_gru_forward.3} parent=0 // pred_fallthru
    _
  // Predicated region
  $region10: #{baseline_gru_forward.3} parent=0 // pred_check
    _
  $region11: #{baseline_gru_forward.3} parent=0 // pred_check_branch
    %20 = sbr.rel (0) target = $region13
  $region12: #{baseline_gru_forward.3} parent=0 // pred_region
    _
  $region13: #{baseline_gru_forward.3} parent=0 // pred_fallthru
    _
  // Predicated region
  $region14: #{baseline_gru_forward.3} parent=0 // pred_check
    _
  $region15: #{baseline_gru_forward.3} parent=0 // pred_check_branch
    %22 = sbr.rel (0) target = $region17
  $region16: #{baseline_gru_forward.3} parent=0 // pred_region
    _
  $region17: #{baseline_gru_forward.3} parent=0 // pred_fallthru
    _
  // Predicated region
  $region18: #{baseline_gru_forward.3} parent=0 // pred_check
    _
  $region19: #{baseline_gru_forward.3} parent=0 // pred_check_branch
    %24 = sbr.rel (0) target = $region21
  $region20: #{baseline_gru_forward.3} parent=0 // pred_region
    _
  $region21: #{baseline_gru_forward.3} parent=0 // pred_fallthru
    _
  // Predicated region
  $region22: #{baseline_gru_forward.3} parent=0 // pred_check
    _
  $region23: #{baseline_gru_forward.3} parent=0 // pred_check_branch
    %26 = sbr.rel (0) target = $region25
  $region24: #{baseline_gru_forward.3} parent=0 // pred_region
    _
  $region25: #{baseline_gru_forward.3} parent=0 // pred_fallthru
    _
  // Predicated region
  $region26: #{baseline_gru_forward.3} parent=0 // pred_check
    _
  $region27: #{baseline_gru_forward.3} parent=0 // pred_check_branch
    %28 = sbr.rel (0) target = $region29
  $region28: #{baseline_gru_forward.3} parent=0 // pred_region
    _
  $region29: #{baseline_gru_forward.3} parent=0 // pred_fallthru
    _
  // Predicated region
  $region30: #{baseline_gru_forward.3} parent=0 // pred_check
    _
  $region31: #{baseline_gru_forward.3} parent=0 // pred_check_branch
    %30 = sbr.rel (0) target = $region33
  $region32: #{baseline_gru_forward.3} parent=0 // pred_region
    _
  $region33: #{baseline_gru_forward.3} parent=0 // pred_fallthru
    _
  // Predicated region
  $region34: #{baseline_gru_forward.3} parent=0 // pred_check
    _
  $region35: #{baseline_gru_forward.3} parent=0 // pred_check_branch
    %32 = sbr.rel (0) target = $region37
  $region36: #{baseline_gru_forward.3} parent=0 // pred_region
    _
  $region37: #{baseline_gru_forward.3} parent=0 // pred_fallthru
    _
  // Predicated region
  $region38: #{baseline_gru_forward.3} parent=0 // pred_check
    _
  $region39: #{baseline_gru_forward.3} parent=0 // pred_check_branch
    %34 = sbr.rel (0) target = $region41
  $region40: #{baseline_gru_forward.3} parent=0 // pred_region
    _
  $region41: #{baseline_gru_forward.3} parent=0 // pred_fallthru
    _
  %v36 = vld [vmem:[%s0] sm:$0xff]
  %v37 = vld [vmem:[%s0 + $0x8] sm:$0xff]
  %v38 = vpack.c.bf16 %v36, %v36
  %v39 = vpack.c.bf16 %v37, %v37
  %s40 = scalar_lea.vmem %s0, 16
  %v41 = vld [vmem:[%s40] sm:$0xff]
  %v42 = vld [vmem:[%s40 + $0x8] sm:$0xff]
  %v43 = vpack.c.bf16 %v41, %v41
  %v44 = vpack.c.bf16 %v42, %v42
  %v45 = vld [vmem:[%s1] sm:$0xff]
  %v46 = vld [vmem:[%s1 + $0x8] sm:$0xff]
  %v47 = vld [vmem:[%s1 + $0x10] sm:$0xff]
  %v48 = vld [vmem:[%s1 + $0x18] sm:$0xff]
  %v49 = vld [vmem:[%s1 + $0x20] sm:$0xff]
  %v50 = vld [vmem:[%s1 + $0x28] sm:$0xff]
  %v51 = vld [vmem:[%s1 + $0x30] sm:$0xff]
  %v52 = vld [vmem:[%s1 + $0x38] sm:$0xff]
  %v53 = vld [vmem:[%s1 + $0x40] sm:$0xff]
  %v54 = vld [vmem:[%s1 + $0x48] sm:$0xff]
  %v55 = vld [vmem:[%s1 + $0x50] sm:$0xff]
  %v56 = vld [vmem:[%s1 + $0x58] sm:$0xff]
  %v57 = vld [vmem:[%s1 + $0x60] sm:$0xff]
  %v58 = vld [vmem:[%s1 + $0x68] sm:$0xff]
  %v59 = vld [vmem:[%s1 + $0x70] sm:$0xff]
  %v60 = vld [vmem:[%s1 + $0x78] sm:$0xff]
  %v61 = vld [vmem:[%s1 + $0x80] sm:$0xff]
  %v62 = vld [vmem:[%s1 + $0x88] sm:$0xff]
  %v63 = vld [vmem:[%s1 + $0x90] sm:$0xff]
  %v64 = vld [vmem:[%s1 + $0x98] sm:$0xff]
  %v65 = vld [vmem:[%s1 + $0xa0] sm:$0xff]
  %v66 = vld [vmem:[%s1 + $0xa8] sm:$0xff]
  %v67 = vld [vmem:[%s1 + $0xb0] sm:$0xff]
  %v68 = vld [vmem:[%s1 + $0xb8] sm:$0xff]
  %v69 = vld [vmem:[%s1 + $0xc0] sm:$0xff]
  %v70 = vld [vmem:[%s1 + $0xc8] sm:$0xff]
  %v71 = vld [vmem:[%s1 + $0xd0] sm:$0xff]
  %v72 = vld [vmem:[%s1 + $0xd8] sm:$0xff]
  %v73 = vld [vmem:[%s1 + $0xe0] sm:$0xff]
  %v74 = vld [vmem:[%s1 + $0xe8] sm:$0xff]
  %v75 = vld [vmem:[%s1 + $0xf0] sm:$0xff]
  %v76 = vld [vmem:[%s1 + $0xf8] sm:$0xff]
  %v77 = vld [vmem:[%s1 + $0x100] sm:$0xff]
  %v78 = vld [vmem:[%s1 + $0x108] sm:$0xff]
  %v79 = vld [vmem:[%s1 + $0x110] sm:$0xff]
  %v80 = vld [vmem:[%s1 + $0x118] sm:$0xff]
  %v81 = vld [vmem:[%s1 + $0x120] sm:$0xff]
  %v82 = vld [vmem:[%s1 + $0x128] sm:$0xff]
  %v83 = vld [vmem:[%s1 + $0x130] sm:$0xff]
  %v84 = vld [vmem:[%s1 + $0x138] sm:$0xff]
  %v85 = vld [vmem:[%s1 + $0x140] sm:$0xff]
  %v86 = vld [vmem:[%s1 + $0x148] sm:$0xff]
  %v87 = vld [vmem:[%s1 + $0x150] sm:$0xff]
  %v88 = vld [vmem:[%s1 + $0x158] sm:$0xff]
  %v89 = vld [vmem:[%s1 + $0x160] sm:$0xff]
  %v90 = vld [vmem:[%s1 + $0x168] sm:$0xff]
  %v91 = vld [vmem:[%s1 + $0x170] sm:$0xff]
  %v92 = vld [vmem:[%s1 + $0x178] sm:$0xff]
  %v93 = vld [vmem:[%s1 + $0x180] sm:$0xff]
  %v94 = vld [vmem:[%s1 + $0x188] sm:$0xff]
  %v95 = vld [vmem:[%s1 + $0x190] sm:$0xff]
  %v96 = vld [vmem:[%s1 + $0x198] sm:$0xff]
  %v97 = vld [vmem:[%s1 + $0x1a0] sm:$0xff]
  %v98 = vld [vmem:[%s1 + $0x1a8] sm:$0xff]
  %v99 = vld [vmem:[%s1 + $0x1b0] sm:$0xff]
  %v100 = vld [vmem:[%s1 + $0x1b8] sm:$0xff]
  %v101 = vld [vmem:[%s1 + $0x1c0] sm:$0xff]
  %v102 = vld [vmem:[%s1 + $0x1c8] sm:$0xff]
  %v103 = vld [vmem:[%s1 + $0x1d0] sm:$0xff]
  %v104 = vld [vmem:[%s1 + $0x1d8] sm:$0xff]
  %v105 = vld [vmem:[%s1 + $0x1e0] sm:$0xff]
  %v106 = vld [vmem:[%s1 + $0x1e8] sm:$0xff]
  %v107 = vld [vmem:[%s1 + $0x1f0] sm:$0xff]
  %v108 = vld [vmem:[%s1 + $0x1f8] sm:$0xff]
  %v109 = vld [vmem:[%s2] sm:$0xff]
  %v110 = vld [vmem:[%s2 + $0x8] sm:$0xff]
  %v111 = vld [vmem:[%s2 + $0x10] sm:$0xff]
  %v112 = vld [vmem:[%s2 + $0x18] sm:$0xff]
  %v113 = vld [vmem:[%s2 + $0x20] sm:$0xff]
  %v114 = vld [vmem:[%s2 + $0x28] sm:$0xff]
  %v115 = vld [vmem:[%s2 + $0x30] sm:$0xff]
  %v116 = vld [vmem:[%s2 + $0x38] sm:$0xff]
  %v117 = vld [vmem:[%s2 + $0x40] sm:$0xff]
  %v118 = vld [vmem:[%s2 + $0x48] sm:$0xff]
  %v119 = vld [vmem:[%s2 + $0x50] sm:$0xff]
  %v120 = vld [vmem:[%s2 + $0x58] sm:$0xff]
  %v121 = vld [vmem:[%s2 + $0x60] sm:$0xff]
  %v122 = vld [vmem:[%s2 + $0x68] sm:$0xff]
  %v123 = vld [vmem:[%s2 + $0x70] sm:$0xff]
  %v124 = vld [vmem:[%s2 + $0x78] sm:$0xff]
  %v125 = vld [vmem:[%s2 + $0x80] sm:$0xff]
  %v126 = vld [vmem:[%s2 + $0x88] sm:$0xff]
  %v127 = vld [vmem:[%s2 + $0x90] sm:$0xff]
  %v128 = vld [vmem:[%s2 + $0x98] sm:$0xff]
  %v129 = vld [vmem:[%s2 + $0xa0] sm:$0xff]
  %v130 = vld [vmem:[%s2 + $0xa8] sm:$0xff]
  %v131 = vld [vmem:[%s2 + $0xb0] sm:$0xff]
  %v132 = vld [vmem:[%s2 + $0xb8] sm:$0xff]
  %v133 = vld [vmem:[%s2 + $0xc0] sm:$0xff]
  %v134 = vld [vmem:[%s2 + $0xc8] sm:$0xff]
  %v135 = vld [vmem:[%s2 + $0xd0] sm:$0xff]
  %v136 = vld [vmem:[%s2 + $0xd8] sm:$0xff]
  %v137 = vld [vmem:[%s2 + $0xe0] sm:$0xff]
  %v138 = vld [vmem:[%s2 + $0xe8] sm:$0xff]
  %v139 = vld [vmem:[%s2 + $0xf0] sm:$0xff]
  %v140 = vld [vmem:[%s2 + $0xf8] sm:$0xff]
  %v141 = vld [vmem:[%s2 + $0x100] sm:$0xff]
  %v142 = vld [vmem:[%s2 + $0x108] sm:$0xff]
  %v143 = vld [vmem:[%s2 + $0x110] sm:$0xff]
  %v144 = vld [vmem:[%s2 + $0x118] sm:$0xff]
  %v145 = vld [vmem:[%s2 + $0x120] sm:$0xff]
  %v146 = vld [vmem:[%s2 + $0x128] sm:$0xff]
  %v147 = vld [vmem:[%s2 + $0x130] sm:$0xff]
  %v148 = vld [vmem:[%s2 + $0x138] sm:$0xff]
  %v149 = vld [vmem:[%s2 + $0x140] sm:$0xff]
  %v150 = vld [vmem:[%s2 + $0x148] sm:$0xff]
  %v151 = vld [vmem:[%s2 + $0x150] sm:$0xff]
  %v152 = vld [vmem:[%s2 + $0x158] sm:$0xff]
  %v153 = vld [vmem:[%s2 + $0x160] sm:$0xff]
  %v154 = vld [vmem:[%s2 + $0x168] sm:$0xff]
  %v155 = vld [vmem:[%s2 + $0x170] sm:$0xff]
  %v156 = vld [vmem:[%s2 + $0x178] sm:$0xff]
  %v157 = vld [vmem:[%s2 + $0x180] sm:$0xff]
  %v158 = vld [vmem:[%s2 + $0x188] sm:$0xff]
  %v159 = vld [vmem:[%s2 + $0x190] sm:$0xff]
  %v160 = vld [vmem:[%s2 + $0x198] sm:$0xff]
  %v161 = vld [vmem:[%s2 + $0x1a0] sm:$0xff]
  %v162 = vld [vmem:[%s2 + $0x1a8] sm:$0xff]
  %v163 = vld [vmem:[%s2 + $0x1b0] sm:$0xff]
  %v164 = vld [vmem:[%s2 + $0x1b8] sm:$0xff]
  %v165 = vld [vmem:[%s2 + $0x1c0] sm:$0xff]
  %v166 = vld [vmem:[%s2 + $0x1c8] sm:$0xff]
  %v167 = vld [vmem:[%s2 + $0x1d0] sm:$0xff]
  %v168 = vld [vmem:[%s2 + $0x1d8] sm:$0xff]
  %v169 = vld [vmem:[%s2 + $0x1e0] sm:$0xff]
  %v170 = vld [vmem:[%s2 + $0x1e8] sm:$0xff]
  %v171 = vld [vmem:[%s2 + $0x1f0] sm:$0xff]
  %v172 = vld [vmem:[%s2 + $0x1f8] sm:$0xff]
  %v237 = vunpack.c.l.b16 %v109
  %v238 = vunpack.c.h.b16 %v109
  %v239 = vunpack.c.l.b16 %v110
  %v240 = vunpack.c.h.b16 %v110
  %v241 = vunpack.c.l.b16 %v111
  %v242 = vunpack.c.h.b16 %v111
  %v243 = vunpack.c.l.b16 %v112
  %v244 = vunpack.c.h.b16 %v112
  %v245 = vunpack.c.l.b16 %v113
  %v246 = vunpack.c.h.b16 %v113
  %v247 = vunpack.c.l.b16 %v114
  %v248 = vunpack.c.h.b16 %v114
  %v249 = vunpack.c.l.b16 %v115
  %v250 = vunpack.c.h.b16 %v115
  %v251 = vunpack.c.l.b16 %v116
  %v252 = vunpack.c.h.b16 %v116
  %v253 = vunpack.c.l.b16 %v117
  %v254 = vunpack.c.h.b16 %v117
  %v255 = vunpack.c.l.b16 %v118
  %v256 = vunpack.c.h.b16 %v118
  %v257 = vunpack.c.l.b16 %v119
  %v258 = vunpack.c.h.b16 %v119
  %v259 = vunpack.c.l.b16 %v120
  %v260 = vunpack.c.h.b16 %v120
  %v261 = vunpack.c.l.b16 %v121
  %v262 = vunpack.c.h.b16 %v121
  %v263 = vunpack.c.l.b16 %v122
  %v264 = vunpack.c.h.b16 %v122
  %v265 = vunpack.c.l.b16 %v123
  %v266 = vunpack.c.h.b16 %v123
  %v267 = vunpack.c.l.b16 %v124
  %v268 = vunpack.c.h.b16 %v124
  %v269 = vunpack.c.l.b16 %v125
  %v270 = vunpack.c.h.b16 %v125
  %v271 = vunpack.c.l.b16 %v126
  %v272 = vunpack.c.h.b16 %v126
  %v273 = vunpack.c.l.b16 %v127
  %v274 = vunpack.c.h.b16 %v127
  %v275 = vunpack.c.l.b16 %v128
  %v276 = vunpack.c.h.b16 %v128
  %v277 = vunpack.c.l.b16 %v129
  %v278 = vunpack.c.h.b16 %v129
  %v279 = vunpack.c.l.b16 %v130
  %v280 = vunpack.c.h.b16 %v130
  %v281 = vunpack.c.l.b16 %v131
  %v282 = vunpack.c.h.b16 %v131
  %v283 = vunpack.c.l.b16 %v132
  %v284 = vunpack.c.h.b16 %v132
  %v285 = vunpack.c.l.b16 %v133
  %v286 = vunpack.c.h.b16 %v133
  %v287 = vunpack.c.l.b16 %v134
  %v288 = vunpack.c.h.b16 %v134
  %v289 = vunpack.c.l.b16 %v135
  %v290 = vunpack.c.h.b16 %v135
  %v291 = vunpack.c.l.b16 %v136
  %v292 = vunpack.c.h.b16 %v136
  %v293 = vunpack.c.l.b16 %v137
  %v294 = vunpack.c.h.b16 %v137
  %v295 = vunpack.c.l.b16 %v138
  %v296 = vunpack.c.h.b16 %v138
  %v297 = vunpack.c.l.b16 %v139
  %v298 = vunpack.c.h.b16 %v139
  %v299 = vunpack.c.l.b16 %v140
  %v300 = vunpack.c.h.b16 %v140
  %v301 = vunpack.c.l.b16 %v141
  %v302 = vunpack.c.h.b16 %v141
  %v303 = vunpack.c.l.b16 %v142
  %v304 = vunpack.c.h.b16 %v142
  %v305 = vunpack.c.l.b16 %v143
  %v306 = vunpack.c.h.b16 %v143
  %v307 = vunpack.c.l.b16 %v144
  %v308 = vunpack.c.h.b16 %v144
  %v309 = vunpack.c.l.b16 %v145
  %v310 = vunpack.c.h.b16 %v145
  %v311 = vunpack.c.l.b16 %v146
  %v312 = vunpack.c.h.b16 %v146
  %v313 = vunpack.c.l.b16 %v147
  %v314 = vunpack.c.h.b16 %v147
  %v315 = vunpack.c.l.b16 %v148
  %v316 = vunpack.c.h.b16 %v148
  %v317 = vunpack.c.l.b16 %v149
  %v318 = vunpack.c.h.b16 %v149
  %v319 = vunpack.c.l.b16 %v150
  %v320 = vunpack.c.h.b16 %v150
  %v321 = vunpack.c.l.b16 %v151
  %v322 = vunpack.c.h.b16 %v151
  %v323 = vunpack.c.l.b16 %v152
  %v324 = vunpack.c.h.b16 %v152
  %v325 = vunpack.c.l.b16 %v153
  %v326 = vunpack.c.h.b16 %v153
  %v327 = vunpack.c.l.b16 %v154
  %v328 = vunpack.c.h.b16 %v154
  %v329 = vunpack.c.l.b16 %v155
  %v330 = vunpack.c.h.b16 %v155
  %v331 = vunpack.c.l.b16 %v156
  %v332 = vunpack.c.h.b16 %v156
  %v333 = vunpack.c.l.b16 %v157
  %v334 = vunpack.c.h.b16 %v157
  %v335 = vunpack.c.l.b16 %v158
  %v336 = vunpack.c.h.b16 %v158
  %v337 = vunpack.c.l.b16 %v159
  %v338 = vunpack.c.h.b16 %v159
  %v339 = vunpack.c.l.b16 %v160
  %v340 = vunpack.c.h.b16 %v160
  %v341 = vunpack.c.l.b16 %v161
  %v342 = vunpack.c.h.b16 %v161
  %v343 = vunpack.c.l.b16 %v162
  %v344 = vunpack.c.h.b16 %v162
  %v345 = vunpack.c.l.b16 %v163
  %v346 = vunpack.c.h.b16 %v163
  %v347 = vunpack.c.l.b16 %v164
  %v348 = vunpack.c.h.b16 %v164
  %v349 = vunpack.c.l.b16 %v165
  %v350 = vunpack.c.h.b16 %v165
  %v351 = vunpack.c.l.b16 %v166
  %v352 = vunpack.c.h.b16 %v166
  %v353 = vunpack.c.l.b16 %v167
  %v354 = vunpack.c.h.b16 %v167
  %v355 = vunpack.c.l.b16 %v168
  %v356 = vunpack.c.h.b16 %v168
  %v357 = vunpack.c.l.b16 %v169
  %v358 = vunpack.c.h.b16 %v169
  %v359 = vunpack.c.l.b16 %v170
  %v360 = vunpack.c.h.b16 %v170
  %v361 = vunpack.c.l.b16 %v171
  %v362 = vunpack.c.h.b16 %v171
  %v363 = vunpack.c.l.b16 %v172
  %v364 = vunpack.c.h.b16 %v172
  %v365 = vpack.c.b16 %v241, %v237
  %v366 = vpack.c.b16 %v242, %v238
  %v367 = vpack.c.b16 %v243, %v239
  %v368 = vpack.c.b16 %v244, %v240
  %v369 = vpack.c.b16 %v249, %v245
  %v370 = vpack.c.b16 %v250, %v246
  %v371 = vpack.c.b16 %v251, %v247
  %v372 = vpack.c.b16 %v252, %v248
  %v373 = vpack.c.b16 %v257, %v253
  %v374 = vpack.c.b16 %v258, %v254
  %v375 = vpack.c.b16 %v259, %v255
  %v376 = vpack.c.b16 %v260, %v256
  %v377 = vpack.c.b16 %v265, %v261
  %v378 = vpack.c.b16 %v266, %v262
  %v379 = vpack.c.b16 %v267, %v263
  %v380 = vpack.c.b16 %v268, %v264
  %v381 = vpack.c.b16 %v273, %v269
  %v382 = vpack.c.b16 %v274, %v270
  %v383 = vpack.c.b16 %v275, %v271
  %v384 = vpack.c.b16 %v276, %v272
  %v385 = vpack.c.b16 %v281, %v277
  %v386 = vpack.c.b16 %v282, %v278
  %v387 = vpack.c.b16 %v283, %v279
  %v388 = vpack.c.b16 %v284, %v280
  %v389 = vpack.c.b16 %v289, %v285
  %v390 = vpack.c.b16 %v290, %v286
  %v391 = vpack.c.b16 %v291, %v287
  %v392 = vpack.c.b16 %v292, %v288
  %v393 = vpack.c.b16 %v297, %v293
  %v394 = vpack.c.b16 %v298, %v294
  %v395 = vpack.c.b16 %v299, %v295
  %v396 = vpack.c.b16 %v300, %v296
  %v397 = vpack.c.b16 %v305, %v301
  %v398 = vpack.c.b16 %v306, %v302
  %v399 = vpack.c.b16 %v307, %v303
  %v400 = vpack.c.b16 %v308, %v304
  %v401 = vpack.c.b16 %v313, %v309
  %v402 = vpack.c.b16 %v314, %v310
  %v403 = vpack.c.b16 %v315, %v311
  %v404 = vpack.c.b16 %v316, %v312
  %v405 = vpack.c.b16 %v321, %v317
  %v406 = vpack.c.b16 %v322, %v318
  %v407 = vpack.c.b16 %v323, %v319
  %v408 = vpack.c.b16 %v324, %v320
  %v409 = vpack.c.b16 %v329, %v325
  %v410 = vpack.c.b16 %v330, %v326
  %v411 = vpack.c.b16 %v331, %v327
  %v412 = vpack.c.b16 %v332, %v328
  %v413 = vpack.c.b16 %v337, %v333
  %v414 = vpack.c.b16 %v338, %v334
  %v415 = vpack.c.b16 %v339, %v335
  %v416 = vpack.c.b16 %v340, %v336
  %v417 = vpack.c.b16 %v345, %v341
  %v418 = vpack.c.b16 %v346, %v342
  %v419 = vpack.c.b16 %v347, %v343
  %v420 = vpack.c.b16 %v348, %v344
  %v421 = vpack.c.b16 %v353, %v349
  %v422 = vpack.c.b16 %v354, %v350
  %v423 = vpack.c.b16 %v355, %v351
  %v424 = vpack.c.b16 %v356, %v352
  %v425 = vpack.c.b16 %v361, %v357
  %v426 = vpack.c.b16 %v362, %v358
  %v427 = vpack.c.b16 %v363, %v359
  %v428 = vpack.c.b16 %v364, %v360
  %493 = vmatprep.subr.bf16.mxu0 %v366
  %494 = vmatpush1.bf16.msra.mxu0 %v365
  %495 = vmatprep.subr.bf16.mxu0 %v370
  %496 = vmatpush1.bf16.msra.mxu0 %v369
  %497 = vmatprep.subr.bf16.mxu0 %v374
  %498 = vmatpush1.bf16.msra.mxu0 %v373
  %499 = vmatprep.subr.bf16.mxu0 %v378
  %500 = vmatpush1.bf16.msra.mxu0 %v377
  %501 = vmatprep.subr.bf16.mxu0 %v382
  %502 = vmatpush1.bf16.msra.mxu0 %v381
  %503 = vmatprep.subr.bf16.mxu0 %v386
  %504 = vmatpush1.bf16.msra.mxu0 %v385
  %505 = vmatprep.subr.bf16.mxu0 %v390
  %506 = vmatpush1.bf16.msra.mxu0 %v389
  %507 = vmatprep.subr.bf16.mxu0 %v394
  %508 = vmatpush1.bf16.msra.mxu0 %v393
  %509 = vmatprep.subr.bf16.mxu0 %v398
  %510 = vmatpush1.bf16.msra.mxu0 %v397
  %511 = vmatprep.subr.bf16.mxu0 %v402
  %512 = vmatpush1.bf16.msra.mxu0 %v401
  %513 = vmatprep.subr.bf16.mxu0 %v406
  %514 = vmatpush1.bf16.msra.mxu0 %v405
  %515 = vmatprep.subr.bf16.mxu0 %v410
  %516 = vmatpush1.bf16.msra.mxu0 %v409
  %517 = vmatprep.subr.bf16.mxu0 %v414
  %518 = vmatpush1.bf16.msra.mxu0 %v413
  %519 = vmatprep.subr.bf16.mxu0 %v418
  %520 = vmatpush1.bf16.msra.mxu0 %v417
  %521 = vmatprep.subr.bf16.mxu0 %v422
  %522 = vmatpush1.bf16.msra.mxu0 %v421
  %523 = vmatprep.subr.bf16.mxu0 %v426
  %524 = vmatpush1.bf16.msra.mxu0 %v425
  %525 = vmatprep.mubr.bf16.mxu0 %v44
  %526 = vmatmul.mubr.bf16.gmra.mrb[0].mxu0 %v43
  %v527 = vpop.f32.mrb[0].mxu0
  %v528 = vadd.f32 0.0, %v527
  %v529 = vpop.f32.mrb[0].mxu0
  %v530 = vadd.f32 0.0, %v529
  %v531 = vpop.f32.mrb[0].mxu0
  %v532 = vpop.f32.mrb[0].mxu0
  %533 = vdwg.mxu0
  %534 = vmatprep.subr.bf16.mxu0 %v368
  %535 = vmatpush1.bf16.msra.mxu0 %v367
  %536 = vmatprep.subr.bf16.mxu0 %v372
  %537 = vmatpush1.bf16.msra.mxu0 %v371
  %538 = vmatprep.subr.bf16.mxu0 %v376
  %539 = vmatpush1.bf16.msra.mxu0 %v375
  %540 = vmatprep.subr.bf16.mxu0 %v380
  %541 = vmatpush1.bf16.msra.mxu0 %v379
  %542 = vmatprep.subr.bf16.mxu0 %v384
  %543 = vmatpush1.bf16.msra.mxu0 %v383
  %544 = vmatprep.subr.bf16.mxu0 %v388
  %545 = vmatpush1.bf16.msra.mxu0 %v387
  %546 = vmatprep.subr.bf16.mxu0 %v392
  %547 = vmatpush1.bf16.msra.mxu0 %v391
  %548 = vmatprep.subr.bf16.mxu0 %v396
  %549 = vmatpush1.bf16.msra.mxu0 %v395
  %550 = vmatprep.subr.bf16.mxu0 %v400
  %551 = vmatpush1.bf16.msra.mxu0 %v399
  %552 = vmatprep.subr.bf16.mxu0 %v404
  %553 = vmatpush1.bf16.msra.mxu0 %v403
  %554 = vmatprep.subr.bf16.mxu0 %v408
  %555 = vmatpush1.bf16.msra.mxu0 %v407
  %556 = vmatprep.subr.bf16.mxu0 %v412
  %557 = vmatpush1.bf16.msra.mxu0 %v411
  %558 = vmatprep.subr.bf16.mxu0 %v416
  %559 = vmatpush1.bf16.msra.mxu0 %v415
  %560 = vmatprep.subr.bf16.mxu0 %v420
  %561 = vmatpush1.bf16.msra.mxu0 %v419
  %562 = vmatprep.subr.bf16.mxu0 %v424
  %563 = vmatpush1.bf16.msra.mxu0 %v423
  %564 = vmatprep.subr.bf16.mxu0 %v428
  %565 = vmatpush1.bf16.msra.mxu0 %v427
  %566 = vmatprep.mubr.bf16.mxu0 %v44
  %567 = vmatmul.mubr.bf16.gmra.mrb[0].mxu0 %v43
  %v568 = vpop.f32.mrb[0].mxu0
  %v569 = vadd.f32 0.0, %v568
  %v570 = vpop.f32.mrb[0].mxu0
  %v571 = vadd.f32 0.0, %v570
  %v572 = vpop.f32.mrb[0].mxu0
  %v573 = vpop.f32.mrb[0].mxu0
  %574 = vdwg.mxu0
  %v639 = vunpack.c.l.b16 %v45
  %v640 = vunpack.c.h.b16 %v45
  %v641 = vunpack.c.l.b16 %v46
  %v642 = vunpack.c.h.b16 %v46
  %v643 = vunpack.c.l.b16 %v47
  %v644 = vunpack.c.h.b16 %v47
  %v645 = vunpack.c.l.b16 %v48
  %v646 = vunpack.c.h.b16 %v48
  %v647 = vunpack.c.l.b16 %v49
  %v648 = vunpack.c.h.b16 %v49
  %v649 = vunpack.c.l.b16 %v50
  %v650 = vunpack.c.h.b16 %v50
  %v651 = vunpack.c.l.b16 %v51
  %v652 = vunpack.c.h.b16 %v51
  %v653 = vunpack.c.l.b16 %v52
  %v654 = vunpack.c.h.b16 %v52
  %v655 = vunpack.c.l.b16 %v53
  %v656 = vunpack.c.h.b16 %v53
  %v657 = vunpack.c.l.b16 %v54
  %v658 = vunpack.c.h.b16 %v54
  %v659 = vunpack.c.l.b16 %v55
  %v660 = vunpack.c.h.b16 %v55
  %v661 = vunpack.c.l.b16 %v56
  %v662 = vunpack.c.h.b16 %v56
  %v663 = vunpack.c.l.b16 %v57
  %v664 = vunpack.c.h.b16 %v57
  %v665 = vunpack.c.l.b16 %v58
  %v666 = vunpack.c.h.b16 %v58
  %v667 = vunpack.c.l.b16 %v59
  %v668 = vunpack.c.h.b16 %v59
  %v669 = vunpack.c.l.b16 %v60
  %v670 = vunpack.c.h.b16 %v60
  %v671 = vunpack.c.l.b16 %v61
  %v672 = vunpack.c.h.b16 %v61
  %v673 = vunpack.c.l.b16 %v62
  %v674 = vunpack.c.h.b16 %v62
  %v675 = vunpack.c.l.b16 %v63
  %v676 = vunpack.c.h.b16 %v63
  %v677 = vunpack.c.l.b16 %v64
  %v678 = vunpack.c.h.b16 %v64
  %v679 = vunpack.c.l.b16 %v65
  %v680 = vunpack.c.h.b16 %v65
  %v681 = vunpack.c.l.b16 %v66
  %v682 = vunpack.c.h.b16 %v66
  %v683 = vunpack.c.l.b16 %v67
  %v684 = vunpack.c.h.b16 %v67
  %v685 = vunpack.c.l.b16 %v68
  %v686 = vunpack.c.h.b16 %v68
  %v687 = vunpack.c.l.b16 %v69
  %v688 = vunpack.c.h.b16 %v69
  %v689 = vunpack.c.l.b16 %v70
  %v690 = vunpack.c.h.b16 %v70
  %v691 = vunpack.c.l.b16 %v71
  %v692 = vunpack.c.h.b16 %v71
  %v693 = vunpack.c.l.b16 %v72
  %v694 = vunpack.c.h.b16 %v72
  %v695 = vunpack.c.l.b16 %v73
  %v696 = vunpack.c.h.b16 %v73
  %v697 = vunpack.c.l.b16 %v74
  %v698 = vunpack.c.h.b16 %v74
  %v699 = vunpack.c.l.b16 %v75
  %v700 = vunpack.c.h.b16 %v75
  %v701 = vunpack.c.l.b16 %v76
  %v702 = vunpack.c.h.b16 %v76
  %v703 = vunpack.c.l.b16 %v77
  %v704 = vunpack.c.h.b16 %v77
  %v705 = vunpack.c.l.b16 %v78
  %v706 = vunpack.c.h.b16 %v78
  %v707 = vunpack.c.l.b16 %v79
  %v708 = vunpack.c.h.b16 %v79
  %v709 = vunpack.c.l.b16 %v80
  %v710 = vunpack.c.h.b16 %v80
  %v711 = vunpack.c.l.b16 %v81
  %v712 = vunpack.c.h.b16 %v81
  %v713 = vunpack.c.l.b16 %v82
  %v714 = vunpack.c.h.b16 %v82
  %v715 = vunpack.c.l.b16 %v83
  %v716 = vunpack.c.h.b16 %v83
  %v717 = vunpack.c.l.b16 %v84
  %v718 = vunpack.c.h.b16 %v84
  %v719 = vunpack.c.l.b16 %v85
  %v720 = vunpack.c.h.b16 %v85
  %v721 = vunpack.c.l.b16 %v86
  %v722 = vunpack.c.h.b16 %v86
  %v723 = vunpack.c.l.b16 %v87
  %v724 = vunpack.c.h.b16 %v87
  %v725 = vunpack.c.l.b16 %v88
  %v726 = vunpack.c.h.b16 %v88
  %v727 = vunpack.c.l.b16 %v89
  %v728 = vunpack.c.h.b16 %v89
  %v729 = vunpack.c.l.b16 %v90
  %v730 = vunpack.c.h.b16 %v90
  %v731 = vunpack.c.l.b16 %v91
  %v732 = vunpack.c.h.b16 %v91
  %v733 = vunpack.c.l.b16 %v92
  %v734 = vunpack.c.h.b16 %v92
  %v735 = vunpack.c.l.b16 %v93
  %v736 = vunpack.c.h.b16 %v93
  %v737 = vunpack.c.l.b16 %v94
  %v738 = vunpack.c.h.b16 %v94
  %v739 = vunpack.c.l.b16 %v95
  %v740 = vunpack.c.h.b16 %v95
  %v741 = vunpack.c.l.b16 %v96
  %v742 = vunpack.c.h.b16 %v96
  %v743 = vunpack.c.l.b16 %v97
  %v744 = vunpack.c.h.b16 %v97
  %v745 = vunpack.c.l.b16 %v98
  %v746 = vunpack.c.h.b16 %v98
  %v747 = vunpack.c.l.b16 %v99
  %v748 = vunpack.c.h.b16 %v99
  %v749 = vunpack.c.l.b16 %v100
  %v750 = vunpack.c.h.b16 %v100
  %v751 = vunpack.c.l.b16 %v101
  %v752 = vunpack.c.h.b16 %v101
  %v753 = vunpack.c.l.b16 %v102
  %v754 = vunpack.c.h.b16 %v102
  %v755 = vunpack.c.l.b16 %v103
  %v756 = vunpack.c.h.b16 %v103
  %v757 = vunpack.c.l.b16 %v104
  %v758 = vunpack.c.h.b16 %v104
  %v759 = vunpack.c.l.b16 %v105
  %v760 = vunpack.c.h.b16 %v105
  %v761 = vunpack.c.l.b16 %v106
  %v762 = vunpack.c.h.b16 %v106
  %v763 = vunpack.c.l.b16 %v107
  %v764 = vunpack.c.h.b16 %v107
  %v765 = vunpack.c.l.b16 %v108
  %v766 = vunpack.c.h.b16 %v108
  %v767 = vpack.c.b16 %v643, %v639
  %v768 = vpack.c.b16 %v644, %v640
  %v769 = vpack.c.b16 %v645, %v641
  %v770 = vpack.c.b16 %v646, %v642
  %v771 = vpack.c.b16 %v651, %v647
  %v772 = vpack.c.b16 %v652, %v648
  %v773 = vpack.c.b16 %v653, %v649
  %v774 = vpack.c.b16 %v654, %v650
  %v775 = vpack.c.b16 %v659, %v655
  %v776 = vpack.c.b16 %v660, %v656
  %v777 = vpack.c.b16 %v661, %v657
  %v778 = vpack.c.b16 %v662, %v658
  %v779 = vpack.c.b16 %v667, %v663
  %v780 = vpack.c.b16 %v668, %v664
  %v781 = vpack.c.b16 %v669, %v665
  %v782 = vpack.c.b16 %v670, %v666
  %v783 = vpack.c.b16 %v675, %v671
  %v784 = vpack.c.b16 %v676, %v672
  %v785 = vpack.c.b16 %v677, %v673
  %v786 = vpack.c.b16 %v678, %v674
  %v787 = vpack.c.b16 %v683, %v679
  %v788 = vpack.c.b16 %v684, %v680
  %v789 = vpack.c.b16 %v685, %v681
  %v790 = vpack.c.b16 %v686, %v682
  %v791 = vpack.c.b16 %v691, %v687
  %v792 = vpack.c.b16 %v692, %v688
  %v793 = vpack.c.b16 %v693, %v689
  %v794 = vpack.c.b16 %v694, %v690
  %v795 = vpack.c.b16 %v699, %v695
  %v796 = vpack.c.b16 %v700, %v696
  %v797 = vpack.c.b16 %v701, %v697
  %v798 = vpack.c.b16 %v702, %v698
  %v799 = vpack.c.b16 %v707, %v703
  %v800 = vpack.c.b16 %v708, %v704
  %v801 = vpack.c.b16 %v709, %v705
  %v802 = vpack.c.b16 %v710, %v706
  %v803 = vpack.c.b16 %v715, %v711
  %v804 = vpack.c.b16 %v716, %v712
  %v805 = vpack.c.b16 %v717, %v713
  %v806 = vpack.c.b16 %v718, %v714
  %v807 = vpack.c.b16 %v723, %v719
  %v808 = vpack.c.b16 %v724, %v720
  %v809 = vpack.c.b16 %v725, %v721
  %v810 = vpack.c.b16 %v726, %v722
  %v811 = vpack.c.b16 %v731, %v727
  %v812 = vpack.c.b16 %v732, %v728
  %v813 = vpack.c.b16 %v733, %v729
  %v814 = vpack.c.b16 %v734, %v730
  %v815 = vpack.c.b16 %v739, %v735
  %v816 = vpack.c.b16 %v740, %v736
  %v817 = vpack.c.b16 %v741, %v737
  %v818 = vpack.c.b16 %v742, %v738
  %v819 = vpack.c.b16 %v747, %v743
  %v820 = vpack.c.b16 %v748, %v744
  %v821 = vpack.c.b16 %v749, %v745
  %v822 = vpack.c.b16 %v750, %v746
  %v823 = vpack.c.b16 %v755, %v751
  %v824 = vpack.c.b16 %v756, %v752
  %v825 = vpack.c.b16 %v757, %v753
  %v826 = vpack.c.b16 %v758, %v754
  %v827 = vpack.c.b16 %v763, %v759
  %v828 = vpack.c.b16 %v764, %v760
  %v829 = vpack.c.b16 %v765, %v761
  %v830 = vpack.c.b16 %v766, %v762
  %895 = vmatprep.subr.bf16.mxu0 %v768
  %896 = vmatpush1.bf16.msra.mxu0 %v767
  %897 = vmatprep.subr.bf16.mxu0 %v772
  %898 = vmatpush1.bf16.msra.mxu0 %v771
  %899 = vmatprep.subr.bf16.mxu0 %v776
  %900 = vmatpush1.bf16.msra.mxu0 %v775
  %901 = vmatprep.subr.bf16.mxu0 %v780
  %902 = vmatpush1.bf16.msra.mxu0 %v779
  %903 = vmatprep.subr.bf16.mxu0 %v784
  %904 = vmatpush1.bf16.msra.mxu0 %v783
  %905 = vmatprep.subr.bf16.mxu0 %v788
  %906 = vmatpush1.bf16.msra.mxu0 %v787
  %907 = vmatprep.subr.bf16.mxu0 %v792
  %908 = vmatpush1.bf16.msra.mxu0 %v791
  %909 = vmatprep.subr.bf16.mxu0 %v796
  %910 = vmatpush1.bf16.msra.mxu0 %v795
  %911 = vmatprep.subr.bf16.mxu0 %v800
  %912 = vmatpush1.bf16.msra.mxu0 %v799
  %913 = vmatprep.subr.bf16.mxu0 %v804
  %914 = vmatpush1.bf16.msra.mxu0 %v803
  %915 = vmatprep.subr.bf16.mxu0 %v808
  %916 = vmatpush1.bf16.msra.mxu0 %v807
  %917 = vmatprep.subr.bf16.mxu0 %v812
  %918 = vmatpush1.bf16.msra.mxu0 %v811
  %919 = vmatprep.subr.bf16.mxu0 %v816
  %920 = vmatpush1.bf16.msra.mxu0 %v815
  %921 = vmatprep.subr.bf16.mxu0 %v820
  %922 = vmatpush1.bf16.msra.mxu0 %v819
  %923 = vmatprep.subr.bf16.mxu0 %v824
  %924 = vmatpush1.bf16.msra.mxu0 %v823
  %925 = vmatprep.subr.bf16.mxu0 %v828
  %926 = vmatpush1.bf16.msra.mxu0 %v827
  %927 = vmatprep.mubr.bf16.mxu0 %v39
  %928 = vmatmul.mubr.bf16.gmra.mrb[0].mxu0 %v38
  %v929 = vpop.f32.mrb[0].mxu0
  %v930 = vadd.f32 %v528, %v929
  %v931 = vpop.f32.mrb[0].mxu0
  %v932 = vadd.f32 %v530, %v931
  %v933 = vpop.f32.mrb[0].mxu0
  %v934 = vpop.f32.mrb[0].mxu0
  %935 = vdwg.mxu0
  %936 = vmatprep.subr.bf16.mxu0 %v770
  %937 = vmatpush1.bf16.msra.mxu0 %v769
  %938 = vmatprep.subr.bf16.mxu0 %v774
  %939 = vmatpush1.bf16.msra.mxu0 %v773
  %940 = vmatprep.subr.bf16.mxu0 %v778
  %941 = vmatpush1.bf16.msra.mxu0 %v777
  %942 = vmatprep.subr.bf16.mxu0 %v782
  %943 = vmatpush1.bf16.msra.mxu0 %v781
  %944 = vmatprep.subr.bf16.mxu0 %v786
  %945 = vmatpush1.bf16.msra.mxu0 %v785
  %946 = vmatprep.subr.bf16.mxu0 %v790
  %947 = vmatpush1.bf16.msra.mxu0 %v789
  %948 = vmatprep.subr.bf16.mxu0 %v794
  %949 = vmatpush1.bf16.msra.mxu0 %v793
  %950 = vmatprep.subr.bf16.mxu0 %v798
  %951 = vmatpush1.bf16.msra.mxu0 %v797
  %952 = vmatprep.subr.bf16.mxu0 %v802
  %953 = vmatpush1.bf16.msra.mxu0 %v801
  %954 = vmatprep.subr.bf16.mxu0 %v806
  %955 = vmatpush1.bf16.msra.mxu0 %v805
  %956 = vmatprep.subr.bf16.mxu0 %v810
  %957 = vmatpush1.bf16.msra.mxu0 %v809
  %958 = vmatprep.subr.bf16.mxu0 %v814
  %959 = vmatpush1.bf16.msra.mxu0 %v813
  %960 = vmatprep.subr.bf16.mxu0 %v818
  %961 = vmatpush1.bf16.msra.mxu0 %v817
  %962 = vmatprep.subr.bf16.mxu0 %v822
  %963 = vmatpush1.bf16.msra.mxu0 %v821
  %964 = vmatprep.subr.bf16.mxu0 %v826
  %965 = vmatpush1.bf16.msra.mxu0 %v825
  %966 = vmatprep.subr.bf16.mxu0 %v830
  %967 = vmatpush1.bf16.msra.mxu0 %v829
  %968 = vmatprep.mubr.bf16.mxu0 %v39
  %969 = vmatmul.mubr.bf16.gmra.mrb[0].mxu0 %v38
  %v970 = vpop.f32.mrb[0].mxu0
  %v971 = vadd.f32 %v569, %v970
  %v972 = vpop.f32.mrb[0].mxu0
  %v973 = vadd.f32 %v571, %v972
  %v974 = vpop.f32.mrb[0].mxu0
  %v975 = vpop.f32.mrb[0].mxu0
  %976 = vdwg.mxu0
  %v977 = vld [vmem:[%s3] sm:$0xf]
  %v979 = vlaneseq
  %v980 = vshrl.u32 %v979, 7
  %v981 = vsub.s32 0, %v980
  %v982 = vrot.slane %v977, %v981
  %v983 = vlaneseq
  %v984 = vshrl.u32 %v983, 7
  %v985 = vsub.s32 1, %v984
  %v986 = vrot.slane %v977, %v985
  %v987 = vlaneseq
  %v988 = vshrl.u32 %v987, 7
  %v989 = vsub.s32 2, %v988
  %v990 = vrot.slane %v977, %v989
  %v991 = vlaneseq
  %v992 = vshrl.u32 %v991, 7
  %v993 = vsub.s32 3, %v992
  %v994 = vrot.slane %v977, %v993
  %v999 = vadd.f32 %v930, %v982
  %v1000 = vadd.f32 %v932, %v986
  %v1001 = vadd.f32 %v971, %v990
  %v1002 = vadd.f32 %v973, %v994
  %v1003 = vmax.f32 %v999, 0.0
  %v1004 = vmax.f32 %v1000, 0.0
  %v1005 = vmax.f32 %v1001, 0.0
  %v1006 = vmax.f32 %v1002, 0.0
  %v1007 = vpack.c.bf16 %v1003, %v1003
  %v1008 = vpack.c.bf16 %v1004, %v1004
  %v1009 = vpack.c.bf16 %v1005, %v1005
  %v1010 = vpack.c.bf16 %v1006, %v1006
  %v1011 = vld [vmem:[%s4] sm:$0xff]
  %v1012 = vld [vmem:[%s4 + $0x8] sm:$0xff]
  %v1013 = vld [vmem:[%s4 + $0x10] sm:$0xff]
  %v1014 = vld [vmem:[%s4 + $0x18] sm:$0xff]
  %v1015 = vld [vmem:[%s4 + $0x20] sm:$0xff]
  %v1016 = vld [vmem:[%s4 + $0x28] sm:$0xff]
  %v1017 = vld [vmem:[%s4 + $0x30] sm:$0xff]
  %v1018 = vld [vmem:[%s4 + $0x38] sm:$0xff]
  %v1019 = vld [vmem:[%s4 + $0x40] sm:$0xff]
  %v1020 = vld [vmem:[%s4 + $0x48] sm:$0xff]
  %v1021 = vld [vmem:[%s4 + $0x50] sm:$0xff]
  %v1022 = vld [vmem:[%s4 + $0x58] sm:$0xff]
  %v1023 = vld [vmem:[%s4 + $0x60] sm:$0xff]
  %v1024 = vld [vmem:[%s4 + $0x68] sm:$0xff]
  %v1025 = vld [vmem:[%s4 + $0x70] sm:$0xff]
  %v1026 = vld [vmem:[%s4 + $0x78] sm:$0xff]
  %v1027 = vld [vmem:[%s4 + $0x80] sm:$0xff]
  %v1028 = vld [vmem:[%s4 + $0x88] sm:$0xff]
  %v1029 = vld [vmem:[%s4 + $0x90] sm:$0xff]
  %v1030 = vld [vmem:[%s4 + $0x98] sm:$0xff]
  %v1031 = vld [vmem:[%s4 + $0xa0] sm:$0xff]
  %v1032 = vld [vmem:[%s4 + $0xa8] sm:$0xff]
  %v1033 = vld [vmem:[%s4 + $0xb0] sm:$0xff]
  %v1034 = vld [vmem:[%s4 + $0xb8] sm:$0xff]
  %v1035 = vld [vmem:[%s4 + $0xc0] sm:$0xff]
  %v1036 = vld [vmem:[%s4 + $0xc8] sm:$0xff]
  %v1037 = vld [vmem:[%s4 + $0xd0] sm:$0xff]
  %v1038 = vld [vmem:[%s4 + $0xd8] sm:$0xff]
  %v1039 = vld [vmem:[%s4 + $0xe0] sm:$0xff]
  %v1040 = vld [vmem:[%s4 + $0xe8] sm:$0xff]
  %v1041 = vld [vmem:[%s4 + $0xf0] sm:$0xff]
  %v1042 = vld [vmem:[%s4 + $0xf8] sm:$0xff]
  %v1043 = vld [vmem:[%s4 + $0x100] sm:$0xff]
  %v1044 = vld [vmem:[%s4 + $0x108] sm:$0xff]
  %v1045 = vld [vmem:[%s4 + $0x110] sm:$0xff]
  %v1046 = vld [vmem:[%s4 + $0x118] sm:$0xff]
  %v1047 = vld [vmem:[%s4 + $0x120] sm:$0xff]
  %v1048 = vld [vmem:[%s4 + $0x128] sm:$0xff]
  %v1049 = vld [vmem:[%s4 + $0x130] sm:$0xff]
  %v1050 = vld [vmem:[%s4 + $0x138] sm:$0xff]
  %v1051 = vld [vmem:[%s4 + $0x140] sm:$0xff]
  %v1052 = vld [vmem:[%s4 + $0x148] sm:$0xff]
  %v1053 = vld [vmem:[%s4 + $0x150] sm:$0xff]
  %v1054 = vld [vmem:[%s4 + $0x158] sm:$0xff]
  %v1055 = vld [vmem:[%s4 + $0x160] sm:$0xff]
  %v1056 = vld [vmem:[%s4 + $0x168] sm:$0xff]
  %v1057 = vld [vmem:[%s4 + $0x170] sm:$0xff]
  %v1058 = vld [vmem:[%s4 + $0x178] sm:$0xff]
  %v1059 = vld [vmem:[%s4 + $0x180] sm:$0xff]
  %v1060 = vld [vmem:[%s4 + $0x188] sm:$0xff]
  %v1061 = vld [vmem:[%s4 + $0x190] sm:$0xff]
  %v1062 = vld [vmem:[%s4 + $0x198] sm:$0xff]
  %v1063 = vld [vmem:[%s4 + $0x1a0] sm:$0xff]
  %v1064 = vld [vmem:[%s4 + $0x1a8] sm:$0xff]
  %v1065 = vld [vmem:[%s4 + $0x1b0] sm:$0xff]
  %v1066 = vld [vmem:[%s4 + $0x1b8] sm:$0xff]
  %v1067 = vld [vmem:[%s4 + $0x1c0] sm:$0xff]
  %v1068 = vld [vmem:[%s4 + $0x1c8] sm:$0xff]
  %v1069 = vld [vmem:[%s4 + $0x1d0] sm:$0xff]
  %v1070 = vld [vmem:[%s4 + $0x1d8] sm:$0xff]
  %v1071 = vld [vmem:[%s4 + $0x1e0] sm:$0xff]
  %v1072 = vld [vmem:[%s4 + $0x1e8] sm:$0xff]
  %v1073 = vld [vmem:[%s4 + $0x1f0] sm:$0xff]
  %v1074 = vld [vmem:[%s4 + $0x1f8] sm:$0xff]
  %v1075 = vld [vmem:[%s5] sm:$0x3]
  %v1077 = vlaneseq
  %v1078 = vshrl.u32 %v1077, 7
  %v1079 = vsub.s32 0, %v1078
  %v1080 = vrot.slane %v1075, %v1079
  %v1081 = vlaneseq
  %v1082 = vshrl.u32 %v1081, 7
  %v1083 = vsub.s32 1, %v1082
  %v1084 = vrot.slane %v1075, %v1083
  %v1151 = vunpack.c.l.b16 %v1011
  %v1152 = vunpack.c.h.b16 %v1011
  %v1153 = vunpack.c.l.b16 %v1012
  %v1154 = vunpack.c.h.b16 %v1012
  %v1155 = vunpack.c.l.b16 %v1013
  %v1156 = vunpack.c.h.b16 %v1013
  %v1157 = vunpack.c.l.b16 %v1014
  %v1158 = vunpack.c.h.b16 %v1014
  %v1159 = vunpack.c.l.b16 %v1015
  %v1160 = vunpack.c.h.b16 %v1015
  %v1161 = vunpack.c.l.b16 %v1016
  %v1162 = vunpack.c.h.b16 %v1016
  %v1163 = vunpack.c.l.b16 %v1017
  %v1164 = vunpack.c.h.b16 %v1017
  %v1165 = vunpack.c.l.b16 %v1018
  %v1166 = vunpack.c.h.b16 %v1018
  %v1167 = vunpack.c.l.b16 %v1019
  %v1168 = vunpack.c.h.b16 %v1019
  %v1169 = vunpack.c.l.b16 %v1020
  %v1170 = vunpack.c.h.b16 %v1020
  %v1171 = vunpack.c.l.b16 %v1021
  %v1172 = vunpack.c.h.b16 %v1021
  %v1173 = vunpack.c.l.b16 %v1022
  %v1174 = vunpack.c.h.b16 %v1022
  %v1175 = vunpack.c.l.b16 %v1023
  %v1176 = vunpack.c.h.b16 %v1023
  %v1177 = vunpack.c.l.b16 %v1024
  %v1178 = vunpack.c.h.b16 %v1024
  %v1179 = vunpack.c.l.b16 %v1025
  %v1180 = vunpack.c.h.b16 %v1025
  %v1181 = vunpack.c.l.b16 %v1026
  %v1182 = vunpack.c.h.b16 %v1026
  %v1183 = vunpack.c.l.b16 %v1027
  %v1184 = vunpack.c.h.b16 %v1027
  %v1185 = vunpack.c.l.b16 %v1028
  %v1186 = vunpack.c.h.b16 %v1028
  %v1187 = vunpack.c.l.b16 %v1029
  %v1188 = vunpack.c.h.b16 %v1029
  %v1189 = vunpack.c.l.b16 %v1030
  %v1190 = vunpack.c.h.b16 %v1030
  %v1191 = vunpack.c.l.b16 %v1031
  %v1192 = vunpack.c.h.b16 %v1031
  %v1193 = vunpack.c.l.b16 %v1032
  %v1194 = vunpack.c.h.b16 %v1032
  %v1195 = vunpack.c.l.b16 %v1033
  %v1196 = vunpack.c.h.b16 %v1033
  %v1197 = vunpack.c.l.b16 %v1034
  %v1198 = vunpack.c.h.b16 %v1034
  %v1199 = vunpack.c.l.b16 %v1035
  %v1200 = vunpack.c.h.b16 %v1035
  %v1201 = vunpack.c.l.b16 %v1036
  %v1202 = vunpack.c.h.b16 %v1036
  %v1203 = vunpack.c.l.b16 %v1037
  %v1204 = vunpack.c.h.b16 %v1037
  %v1205 = vunpack.c.l.b16 %v1038
  %v1206 = vunpack.c.h.b16 %v1038
  %v1207 = vunpack.c.l.b16 %v1039
  %v1208 = vunpack.c.h.b16 %v1039
  %v1209 = vunpack.c.l.b16 %v1040
  %v1210 = vunpack.c.h.b16 %v1040
  %v1211 = vunpack.c.l.b16 %v1041
  %v1212 = vunpack.c.h.b16 %v1041
  %v1213 = vunpack.c.l.b16 %v1042
  %v1214 = vunpack.c.h.b16 %v1042
  %v1215 = vunpack.c.l.b16 %v1043
  %v1216 = vunpack.c.h.b16 %v1043
  %v1217 = vunpack.c.l.b16 %v1044
  %v1218 = vunpack.c.h.b16 %v1044
  %v1219 = vunpack.c.l.b16 %v1045
  %v1220 = vunpack.c.h.b16 %v1045
  %v1221 = vunpack.c.l.b16 %v1046
  %v1222 = vunpack.c.h.b16 %v1046
  %v1223 = vunpack.c.l.b16 %v1047
  %v1224 = vunpack.c.h.b16 %v1047
  %v1225 = vunpack.c.l.b16 %v1048
  %v1226 = vunpack.c.h.b16 %v1048
  %v1227 = vunpack.c.l.b16 %v1049
  %v1228 = vunpack.c.h.b16 %v1049
  %v1229 = vunpack.c.l.b16 %v1050
  %v1230 = vunpack.c.h.b16 %v1050
  %v1231 = vunpack.c.l.b16 %v1051
  %v1232 = vunpack.c.h.b16 %v1051
  %v1233 = vunpack.c.l.b16 %v1052
  %v1234 = vunpack.c.h.b16 %v1052
  %v1235 = vunpack.c.l.b16 %v1053
  %v1236 = vunpack.c.h.b16 %v1053
  %v1237 = vunpack.c.l.b16 %v1054
  %v1238 = vunpack.c.h.b16 %v1054
  %v1239 = vunpack.c.l.b16 %v1055
  %v1240 = vunpack.c.h.b16 %v1055
  %v1241 = vunpack.c.l.b16 %v1056
  %v1242 = vunpack.c.h.b16 %v1056
  %v1243 = vunpack.c.l.b16 %v1057
  %v1244 = vunpack.c.h.b16 %v1057
  %v1245 = vunpack.c.l.b16 %v1058
  %v1246 = vunpack.c.h.b16 %v1058
  %v1247 = vunpack.c.l.b16 %v1059
  %v1248 = vunpack.c.h.b16 %v1059
  %v1249 = vunpack.c.l.b16 %v1060
  %v1250 = vunpack.c.h.b16 %v1060
  %v1251 = vunpack.c.l.b16 %v1061
  %v1252 = vunpack.c.h.b16 %v1061
  %v1253 = vunpack.c.l.b16 %v1062
  %v1254 = vunpack.c.h.b16 %v1062
  %v1255 = vunpack.c.l.b16 %v1063
  %v1256 = vunpack.c.h.b16 %v1063
  %v1257 = vunpack.c.l.b16 %v1064
  %v1258 = vunpack.c.h.b16 %v1064
  %v1259 = vunpack.c.l.b16 %v1065
  %v1260 = vunpack.c.h.b16 %v1065
  %v1261 = vunpack.c.l.b16 %v1066
  %v1262 = vunpack.c.h.b16 %v1066
  %v1263 = vunpack.c.l.b16 %v1067
  %v1264 = vunpack.c.h.b16 %v1067
  %v1265 = vunpack.c.l.b16 %v1068
  %v1266 = vunpack.c.h.b16 %v1068
  %v1267 = vunpack.c.l.b16 %v1069
  %v1268 = vunpack.c.h.b16 %v1069
  %v1269 = vunpack.c.l.b16 %v1070
  %v1270 = vunpack.c.h.b16 %v1070
  %v1271 = vunpack.c.l.b16 %v1071
  %v1272 = vunpack.c.h.b16 %v1071
  %v1273 = vunpack.c.l.b16 %v1072
  %v1274 = vunpack.c.h.b16 %v1072
  %v1275 = vunpack.c.l.b16 %v1073
  %v1276 = vunpack.c.h.b16 %v1073
  %v1277 = vunpack.c.l.b16 %v1074
  %v1278 = vunpack.c.h.b16 %v1074
  %v1279 = vpack.c.b16 %v1153, %v1151
  %v1280 = vpack.c.b16 %v1154, %v1152
  %v1281 = vpack.c.b16 %v1157, %v1155
  %v1282 = vpack.c.b16 %v1158, %v1156
  %v1283 = vpack.c.b16 %v1161, %v1159
  %v1284 = vpack.c.b16 %v1162, %v1160
  %v1285 = vpack.c.b16 %v1165, %v1163
  %v1286 = vpack.c.b16 %v1166, %v1164
  %v1287 = vpack.c.b16 %v1169, %v1167
  %v1288 = vpack.c.b16 %v1170, %v1168
  %v1289 = vpack.c.b16 %v1173, %v1171
  %v1290 = vpack.c.b16 %v1174, %v1172
  %v1291 = vpack.c.b16 %v1177, %v1175
  %v1292 = vpack.c.b16 %v1178, %v1176
  %v1293 = vpack.c.b16 %v1181, %v1179
  %v1294 = vpack.c.b16 %v1182, %v1180
  %v1295 = vpack.c.b16 %v1185, %v1183
  %v1296 = vpack.c.b16 %v1186, %v1184
  %v1297 = vpack.c.b16 %v1189, %v1187
  %v1298 = vpack.c.b16 %v1190, %v1188
  %v1299 = vpack.c.b16 %v1193, %v1191
  %v1300 = vpack.c.b16 %v1194, %v1192
  %v1301 = vpack.c.b16 %v1197, %v1195
  %v1302 = vpack.c.b16 %v1198, %v1196
  %v1303 = vpack.c.b16 %v1201, %v1199
  %v1304 = vpack.c.b16 %v1202, %v1200
  %v1305 = vpack.c.b16 %v1205, %v1203
  %v1306 = vpack.c.b16 %v1206, %v1204
  %v1307 = vpack.c.b16 %v1209, %v1207
  %v1308 = vpack.c.b16 %v1210, %v1208
  %v1309 = vpack.c.b16 %v1213, %v1211
  %v1310 = vpack.c.b16 %v1214, %v1212
  %v1311 = vpack.c.b16 %v1217, %v1215
  %v1312 = vpack.c.b16 %v1218, %v1216
  %v1313 = vpack.c.b16 %v1221, %v1219
  %v1314 = vpack.c.b16 %v1222, %v1220
  %v1315 = vpack.c.b16 %v1225, %v1223
  %v1316 = vpack.c.b16 %v1226, %v1224
  %v1317 = vpack.c.b16 %v1229, %v1227
  %v1318 = vpack.c.b16 %v1230, %v1228
  %v1319 = vpack.c.b16 %v1233, %v1231
  %v1320 = vpack.c.b16 %v1234, %v1232
  %v1321 = vpack.c.b16 %v1237, %v1235
  %v1322 = vpack.c.b16 %v1238, %v1236
  %v1323 = vpack.c.b16 %v1241, %v1239
  %v1324 = vpack.c.b16 %v1242, %v1240
  %v1325 = vpack.c.b16 %v1245, %v1243
  %v1326 = vpack.c.b16 %v1246, %v1244
  %v1327 = vpack.c.b16 %v1249, %v1247
  %v1328 = vpack.c.b16 %v1250, %v1248
  %v1329 = vpack.c.b16 %v1253, %v1251
  %v1330 = vpack.c.b16 %v1254, %v1252
  %v1331 = vpack.c.b16 %v1257, %v1255
  %v1332 = vpack.c.b16 %v1258, %v1256
  %v1333 = vpack.c.b16 %v1261, %v1259
  %v1334 = vpack.c.b16 %v1262, %v1260
  %v1335 = vpack.c.b16 %v1265, %v1263
  %v1336 = vpack.c.b16 %v1266, %v1264
  %v1337 = vpack.c.b16 %v1269, %v1267
  %v1338 = vpack.c.b16 %v1270, %v1268
  %v1339 = vpack.c.b16 %v1273, %v1271
  %v1340 = vpack.c.b16 %v1274, %v1272
  %v1341 = vpack.c.b16 %v1277, %v1275
  %v1342 = vpack.c.b16 %v1278, %v1276
  %1407 = vmatprep.subr.bf16.mxu0 %v1280
  %1408 = vmatpush1.bf16.msra.mxu0 %v1279
  %1409 = vmatprep.subr.bf16.mxu0 %v1282
  %1410 = vmatpush1.bf16.msra.mxu0 %v1281
  %1411 = vmatprep.subr.bf16.mxu0 %v1284
  %1412 = vmatpush1.bf16.msra.mxu0 %v1283
  %1413 = vmatprep.subr.bf16.mxu0 %v1286
  %1414 = vmatpush1.bf16.msra.mxu0 %v1285
  %1415 = vmatprep.subr.bf16.mxu0 %v1288
  %1416 = vmatpush1.bf16.msra.mxu0 %v1287
  %1417 = vmatprep.subr.bf16.mxu0 %v1290
  %1418 = vmatpush1.bf16.msra.mxu0 %v1289
  %1419 = vmatprep.subr.bf16.mxu0 %v1292
  %1420 = vmatpush1.bf16.msra.mxu0 %v1291
  %1421 = vmatprep.subr.bf16.mxu0 %v1294
  %1422 = vmatpush1.bf16.msra.mxu0 %v1293
  %1423 = vmatprep.subr.bf16.mxu0 %v1296
  %1424 = vmatpush1.bf16.msra.mxu0 %v1295
  %1425 = vmatprep.subr.bf16.mxu0 %v1298
  %1426 = vmatpush1.bf16.msra.mxu0 %v1297
  %1427 = vmatprep.subr.bf16.mxu0 %v1300
  %1428 = vmatpush1.bf16.msra.mxu0 %v1299
  %1429 = vmatprep.subr.bf16.mxu0 %v1302
  %1430 = vmatpush1.bf16.msra.mxu0 %v1301
  %1431 = vmatprep.subr.bf16.mxu0 %v1304
  %1432 = vmatpush1.bf16.msra.mxu0 %v1303
  %1433 = vmatprep.subr.bf16.mxu0 %v1306
  %1434 = vmatpush1.bf16.msra.mxu0 %v1305
  %1435 = vmatprep.subr.bf16.mxu0 %v1308
  %1436 = vmatpush1.bf16.msra.mxu0 %v1307
  %1437 = vmatprep.subr.bf16.mxu0 %v1310
  %1438 = vmatpush1.bf16.msra.mxu0 %v1309
  %1439 = vmatprep.mubr.bf16.mxu0 %v1008
  %1440 = vmatmul.mubr.bf16.gmra.mrb[0].mxu0 %v1007
  %v1441 = vpop.f32.mrb[0].mxu0
  %v1442 = vadd.f32 %v1080, %v1441
  %v1443 = vpop.f32.mrb[0].mxu0
  %v1444 = vadd.f32 %v1084, %v1443
  %v1445 = vpop.f32.mrb[0].mxu0
  %v1446 = vpop.f32.mrb[0].mxu0
  %1447 = vdwg.mxu0
  %1448 = vmatprep.subr.bf16.mxu0 %v1312
  %1449 = vmatpush1.bf16.msra.mxu0 %v1311
  %1450 = vmatprep.subr.bf16.mxu0 %v1314
  %1451 = vmatpush1.bf16.msra.mxu0 %v1313
  %1452 = vmatprep.subr.bf16.mxu0 %v1316
  %1453 = vmatpush1.bf16.msra.mxu0 %v1315
  %1454 = vmatprep.subr.bf16.mxu0 %v1318
  %1455 = vmatpush1.bf16.msra.mxu0 %v1317
  %1456 = vmatprep.subr.bf16.mxu0 %v1320
  %1457 = vmatpush1.bf16.msra.mxu0 %v1319
  %1458 = vmatprep.subr.bf16.mxu0 %v1322
  %1459 = vmatpush1.bf16.msra.mxu0 %v1321
  %1460 = vmatprep.subr.bf16.mxu0 %v1324
  %1461 = vmatpush1.bf16.msra.mxu0 %v1323
  %1462 = vmatprep.subr.bf16.mxu0 %v1326
  %1463 = vmatpush1.bf16.msra.mxu0 %v1325
  %1464 = vmatprep.subr.bf16.mxu0 %v1328
  %1465 = vmatpush1.bf16.msra.mxu0 %v1327
  %1466 = vmatprep.subr.bf16.mxu0 %v1330
  %1467 = vmatpush1.bf16.msra.mxu0 %v1329
  %1468 = vmatprep.subr.bf16.mxu0 %v1332
  %1469 = vmatpush1.bf16.msra.mxu0 %v1331
  %1470 = vmatprep.subr.bf16.mxu0 %v1334
  %1471 = vmatpush1.bf16.msra.mxu0 %v1333
  %1472 = vmatprep.subr.bf16.mxu0 %v1336
  %1473 = vmatpush1.bf16.msra.mxu0 %v1335
  %1474 = vmatprep.subr.bf16.mxu0 %v1338
  %1475 = vmatpush1.bf16.msra.mxu0 %v1337
  %1476 = vmatprep.subr.bf16.mxu0 %v1340
  %1477 = vmatpush1.bf16.msra.mxu0 %v1339
  %1478 = vmatprep.subr.bf16.mxu0 %v1342
  %1479 = vmatpush1.bf16.msra.mxu0 %v1341
  %1480 = vmatprep.mubr.bf16.mxu0 %v1010
  %1481 = vmatmul.mubr.bf16.gmra.mrb[0].mxu0 %v1009
  %v1482 = vpop.f32.mrb[0].mxu0
  %v1483 = vadd.f32 %v1442, %v1482
  %v1484 = vpop.f32.mrb[0].mxu0
  %v1485 = vadd.f32 %v1444, %v1484
  %v1486 = vpop.f32.mrb[0].mxu0
  %v1487 = vpop.f32.mrb[0].mxu0
  %1488 = vdwg.mxu0
  %v1489 = vmax.f32 %v1483, 0.0
  %v1490 = vmax.f32 %v1485, 0.0
  %v1491 = vpack.c.bf16 %v1489, %v1489
  %v1492 = vpack.c.bf16 %v1490, %v1490
  %v1493 = vld [vmem:[%s6] sm:$0xff]
  %v1494 = vld [vmem:[%s6 + $0x8] sm:$0xff]
  %v1495 = vld [vmem:[%s6 + $0x10] sm:$0xff]
  %v1496 = vld [vmem:[%s6 + $0x18] sm:$0xff]
  %v1497 = vld [vmem:[%s6 + $0x20] sm:$0xff]
  %v1498 = vld [vmem:[%s6 + $0x28] sm:$0xff]
  %v1499 = vld [vmem:[%s6 + $0x30] sm:$0xff]
  %v1500 = vld [vmem:[%s6 + $0x38] sm:$0xff]
  %v1501 = vld [vmem:[%s6 + $0x40] sm:$0xff]
  %v1502 = vld [vmem:[%s6 + $0x48] sm:$0xff]
  %v1503 = vld [vmem:[%s6 + $0x50] sm:$0xff]
  %v1504 = vld [vmem:[%s6 + $0x58] sm:$0xff]
  %v1505 = vld [vmem:[%s6 + $0x60] sm:$0xff]
  %v1506 = vld [vmem:[%s6 + $0x68] sm:$0xff]
  %v1507 = vld [vmem:[%s6 + $0x70] sm:$0xff]
  %v1508 = vld [vmem:[%s6 + $0x78] sm:$0xff]
  %v1509 = vld [vmem:[%s6 + $0x80] sm:$0xff]
  %v1510 = vld [vmem:[%s6 + $0x88] sm:$0xff]
  %v1511 = vld [vmem:[%s6 + $0x90] sm:$0xff]
  %v1512 = vld [vmem:[%s6 + $0x98] sm:$0xff]
  %v1513 = vld [vmem:[%s6 + $0xa0] sm:$0xff]
  %v1514 = vld [vmem:[%s6 + $0xa8] sm:$0xff]
  %v1515 = vld [vmem:[%s6 + $0xb0] sm:$0xff]
  %v1516 = vld [vmem:[%s6 + $0xb8] sm:$0xff]
  %v1517 = vld [vmem:[%s6 + $0xc0] sm:$0xff]
  %v1518 = vld [vmem:[%s6 + $0xc8] sm:$0xff]
  %v1519 = vld [vmem:[%s6 + $0xd0] sm:$0xff]
  %v1520 = vld [vmem:[%s6 + $0xd8] sm:$0xff]
  %v1521 = vld [vmem:[%s6 + $0xe0] sm:$0xff]
  %v1522 = vld [vmem:[%s6 + $0xe8] sm:$0xff]
  %v1523 = vld [vmem:[%s6 + $0xf0] sm:$0xff]
  %v1524 = vld [vmem:[%s6 + $0xf8] sm:$0xff]
  %v1525 = vld [vmem:[%s7] sm:$0x3]
  %v1527 = vlaneseq
  %v1528 = vshrl.u32 %v1527, 7
  %v1529 = vsub.s32 0, %v1528
  %v1530 = vrot.slane %v1525, %v1529
  %v1531 = vlaneseq
  %v1532 = vshrl.u32 %v1531, 7
  %v1533 = vsub.s32 1, %v1532
  %v1534 = vrot.slane %v1525, %v1533
  %v1569 = vunpack.c.l.b16 %v1493
  %v1570 = vunpack.c.h.b16 %v1493
  %v1571 = vunpack.c.l.b16 %v1494
  %v1572 = vunpack.c.h.b16 %v1494
  %v1573 = vunpack.c.l.b16 %v1495
  %v1574 = vunpack.c.h.b16 %v1495
  %v1575 = vunpack.c.l.b16 %v1496
  %v1576 = vunpack.c.h.b16 %v1496
  %v1577 = vunpack.c.l.b16 %v1497
  %v1578 = vunpack.c.h.b16 %v1497
  %v1579 = vunpack.c.l.b16 %v1498
  %v1580 = vunpack.c.h.b16 %v1498
  %v1581 = vunpack.c.l.b16 %v1499
  %v1582 = vunpack.c.h.b16 %v1499
  %v1583 = vunpack.c.l.b16 %v1500
  %v1584 = vunpack.c.h.b16 %v1500
  %v1585 = vunpack.c.l.b16 %v1501
  %v1586 = vunpack.c.h.b16 %v1501
  %v1587 = vunpack.c.l.b16 %v1502
  %v1588 = vunpack.c.h.b16 %v1502
  %v1589 = vunpack.c.l.b16 %v1503
  %v1590 = vunpack.c.h.b16 %v1503
  %v1591 = vunpack.c.l.b16 %v1504
  %v1592 = vunpack.c.h.b16 %v1504
  %v1593 = vunpack.c.l.b16 %v1505
  %v1594 = vunpack.c.h.b16 %v1505
  %v1595 = vunpack.c.l.b16 %v1506
  %v1596 = vunpack.c.h.b16 %v1506
  %v1597 = vunpack.c.l.b16 %v1507
  %v1598 = vunpack.c.h.b16 %v1507
  %v1599 = vunpack.c.l.b16 %v1508
  %v1600 = vunpack.c.h.b16 %v1508
  %v1601 = vunpack.c.l.b16 %v1509
  %v1602 = vunpack.c.h.b16 %v1509
  %v1603 = vunpack.c.l.b16 %v1510
  %v1604 = vunpack.c.h.b16 %v1510
  %v1605 = vunpack.c.l.b16 %v1511
  %v1606 = vunpack.c.h.b16 %v1511
  %v1607 = vunpack.c.l.b16 %v1512
  %v1608 = vunpack.c.h.b16 %v1512
  %v1609 = vunpack.c.l.b16 %v1513
  %v1610 = vunpack.c.h.b16 %v1513
  %v1611 = vunpack.c.l.b16 %v1514
  %v1612 = vunpack.c.h.b16 %v1514
  %v1613 = vunpack.c.l.b16 %v1515
  %v1614 = vunpack.c.h.b16 %v1515
  %v1615 = vunpack.c.l.b16 %v1516
  %v1616 = vunpack.c.h.b16 %v1516
  %v1617 = vunpack.c.l.b16 %v1517
  %v1618 = vunpack.c.h.b16 %v1517
  %v1619 = vunpack.c.l.b16 %v1518
  %v1620 = vunpack.c.h.b16 %v1518
  %v1621 = vunpack.c.l.b16 %v1519
  %v1622 = vunpack.c.h.b16 %v1519
  %v1623 = vunpack.c.l.b16 %v1520
  %v1624 = vunpack.c.h.b16 %v1520
  %v1625 = vunpack.c.l.b16 %v1521
  %v1626 = vunpack.c.h.b16 %v1521
  %v1627 = vunpack.c.l.b16 %v1522
  %v1628 = vunpack.c.h.b16 %v1522
  %v1629 = vunpack.c.l.b16 %v1523
  %v1630 = vunpack.c.h.b16 %v1523
  %v1631 = vunpack.c.l.b16 %v1524
  %v1632 = vunpack.c.h.b16 %v1524
  %v1633 = vpack.c.b16 %v1571, %v1569
  %v1634 = vpack.c.b16 %v1572, %v1570
  %v1635 = vpack.c.b16 %v1575, %v1573
  %v1636 = vpack.c.b16 %v1576, %v1574
  %v1637 = vpack.c.b16 %v1579, %v1577
  %v1638 = vpack.c.b16 %v1580, %v1578
  %v1639 = vpack.c.b16 %v1583, %v1581
  %v1640 = vpack.c.b16 %v1584, %v1582
  %v1641 = vpack.c.b16 %v1587, %v1585
  %v1642 = vpack.c.b16 %v1588, %v1586
  %v1643 = vpack.c.b16 %v1591, %v1589
  %v1644 = vpack.c.b16 %v1592, %v1590
  %v1645 = vpack.c.b16 %v1595, %v1593
  %v1646 = vpack.c.b16 %v1596, %v1594
  %v1647 = vpack.c.b16 %v1599, %v1597
  %v1648 = vpack.c.b16 %v1600, %v1598
  %v1649 = vpack.c.b16 %v1603, %v1601
  %v1650 = vpack.c.b16 %v1604, %v1602
  %v1651 = vpack.c.b16 %v1607, %v1605
  %v1652 = vpack.c.b16 %v1608, %v1606
  %v1653 = vpack.c.b16 %v1611, %v1609
  %v1654 = vpack.c.b16 %v1612, %v1610
  %v1655 = vpack.c.b16 %v1615, %v1613
  %v1656 = vpack.c.b16 %v1616, %v1614
  %v1657 = vpack.c.b16 %v1619, %v1617
  %v1658 = vpack.c.b16 %v1620, %v1618
  %v1659 = vpack.c.b16 %v1623, %v1621
  %v1660 = vpack.c.b16 %v1624, %v1622
  %v1661 = vpack.c.b16 %v1627, %v1625
  %v1662 = vpack.c.b16 %v1628, %v1626
  %v1663 = vpack.c.b16 %v1631, %v1629
  %v1664 = vpack.c.b16 %v1632, %v1630
  %1697 = vmatprep.subr.bf16.mxu0 %v1634
  %1698 = vmatpush1.bf16.msra.mxu0 %v1633
  %1699 = vmatprep.subr.bf16.mxu0 %v1636
  %1700 = vmatpush1.bf16.msra.mxu0 %v1635
  %1701 = vmatprep.subr.bf16.mxu0 %v1638
  %1702 = vmatpush1.bf16.msra.mxu0 %v1637
  %1703 = vmatprep.subr.bf16.mxu0 %v1640
  %1704 = vmatpush1.bf16.msra.mxu0 %v1639
  %1705 = vmatprep.subr.bf16.mxu0 %v1642
  %1706 = vmatpush1.bf16.msra.mxu0 %v1641
  %1707 = vmatprep.subr.bf16.mxu0 %v1644
  %1708 = vmatpush1.bf16.msra.mxu0 %v1643
  %1709 = vmatprep.subr.bf16.mxu0 %v1646
  %1710 = vmatpush1.bf16.msra.mxu0 %v1645
  %1711 = vmatprep.subr.bf16.mxu0 %v1648
  %1712 = vmatpush1.bf16.msra.mxu0 %v1647
  %1713 = vmatprep.subr.bf16.mxu0 %v1650
  %1714 = vmatpush1.bf16.msra.mxu0 %v1649
  %1715 = vmatprep.subr.bf16.mxu0 %v1652
  %1716 = vmatpush1.bf16.msra.mxu0 %v1651
  %1717 = vmatprep.subr.bf16.mxu0 %v1654
  %1718 = vmatpush1.bf16.msra.mxu0 %v1653
  %1719 = vmatprep.subr.bf16.mxu0 %v1656
  %1720 = vmatpush1.bf16.msra.mxu0 %v1655
  %1721 = vmatprep.subr.bf16.mxu0 %v1658
  %1722 = vmatpush1.bf16.msra.mxu0 %v1657
  %1723 = vmatprep.subr.bf16.mxu0 %v1660
  %1724 = vmatpush1.bf16.msra.mxu0 %v1659
  %1725 = vmatprep.subr.bf16.mxu0 %v1662
  %1726 = vmatpush1.bf16.msra.mxu0 %v1661
  %1727 = vmatprep.subr.bf16.mxu0 %v1664
  %1728 = vmatpush1.bf16.msra.mxu0 %v1663
  %1729 = vmatprep.mubr.bf16.mxu0 %v1492
  %1730 = vmatmul.mubr.bf16.gmra.mrb[0].mxu0 %v1491
  %v1731 = vpop.f32.mrb[0].mxu0
  %v1732 = vadd.f32 %v1530, %v1731
  %v1733 = vpop.f32.mrb[0].mxu0
  %v1734 = vadd.f32 %v1534, %v1733
  %v1735 = vpop.f32.mrb[0].mxu0
  %v1736 = vpop.f32.mrb[0].mxu0
  %1737 = vdwg.mxu0
  %v1738 = vmax.f32 %v1732, 0.0
  %v1739 = vmax.f32 %v1734, 0.0
  %v1740 = vpack.c.bf16 %v1738, %v1738
  %v1741 = vpack.c.bf16 %v1739, %v1739
  %v1742 = vld [vmem:[%s8] sm:$0xf]
  %v1743 = vld [vmem:[%s8 + $0x4] sm:$0xf]
  %v1744 = vld [vmem:[%s8 + $0x8] sm:$0xf]
  %v1745 = vld [vmem:[%s8 + $0xc] sm:$0xf]
  %v1746 = vld [vmem:[%s8 + $0x10] sm:$0xf]
  %v1747 = vld [vmem:[%s8 + $0x14] sm:$0xf]
  %v1748 = vld [vmem:[%s8 + $0x18] sm:$0xf]
  %v1749 = vld [vmem:[%s8 + $0x1c] sm:$0xf]
  %v1750 = vld [vmem:[%s8 + $0x20] sm:$0xf]
  %v1751 = vld [vmem:[%s8 + $0x24] sm:$0xf]
  %v1752 = vld [vmem:[%s8 + $0x28] sm:$0xf]
  %v1753 = vld [vmem:[%s8 + $0x2c] sm:$0xf]
  %v1754 = vld [vmem:[%s8 + $0x30] sm:$0xf]
  %v1755 = vld [vmem:[%s8 + $0x34] sm:$0xf]
  %v1756 = vld [vmem:[%s8 + $0x38] sm:$0xf]
  %v1757 = vld [vmem:[%s8 + $0x3c] sm:$0xf]
  %v1758 = vld [vmem:[%s8 + $0x40] sm:$0xf]
  %v1759 = vld [vmem:[%s8 + $0x44] sm:$0xf]
  %v1760 = vld [vmem:[%s8 + $0x48] sm:$0xf]
  %v1761 = vld [vmem:[%s8 + $0x4c] sm:$0xf]
  %v1762 = vld [vmem:[%s8 + $0x50] sm:$0xf]
  %v1763 = vld [vmem:[%s8 + $0x54] sm:$0xf]
  %v1764 = vld [vmem:[%s8 + $0x58] sm:$0xf]
  %v1765 = vld [vmem:[%s8 + $0x5c] sm:$0xf]
  %v1766 = vld [vmem:[%s8 + $0x60] sm:$0xf]
  %v1767 = vld [vmem:[%s8 + $0x64] sm:$0xf]
  %v1768 = vld [vmem:[%s8 + $0x68] sm:$0xf]
  %v1769 = vld [vmem:[%s8 + $0x6c] sm:$0xf]
  %v1770 = vld [vmem:[%s8 + $0x70] sm:$0xf]
  %v1771 = vld [vmem:[%s8 + $0x74] sm:$0xf]
  %v1772 = vld [vmem:[%s8 + $0x78] sm:$0xf]
  %v1773 = vld [vmem:[%s8 + $0x7c] sm:$0xf]
  %v1774 = vld [vmem:[%s9] sm:$0x1]
  %v1776 = vlaneseq
  %v1777 = vshrl.u32 %v1776, 7
  %v1778 = vsub.s32 0, %v1777
  %v1779 = vrot.slane %v1774, %v1778
  %v1813 = vunpack.c.l.b16 %v1742
  %v1814 = vunpack.c.l.b16 %v1743
  %v1815 = vunpack.c.l.b16 %v1744
  %v1816 = vunpack.c.l.b16 %v1745
  %v1817 = vunpack.c.l.b16 %v1746
  %v1818 = vunpack.c.l.b16 %v1747
  %v1819 = vunpack.c.l.b16 %v1748
  %v1820 = vunpack.c.l.b16 %v1749
  %v1821 = vunpack.c.l.b16 %v1750
  %v1822 = vunpack.c.l.b16 %v1751
  %v1823 = vunpack.c.l.b16 %v1752
  %v1824 = vunpack.c.l.b16 %v1753
  %v1825 = vunpack.c.l.b16 %v1754
  %v1826 = vunpack.c.l.b16 %v1755
  %v1827 = vunpack.c.l.b16 %v1756
  %v1828 = vunpack.c.l.b16 %v1757
  %v1829 = vunpack.c.l.b16 %v1758
  %v1830 = vunpack.c.l.b16 %v1759
  %v1831 = vunpack.c.l.b16 %v1760
  %v1832 = vunpack.c.l.b16 %v1761
  %v1833 = vunpack.c.l.b16 %v1762
  %v1834 = vunpack.c.l.b16 %v1763
  %v1835 = vunpack.c.l.b16 %v1764
  %v1836 = vunpack.c.l.b16 %v1765
  %v1837 = vunpack.c.l.b16 %v1766
  %v1838 = vunpack.c.l.b16 %v1767
  %v1839 = vunpack.c.l.b16 %v1768
  %v1840 = vunpack.c.l.b16 %v1769
  %v1841 = vunpack.c.l.b16 %v1770
  %v1842 = vunpack.c.l.b16 %v1771
  %v1843 = vunpack.c.l.b16 %v1772
  %v1844 = vunpack.c.l.b16 %v1773
  %v1845 = vpack.c.b16 %v1814, %v1813
  %v1846 = vpack.c.b16 %v1816, %v1815
  %v1847 = vpack.c.b16 %v1818, %v1817
  %v1848 = vpack.c.b16 %v1820, %v1819
  %v1849 = vpack.c.b16 %v1822, %v1821
  %v1850 = vpack.c.b16 %v1824, %v1823
  %v1851 = vpack.c.b16 %v1826, %v1825
  %v1852 = vpack.c.b16 %v1828, %v1827
  %v1853 = vpack.c.b16 %v1830, %v1829
  %v1854 = vpack.c.b16 %v1832, %v1831
  %v1855 = vpack.c.b16 %v1834, %v1833
  %v1856 = vpack.c.b16 %v1836, %v1835
  %v1857 = vpack.c.b16 %v1838, %v1837
  %v1858 = vpack.c.b16 %v1840, %v1839
  %v1859 = vpack.c.b16 %v1842, %v1841
  %v1860 = vpack.c.b16 %v1844, %v1843
  %1877 = vmatprep.subr.bf16.mxu0 0
  %1878 = vmatpush1.bf16.msra.mxu0 %v1845
  %1879 = vmatprep.subr.bf16.mxu0 0
  %1880 = vmatpush1.bf16.msra.mxu0 %v1846
  %1881 = vmatprep.subr.bf16.mxu0 0
  %1882 = vmatpush1.bf16.msra.mxu0 %v1847
  %1883 = vmatprep.subr.bf16.mxu0 0
  %1884 = vmatpush1.bf16.msra.mxu0 %v1848
  %1885 = vmatprep.subr.bf16.mxu0 0
  %1886 = vmatpush1.bf16.msra.mxu0 %v1849
  %1887 = vmatprep.subr.bf16.mxu0 0
  %1888 = vmatpush1.bf16.msra.mxu0 %v1850
  %1889 = vmatprep.subr.bf16.mxu0 0
  %1890 = vmatpush1.bf16.msra.mxu0 %v1851
  %1891 = vmatprep.subr.bf16.mxu0 0
  %1892 = vmatpush1.bf16.msra.mxu0 %v1852
  %1893 = vmatprep.subr.bf16.mxu0 0
  %1894 = vmatpush1.bf16.msra.mxu0 %v1853
  %1895 = vmatprep.subr.bf16.mxu0 0
  %1896 = vmatpush1.bf16.msra.mxu0 %v1854
  %1897 = vmatprep.subr.bf16.mxu0 0
  %1898 = vmatpush1.bf16.msra.mxu0 %v1855
  %1899 = vmatprep.subr.bf16.mxu0 0
  %1900 = vmatpush1.bf16.msra.mxu0 %v1856
  %1901 = vmatprep.subr.bf16.mxu0 0
  %1902 = vmatpush1.bf16.msra.mxu0 %v1857
  %1903 = vmatprep.subr.bf16.mxu0 0
  %1904 = vmatpush1.bf16.msra.mxu0 %v1858
  %1905 = vmatprep.subr.bf16.mxu0 0
  %1906 = vmatpush1.bf16.msra.mxu0 %v1859
  %1907 = vmatprep.subr.bf16.mxu0 0
  %1908 = vmatpush1.bf16.msra.mxu0 %v1860
  %1909 = vmatprep.mubr.bf16.mxu0 %v1741
  %1910 = vmatmul.mubr.bf16.gmra.mrb[0].mxu0 %v1740
  %v1911 = vpop.f32.mrb[0].mxu0
  %v1912 = vadd.f32 %v1779, %v1911
  %v1913 = vpop.f32.mrb[0].mxu0
  %v1914 = vpop.f32.mrb[0].mxu0
  %v1915 = vpop.f32.mrb[0].mxu0
  %1916 = vdwg.mxu0
  %vm1917 = vcmask 15360
  %v1918 = vsel %vm1917, %v1912, -inf
  %1919 = vmax.xlane.f32.xlu0 %v1918
  %v1920 = vpop.xlane.xlu0 %1919
  %v1921 = vsub.f32 %v1912, %v1920
  %v1922 = vmul.f32 %v1921, 1.442695
  %v1923 = vpow.pop %v1922
  %v1924 = vsel %vm1917, %v1923, 0.0
  %1925 = vadd.xlane.f32.xlu0 %v1924
  %v1926 = vpop.xlane.xlu0 %1925
  %v1927 = vlog2.pop %v1926
  %v1928 = vmul.f32 %v1927, 0.6931472
  %v1929 = vsub.f32 %v1921, %v1928
  %1930 = vst.msk [vmem:[%s10] sm:$0xff] %vm1917, %v1929
  // Predicated region
  $region42: #{baseline_gru_forward.3} parent=0 // pred_check
    _
  $region43: #{baseline_gru_forward.3} parent=0 // pred_check_branch
    %1932 = sbr.rel (0) target = $region45
  $region44: #{baseline_gru_forward.3} parent=0 // pred_region
    _
  $region45: #{baseline_gru_forward.3} parent=0 // pred_fallthru
    _
  // Predicated region
  $region46: #{baseline_gru_forward.3} parent=0 // pred_check
    _
  $region47: #{baseline_gru_forward.3} parent=0 // pred_check_branch
    %1934 = sbr.rel (0) target = $region49
  $region48: #{baseline_gru_forward.3} parent=0 // pred_region
    _
  $region49: #{baseline_gru_forward.3} parent=0 // pred_fallthru
    _

// kernel: baseline_gru_forward.2
$region0: #{baseline_gru_forward.2}
  #allocation0 [shape = 'u32[]', space=smem, size = 0x4, offset = 0x4, fixed_abs, tag = 'smem constant byte address 0x4 - core index']
  #allocation1 [shape = 'u32[144,128]{1,0:T(1,128)}', space=vmem, size = 0x12000, scoped, tag = 'internal scratch']
  #allocation2 [shape = 'f32[8,8,768]{2,1,0:T(8,128)}', space=vmem, size = 0x30000, scoped, tag = 'scratch operand']
  #allocation3 [shape = 'f32[8,256]{1,0:T(8,128)}', space=vmem, size = 0x2000, scoped, tag = 'scratch operand']
  %s0 = inlined_call_operand.vmem [shape: s32[8,1], index: 0, kind: input, shape index: {}]
  %s1 = inlined_call_operand.vmem [shape: bf16[8,8,128], index: 1, kind: input, shape index: {}]
  %s2 = inlined_call_operand.hbm [shape: bf16[2,128,768], index: 2, kind: input, shape index: {}]
  %s3 = inlined_call_operand.vmem [shape: f32[2,1,768], index: 3, kind: input, shape index: {}]
  %s4 = inlined_call_operand.hbm [shape: bf16[2,256,768], index: 4, kind: input, shape index: {}]
  %s5 = inlined_call_operand.vmem [shape: f32[2,1,256], index: 5, kind: input, shape index: {}]
  %s6 = inlined_call_operand.vmem [shape: f32[2,1,256], index: 6, kind: input, shape index: {}]
  %s7 = inlined_call_operand.vmem [shape: f32[2,8,256], index: 7, kind: output, shape index: {}]
  %s8 = sld [smem:[#allocation0]]
  $region77: #{baseline_gru_forward.2} parent=0
    _
  %s10 = ssub.s32 1, %s8
  %s11 = scalar_select 0, %s10, %s8
  $region1: #{baseline_gru_forward.2} parent=0
    #allocation4 [shape = 'u8[393216]{0}', space=vmem, size = 0x60000, scoped, tag = 'input window, operand 2']
    #allocation5 [shape = 's32[2]{0}', space=sflag, size = 0x8, scoped, tag = 'scoped memory for baseline_gru_forward.2']
    #allocation6 [shape = 'u8[786432]{0}', space=vmem, size = 0xc0000, scoped, tag = 'input window, operand 4']
    #allocation7 [shape = 's32[2]{0}', space=sflag, size = 0x8, scoped, tag = 'scoped memory for baseline_gru_forward.2']
    %12 = vsyncpa [#allocation5], 0
    %s13 = scalar_lea.sflag [#allocation5], 1
    %14 = vsyncpa %s13, 0
    %15 = vsyncpa [#allocation7], 0
    %s16 = scalar_lea.sflag [#allocation7], 1
    %17 = vsyncpa %s16, 0
    loop: start=0, step=1, limit=4
    $region2: #{baseline_gru_forward.2} parent=1 // loop_pre_header
      _
    $region3: #{baseline_gru_forward.2} parent=1 // loop_header
      %s19 = sphi 0, %s23
      %p20 = scmp.ge.s32.totalorder %s19, 4
      %s26 = sphi 0, %s45
      %s27 = sphi 0, %s41
      %s28 = sphi 0, %s37
      %s29 = sphi 0, %s26
      %s30 = sphi 0, %s27
      %s31 = sphi 0, %s28
      %s32 = sphi 0, %s29
      %s33 = sphi 0, %s30
      %s34 = sphi 0, %s31
      %s48 = sphi 0, %s50
      %s51 = sphi 0, %s48
      %s52 = sphi 0, %s51
      %s68 = sphi 0, %s52
      %s82 = sphi 0, %s84
      %s85 = sphi 0, %s82
      %s86 = sphi 0, %s85
      %s102 = sphi 0, %s86
      %s108 = sphi 0, %s110
      %s111 = sphi 0, %s108
      %s112 = sphi 0, %s111
      %s128 = sphi 0, %s112
      %s134 = sphi 0, %s136
      %s137 = sphi 0, %s134
      %s138 = sphi 0, %s137
      %s154 = sphi 0, %s138
      %s160 = sphi 0, %s162
      %s163 = sphi 0, %s160
      %s164 = sphi 0, %s163
      %s180 = sphi 0, %s164
      %s186 = sphi 0, %s188
      %s189 = sphi 0, %s186
      %s190 = sphi 0, %s189
      %s206 = sphi 0, %s190
      %s212 = sphi 0, %s214
      %s215 = sphi 0, %s212
      %s216 = sphi 0, %s215
      %s232 = sphi 0, %s216
      %s240 = sphi 0, %s242
      %s243 = sphi 0, %s240
      %s244 = sphi 0, %s243
      %s260 = sphi 0, %s244
    $region4: #{baseline_gru_forward.2} parent=1 // loop_header_branch
      %22 = sbr.rel (%p20) target = $region8
    $region5: #{baseline_gru_forward.2} parent=1 // loop_body
      %s24 = ssub.s32 %s19, 1
      %s25 = ssub.s32 %s19, 2
      %s35 = sadd.s32 1, %s28
      %p36 = scmp.ge.s32.totalorder %s35, 1
      %s37 = scalar_select %p36, 0, %s35
      %s38 = sadd.s32 1, %s27
      %s39 = scalar_select %p36, %s38, %s27
      %p40 = scmp.ge.s32.totalorder %s39, 1
      %s41 = scalar_select %p40, 0, %s39
      %s42 = sadd.s32 1, %s26
      %s43 = scalar_select %p40, %s42, %s26
      %p44 = scmp.ge.s32.totalorder %s43, 2
      %s45 = scalar_select %p44, 0, %s43
      %s46 = ssub.s32 %s27, %s41
      %p47 = scmp.eq.s32.totalorder %s46, 0
      %s49 = sadd.s32 %s48, 1
      %s50 = scalar_select %p47, %s48, %s49
      %p53 = pneg %p47
      %p54 = scmp.eq.s32.totalorder %s19, 1
      %p55 = por %p53, %p54
      %p56 = scmp.ne.s32.totalorder %s48, %s51
      %p57 = scmp.eq.s32.totalorder %s19, 0
      %p58 = por %p56, %p57
      %p59 = scmp.ne.s32.totalorder %s48, %s51
      %p60 = scmp.eq.s32.totalorder %s24, 1
      %p61 = por %p59, %p60
      %p62 = scmp.ne.s32.totalorder %s51, %s52
      %p63 = scmp.eq.s32.totalorder %s24, 0
      %p64 = por %p62, %p63
      %p65 = scmp.ne.s32.totalorder %s51, %s52
      %p66 = scmp.eq.s32.totalorder %s25, 1
      %p67 = por %p65, %p66
      %p69 = scmp.ne.s32.totalorder %s52, %s68
      %p70 = scmp.eq.s32.totalorder %s25, 0
      %p71 = por %p69, %p70
      %s72 = smul.u32 %s26, 2
      %s73 = ssub.s32 1, %s72
      %s74 = smul.u32 %s73, %s28
      %s75 = smul.u32 %s45, 2
      %s76 = ssub.s32 1, %s75
      %s77 = smul.u32 %s76, %s37
      %s78 = ssub.s32 %s74, %s77
      %s79 = ssub.s32 %s27, %s41
      %s80 = sor.u32 %s78, %s79
      %p81 = scmp.eq.s32.totalorder %s80, 0
      %s83 = sadd.s32 %s82, 1
      %s84 = scalar_select %p81, %s82, %s83
      %p87 = pneg %p81
      %p88 = scmp.eq.s32.totalorder %s19, 1
      %p89 = por %p87, %p88
      %p90 = scmp.ne.s32.totalorder %s82, %s85
      %p91 = scmp.eq.s32.totalorder %s19, 0
      %p92 = por %p90, %p91
      %p93 = scmp.ne.s32.totalorder %s82, %s85
      %p94 = scmp.eq.s32.totalorder %s24, 1
      %p95 = por %p93, %p94
      %p96 = scmp.ne.s32.totalorder %s85, %s86
      %p97 = scmp.eq.s32.totalorder %s24, 0
      %p98 = por %p96, %p97
      %p99 = scmp.ne.s32.totalorder %s85, %s86
      %p100 = scmp.eq.s32.totalorder %s25, 1
      %p101 = por %p99, %p100
      %p103 = scmp.ne.s32.totalorder %s86, %s102
      %p104 = scmp.eq.s32.totalorder %s25, 0
      %p105 = por %p103, %p104
      %s106 = ssub.s32 %s26, %s45
      %p107 = scmp.eq.s32.totalorder %s106, 0
      %s109 = sadd.s32 %s108, 1
      %s110 = scalar_select %p107, %s108, %s109
      %p113 = pneg %p107
      %p114 = scmp.eq.s32.totalorder %s19, 1
      %p115 = por %p113, %p114
      %p116 = scmp.ne.s32.totalorder %s108, %s111
      %p117 = scmp.eq.s32.totalorder %s19, 0
      %p118 = por %p116, %p117
      %p119 = scmp.ne.s32.totalorder %s108, %s111
      %p120 = scmp.eq.s32.totalorder %s24, 1
      %p121 = por %p119, %p120
      %p122 = scmp.ne.s32.totalorder %s111, %s112
      %p123 = scmp.eq.s32.totalorder %s24, 0
      %p124 = por %p122, %p123
      %p125 = scmp.ne.s32.totalorder %s111, %s112
      %p126 = scmp.eq.s32.totalorder %s25, 1
      %p127 = por %p125, %p126
      %p129 = scmp.ne.s32.totalorder %s112, %s128
      %p130 = scmp.eq.s32.totalorder %s25, 0
      %p131 = por %p129, %p130
      %s132 = ssub.s32 %s26, %s45
      %p133 = scmp.eq.s32.totalorder %s132, 0
      %s135 = sadd.s32 %s134, 1
      %s136 = scalar_select %p133, %s134, %s135
      %p139 = pneg %p133
      %p140 = scmp.eq.s32.totalorder %s19, 1
      %p141 = por %p139, %p140
      %p142 = scmp.ne.s32.totalorder %s134, %s137
      %p143 = scmp.eq.s32.totalorder %s19, 0
      %p144 = por %p142, %p143
      %p145 = scmp.ne.s32.totalorder %s134, %s137
      %p146 = scmp.eq.s32.totalorder %s24, 1
      %p147 = por %p145, %p146
      %p148 = scmp.ne.s32.totalorder %s137, %s138
      %p149 = scmp.eq.s32.totalorder %s24, 0
      %p150 = por %p148, %p149
      %p151 = scmp.ne.s32.totalorder %s137, %s138
      %p152 = scmp.eq.s32.totalorder %s25, 1
      %p153 = por %p151, %p152
      %p155 = scmp.ne.s32.totalorder %s138, %s154
      %p156 = scmp.eq.s32.totalorder %s25, 0
      %p157 = por %p155, %p156
      %s158 = ssub.s32 %s26, %s45
      %p159 = scmp.eq.s32.totalorder %s158, 0
      %s161 = sadd.s32 %s160, 1
      %s162 = scalar_select %p159, %s160, %s161
      %p165 = pneg %p159
      %p166 = scmp.eq.s32.totalorder %s19, 1
      %p167 = por %p165, %p166
      %p168 = scmp.ne.s32.totalorder %s160, %s163
      %p169 = scmp.eq.s32.totalorder %s19, 0
      %p170 = por %p168, %p169
      %p171 = scmp.ne.s32.totalorder %s160, %s163
      %p172 = scmp.eq.s32.totalorder %s24, 1
      %p173 = por %p171, %p172
      %p174 = scmp.ne.s32.totalorder %s163, %s164
      %p175 = scmp.eq.s32.totalorder %s24, 0
      %p176 = por %p174, %p175
      %p177 = scmp.ne.s32.totalorder %s163, %s164
      %p178 = scmp.eq.s32.totalorder %s25, 1
      %p179 = por %p177, %p178
      %p181 = scmp.ne.s32.totalorder %s164, %s180
      %p182 = scmp.eq.s32.totalorder %s25, 0
      %p183 = por %p181, %p182
      %s184 = ssub.s32 %s26, %s45
      %p185 = scmp.eq.s32.totalorder %s184, 0
      %s187 = sadd.s32 %s186, 1
      %s188 = scalar_select %p185, %s186, %s187
      %p191 = pneg %p185
      %p192 = scmp.eq.s32.totalorder %s19, 1
      %p193 = por %p191, %p192
      %p194 = scmp.ne.s32.totalorder %s186, %s189
      %p195 = scmp.eq.s32.totalorder %s19, 0
      %p196 = por %p194, %p195
      %p197 = scmp.ne.s32.totalorder %s186, %s189
      %p198 = scmp.eq.s32.totalorder %s24, 1
      %p199 = por %p197, %p198
      %p200 = scmp.ne.s32.totalorder %s189, %s190
      %p201 = scmp.eq.s32.totalorder %s24, 0
      %p202 = por %p200, %p201
      %p203 = scmp.ne.s32.totalorder %s189, %s190
      %p204 = scmp.eq.s32.totalorder %s25, 1
      %p205 = por %p203, %p204
      %p207 = scmp.ne.s32.totalorder %s190, %s206
      %p208 = scmp.eq.s32.totalorder %s25, 0
      %p209 = por %p207, %p208
      %s210 = ssub.s32 %s26, %s45
      %p211 = scmp.eq.s32.totalorder %s210, 0
      %s213 = sadd.s32 %s212, 1
      %s214 = scalar_select %p211, %s212, %s213
      %p217 = pneg %p211
      %p218 = scmp.eq.s32.totalorder %s19, 1
      %p219 = por %p217, %p218
      %p220 = scmp.ne.s32.totalorder %s212, %s215
      %p221 = scmp.eq.s32.totalorder %s19, 0
      %p222 = por %p220, %p221
      %p223 = scmp.ne.s32.totalorder %s212, %s215
      %p224 = scmp.eq.s32.totalorder %s24, 1
      %p225 = por %p223, %p224
      %p226 = scmp.ne.s32.totalorder %s215, %s216
      %p227 = scmp.eq.s32.totalorder %s24, 0
      %p228 = por %p226, %p227
      %p229 = scmp.ne.s32.totalorder %s215, %s216
      %p230 = scmp.eq.s32.totalorder %s25, 1
      %p231 = por %p229, %p230
      %p233 = scmp.ne.s32.totalorder %s216, %s232
      %p234 = scmp.eq.s32.totalorder %s25, 0
      %p235 = por %p233, %p234
      %s236 = ssub.s32 %s26, %s45
      %s237 = ssub.s32 %s27, %s41
      %s238 = sor.u32 %s236, %s237
      %p239 = scmp.eq.s32.totalorder %s238, 0
      %s241 = sadd.s32 %s240, 1
      %s242 = scalar_select %p239, %s240, %s241
      %p245 = pneg %p239
      %p246 = scmp.eq.s32.totalorder %s19, 1
      %p247 = por %p245, %p246
      %p248 = scmp.ne.s32.totalorder %s240, %s243
      %p249 = scmp.eq.s32.totalorder %s19, 0
      %p250 = por %p248, %p249
      %p251 = scmp.ne.s32.totalorder %s240, %s243
      %p252 = scmp.eq.s32.totalorder %s24, 1
      %p253 = por %p251, %p252
      %p254 = scmp.ne.s32.totalorder %s243, %s244
      %p255 = scmp.eq.s32.totalorder %s24, 0
      %p256 = por %p254, %p255
      %p257 = scmp.ne.s32.totalorder %s243, %s244
      %p258 = scmp.eq.s32.totalorder %s25, 1
      %p259 = por %p257, %p258
      %p261 = scmp.ne.s32.totalorder %s244, %s260
      %p262 = scmp.eq.s32.totalorder %s25, 0
      %p263 = por %p261, %p262
      %p264 = scmp.le.s32.totalorder 1, %s19
      %p265 = scmp.lt.s32.totalorder %s19, 3
      %p266 = pnand %p264, %p265
      %p267 = pneg %p266
      // Predicated region
      $region9: #{baseline_gru_forward.2} parent=5 // pred_check
        _
      $region10: #{baseline_gru_forward.2} parent=5 // pred_check_branch
        %269 = sbr.rel (%p266) target = $region12
      $region11: #{baseline_gru_forward.2} parent=5 // pred_region
        %s270 = ssub.s32 %s19, 1
        // Predicated region
        $region13: #{baseline_gru_forward.2} parent=11 // pred_check
          %p271 = pneg %p64
        $region14: #{baseline_gru_forward.2} parent=11 // pred_check_branch
          %273 = sbr.rel (%p271) target = $region16
        $region15: #{baseline_gru_forward.2} parent=11 // pred_region
          %p274 = scmp.lt.s32.totalorder %s30, 0
          %s275 = scalar_select %p274, %s30, 0
          %s276 = smul.addr %s275, 8
          %s277 = scalar_lea.vmem %s0, %s276
        $region16: #{baseline_gru_forward.2} parent=11 // pred_fallthru
          _
      $region12: #{baseline_gru_forward.2} parent=5 // pred_fallthru
        _
      %p278 = scmp.lt.s32.totalorder %s19, 2
      // Predicated region
      $region17: #{baseline_gru_forward.2} parent=5 // pred_check
        %p279 = pneg %p278
      $region18: #{baseline_gru_forward.2} parent=5 // pred_check_branch
        %281 = sbr.rel (%p279) target = $region20
      $region19: #{baseline_gru_forward.2} parent=5 // pred_region
        // Predicated region
        $region21: #{baseline_gru_forward.2} parent=19 // pred_check
          %p282 = pneg %p92
        $region22: #{baseline_gru_forward.2} parent=19 // pred_check_branch
          %284 = sbr.rel (%p282) target = $region24
        $region23: #{baseline_gru_forward.2} parent=19 // pred_region
          %s285 = smul.u32 %s26, 2
          %s286 = ssub.s32 1, %s285
          %s287 = smul.u32 %s286, %s28
          %s288 = smul.u32 8, %s287
          %p289 = scmp.lt.s32.totalorder %s288, 7
          %s290 = scalar_select %p289, %s288, 7
          %p291 = scmp.lt.s32.totalorder %s27, 0
          %s292 = scalar_select %p291, %s27, 0
          %s293 = sadd.s32 %s292, %s290
          %s294 = smul.addr %s293, 4
          %s295 = scalar_lea.vmem %s1, %s294
          %s296 = smul.u32 %s26, 2
          %s297 = ssub.s32 1, %s296
          %s298 = smul.u32 %s297, %s28
          %s299 = smul.u32 8, %s298
        $region24: #{baseline_gru_forward.2} parent=19 // pred_fallthru
          _
        // Predicated region
        $region25: #{baseline_gru_forward.2} parent=19 // pred_check
          %p300 = pneg %p118
        $region26: #{baseline_gru_forward.2} parent=19 // pred_check_branch
          %302 = sbr.rel (%p300) target = $region28
        $region27: #{baseline_gru_forward.2} parent=19 // pred_region
          %s303 = sand.u32 %s108, 1
          %s304 = scalar_lea.sflag [#allocation5], %s303
          %s305 = sand.u32 %s108, 1
          %s306 = smul.addr %s305, 384
          %s307 = scalar_lea.vmem [#allocation4], %s306
          %s309 = ssub.s32 6144, 6144
          %310 = vsyncadd %s304, %s309
          %s311 = smul.addr %s26, 96
          %s312 = smul.addr %s311, 64
          %s313 = scalar_lea.hbm %s2, %s312
          %s314 = sshll.u32 %s307, 4
          %s315 = int_to_ptr.vmem [resolvable:$true] %s314
          %320 = dma.hbm_to_vmem [thread:$0]  %s313, 6144, %s315, %s304, 384, 384, 24
        $region28: #{baseline_gru_forward.2} parent=19 // pred_fallthru
          _
        // Predicated region
        $region29: #{baseline_gru_forward.2} parent=19 // pred_check
          %p321 = pneg %p144
        $region30: #{baseline_gru_forward.2} parent=19 // pred_check_branch
          %323 = sbr.rel (%p321) target = $region32
        $region31: #{baseline_gru_forward.2} parent=19 // pred_region
          %p324 = scmp.lt.s32.totalorder %s26, 1
          %s325 = scalar_select %p324, %s26, 1
          %s326 = smul.addr %s325, 6
          %s327 = scalar_lea.vmem %s3, %s326
        $region32: #{baseline_gru_forward.2} parent=19 // pred_fallthru
          _
        // Predicated region
        $region33: #{baseline_gru_forward.2} parent=19 // pred_check
          %p328 = pneg %p170
        $region34: #{baseline_gru_forward.2} parent=19 // pred_check_branch
          %330 = sbr.rel (%p328) target = $region36
        $region35: #{baseline_gru_forward.2} parent=19 // pred_region
          %s331 = sand.u32 %s160, 1
          %s332 = scalar_lea.sflag [#allocation7], %s331
          %s333 = sand.u32 %s160, 1
          %s334 = smul.addr %s333, 768
          %s335 = scalar_lea.vmem [#allocation6], %s334
          %s337 = ssub.s32 12288, 12288
          %338 = vsyncadd %s332, %s337
          %s339 = smul.addr %s26, 192
          %s340 = smul.addr %s339, 64
          %s341 = scalar_lea.hbm %s4, %s340
          %s342 = sshll.u32 %s335, 4
          %s343 = int_to_ptr.vmem [resolvable:$true] %s342
          %348 = dma.hbm_to_vmem [thread:$0]  %s341, 12288, %s343, %s332, 384, 384, 24
        $region36: #{baseline_gru_forward.2} parent=19 // pred_fallthru
          _
        // Predicated region
        $region37: #{baseline_gru_forward.2} parent=19 // pred_check
          %p349 = pneg %p196
        $region38: #{baseline_gru_forward.2} parent=19 // pred_check_branch
          %351 = sbr.rel (%p349) target = $region40
        $region39: #{baseline_gru_forward.2} parent=19 // pred_region
          %p352 = scmp.lt.s32.totalorder %s26, 1
          %s353 = scalar_select %p352, %s26, 1
          %s354 = smul.addr %s353, 2
          %s355 = scalar_lea.vmem %s5, %s354
        $region40: #{baseline_gru_forward.2} parent=19 // pred_fallthru
          _
        // Predicated region
        $region41: #{baseline_gru_forward.2} parent=19 // pred_check
          %p356 = pneg %p222
        $region42: #{baseline_gru_forward.2} parent=19 // pred_check_branch
          %358 = sbr.rel (%p356) target = $region44
        $region43: #{baseline_gru_forward.2} parent=19 // pred_region
          %p359 = scmp.lt.s32.totalorder %s26, 1
          %s360 = scalar_select %p359, %s26, 1
          %s361 = smul.addr %s360, 2
          %s362 = scalar_lea.vmem %s6, %s361
        $region44: #{baseline_gru_forward.2} parent=19 // pred_fallthru
          _
      $region20: #{baseline_gru_forward.2} parent=5 // pred_fallthru
        _
      %p363 = scmp.le.s32.totalorder 1, %s19
      %p364 = scmp.lt.s32.totalorder %s19, 3
      %p365 = pnand %p363, %p364
      %p366 = pneg %p365
      // Predicated region
      $region45: #{baseline_gru_forward.2} parent=5 // pred_check
        _
      $region46: #{baseline_gru_forward.2} parent=5 // pred_check_branch
        %368 = sbr.rel (%p365) target = $region48
      $region47: #{baseline_gru_forward.2} parent=5 // pred_region
        %s369 = ssub.s32 %s19, 1
        %s370 = sand.u32 %s111, 1
        %s371 = scalar_lea.sflag [#allocation5], %s370
        %s372 = sand.u32 %s111, 1
        %s373 = smul.addr %s372, 384
        %s374 = scalar_lea.vmem [#allocation4], %s373
        // Predicated region
        $region49: #{baseline_gru_forward.2} parent=47 // pred_check
          %p375 = pneg %p124
        $region50: #{baseline_gru_forward.2} parent=47 // pred_check_branch
          %377 = sbr.rel (%p375) target = $region52
        $region51: #{baseline_gru_forward.2} parent=47 // pred_region
          %378 = dma.done %s371, 6144
        $region52: #{baseline_gru_forward.2} parent=47 // pred_fallthru
          _
        %s379 = sand.u32 %s163, 1
        %s380 = scalar_lea.sflag [#allocation7], %s379
        %s381 = sand.u32 %s163, 1
        %s382 = smul.addr %s381, 768
        %s383 = scalar_lea.vmem [#allocation6], %s382
        // Predicated region
        $region53: #{baseline_gru_forward.2} parent=47 // pred_check
          %p384 = pneg %p176
        $region54: #{baseline_gru_forward.2} parent=47 // pred_check_branch
          %386 = sbr.rel (%p384) target = $region56
        $region55: #{baseline_gru_forward.2} parent=47 // pred_region
          %387 = dma.done %s380, 12288
        $region56: #{baseline_gru_forward.2} parent=47 // pred_fallthru
          _
        %p388 = scmp.lt.s32.totalorder %s30, 0
        %s389 = scalar_select %p388, %s30, 0
        %s390 = smul.addr %s389, 8
        %s391 = scalar_lea.vmem %s0, %s390
        %p392 = pneg %p64
        %p393 = pneg %p61
        %s394 = smul.u32 %s29, 2
        %s395 = ssub.s32 1, %s394
        %s396 = smul.u32 %s395, %s31
        %s397 = smul.u32 8, %s396
        %p398 = scmp.lt.s32.totalorder %s397, 7
        %s399 = scalar_select %p398, %s397, 7
        %p400 = scmp.lt.s32.totalorder %s30, 0
        %s401 = scalar_select %p400, %s30, 0
        %s402 = sadd.s32 %s401, %s399
        %s403 = smul.addr %s402, 4
        %s404 = scalar_lea.vmem %s1, %s403
        %p405 = pneg %p98
        %p406 = pneg %p95
        %s407 = sand.u32 %s111, 1
        %s408 = scalar_lea.sflag [#allocation5], %s407
        %s409 = sand.u32 %s111, 1
        %s410 = smul.addr %s409, 384
        %s411 = scalar_lea.vmem [#allocation4], %s410
        %p412 = pneg %p124
        %p413 = pneg %p121
        %p414 = scmp.lt.s32.totalorder %s29, 1
        %s415 = scalar_select %p414, %s29, 1
        %s416 = smul.addr %s415, 6
        %s417 = scalar_lea.vmem %s3, %s416
        %p418 = pneg %p150
        %p419 = pneg %p147
        %s420 = sand.u32 %s163, 1
        %s421 = scalar_lea.sflag [#allocation7], %s420
        %s422 = sand.u32 %s163, 1
        %s423 = smul.addr %s422, 768
        %s424 = scalar_lea.vmem [#allocation6], %s423
        %p425 = pneg %p176
        %p426 = pneg %p173
        %p427 = scmp.lt.s32.totalorder %s29, 1
        %s428 = scalar_select %p427, %s29, 1
        %s429 = smul.addr %s428, 2
        %s430 = scalar_lea.vmem %s5, %s429
        %p431 = pneg %p202
        %p432 = pneg %p199
        %p433 = scmp.lt.s32.totalorder %s29, 1
        %s434 = scalar_select %p433, %s29, 1
        %s435 = smul.addr %s434, 2
        %s436 = scalar_lea.vmem %s6, %s435
        %p437 = pneg %p228
        %p438 = pneg %p225
        %p439 = pneg %p256
        %p440 = pneg %p253
        %p441 = scmp.lt.s32.totalorder %s29, 1
        %s442 = scalar_select %p441, %s29, 1
        %p443 = scmp.lt.s32.totalorder %s30, 0
        %s444 = scalar_select %p443, %s30, 0
        %s445 = smul.addr %s444, 2
        %s446 = smul.addr %s442, 2
        %s447 = sadd.s32 %s445, %s446
        %s448 = smul.addr %s447, 8
        %s449 = scalar_lea.vmem %s7, %s448
        %p450 = scmp.lt.s32.totalorder %s30, 0
        %s451 = scalar_select %p450, %s30, 0
        %s452 = smul.addr %s451, 8
        %s453 = scalar_lea.vmem %s0, %s452
        %s454 = smul.u32 %s29, 2
        %s455 = ssub.s32 1, %s454
        %s456 = smul.u32 %s455, %s31
        %s457 = smul.u32 8, %s456
        %p458 = scmp.lt.s32.totalorder %s457, 7
        %s459 = scalar_select %p458, %s457, 7
        %p460 = scmp.lt.s32.totalorder %s30, 0
        %s461 = scalar_select %p460, %s30, 0
        %s462 = sadd.s32 %s461, %s459
        %s463 = smul.addr %s462, 4
        %s464 = scalar_lea.vmem %s1, %s463
        %s465 = smul.u32 %s29, 2
        %s466 = ssub.s32 1, %s465
        %s467 = smul.u32 %s466, %s31
        %s468 = smul.u32 8, %s467
        %p469 = scmp.lt.s32.totalorder %s29, 1
        %s470 = scalar_select %p469, %s29, 1
        %s471 = smul.addr %s470, 6
        %s472 = scalar_lea.vmem %s3, %s471
        %p473 = scmp.lt.s32.totalorder %s29, 1
        %s474 = scalar_select %p473, %s29, 1
        %s475 = smul.addr %s474, 2
        %s476 = scalar_lea.vmem %s5, %s475
        %p477 = scmp.lt.s32.totalorder %s29, 1
        %s478 = scalar_select %p477, %s29, 1
        %s479 = smul.addr %s478, 2
        %s480 = scalar_lea.vmem %s6, %s479
        %p481 = scmp.lt.s32.totalorder %s29, 1
        %s482 = scalar_select %p481, %s29, 1
        %p483 = scmp.lt.s32.totalorder %s30, 0
        %s484 = scalar_select %p483, %s30, 0
        %s485 = smul.addr %s484, 2
        %s486 = smul.addr %s482, 2
        %s487 = sadd.s32 %s485, %s486
        %s488 = smul.addr %s487, 8
        %s489 = scalar_lea.vmem %s7, %s488
        %p491 = scmp.eq.s32.totalorder %s31, 0
        // Predicated region
        $region57: #{baseline_gru_forward.2} parent=47 // pred_check
          %p492 = pneg %p491
        $region58: #{baseline_gru_forward.2} parent=47 // pred_check_branch
          %494 = sbr.rel (%p492) target = $region60
        $region59: #{baseline_gru_forward.2} parent=47 // pred_region
          %v495 = vld [vmem:[%s480] sm:$0x3]
          %v497 = vlaneseq
          %v498 = vshrl.u32 %v497, 7
          %v499 = vsub.s32 0, %v498
          %v500 = vrot.slane %v495, %v499
          %v501 = vlaneseq
          %v502 = vshrl.u32 %v501, 7
          %v503 = vsub.s32 1, %v502
          %v504 = vrot.slane %v495, %v503
          %507 = vst [vmem:[#allocation3] sm:$0xff] %v500
          %508 = vst [vmem:[#allocation3 + $0x8] sm:$0xff] %v504
        $region60: #{baseline_gru_forward.2} parent=47 // pred_fallthru
          _
        %v509 = vld [vmem:[%s464] sm:$0xf]
        %v510 = vld [vmem:[%s464 + $0x4] sm:$0xf]
        %v511 = vld [vmem:[%s464 + $0x8] sm:$0xf]
        %v512 = vld [vmem:[%s464 + $0xc] sm:$0xf]
        %v513 = vld [vmem:[%s464 + $0x10] sm:$0xf]
        %v514 = vld [vmem:[%s464 + $0x14] sm:$0xf]
        %v515 = vld [vmem:[%s464 + $0x18] sm:$0xf]
        %v516 = vld [vmem:[%s464 + $0x1c] sm:$0xf]
        %v517 = vld [vmem:[%s374] sm:$0xff]
        %v518 = vld [vmem:[%s374 + $0x8] sm:$0xff]
        %v519 = vld [vmem:[%s374 + $0x10] sm:$0xff]
        %v520 = vld [vmem:[%s374 + $0x18] sm:$0xff]
        %v521 = vld [vmem:[%s374 + $0x20] sm:$0xff]
        %v522 = vld [vmem:[%s374 + $0x28] sm:$0xff]
        %v523 = vld [vmem:[%s374 + $0x30] sm:$0xff]
        %v524 = vld [vmem:[%s374 + $0x38] sm:$0xff]
        %v525 = vld [vmem:[%s374 + $0x40] sm:$0xff]
        %v526 = vld [vmem:[%s374 + $0x48] sm:$0xff]
        %v527 = vld [vmem:[%s374 + $0x50] sm:$0xff]
        %v528 = vld [vmem:[%s374 + $0x58] sm:$0xff]
        %v529 = vld [vmem:[%s374 + $0x60] sm:$0xff]
        %v530 = vld [vmem:[%s374 + $0x68] sm:$0xff]
        %v531 = vld [vmem:[%s374 + $0x70] sm:$0xff]
        %v532 = vld [vmem:[%s374 + $0x78] sm:$0xff]
        %v533 = vld [vmem:[%s374 + $0x80] sm:$0xff]
        %v534 = vld [vmem:[%s374 + $0x88] sm:$0xff]
        %v535 = vld [vmem:[%s374 + $0x90] sm:$0xff]
        %v536 = vld [vmem:[%s374 + $0x98] sm:$0xff]
        %v537 = vld [vmem:[%s374 + $0xa0] sm:$0xff]
        %v538 = vld [vmem:[%s374 + $0xa8] sm:$0xff]
        %v539 = vld [vmem:[%s374 + $0xb0] sm:$0xff]
        %v540 = vld [vmem:[%s374 + $0xb8] sm:$0xff]
        %v541 = vld [vmem:[%s374 + $0xc0] sm:$0xff]
        %v542 = vld [vmem:[%s374 + $0xc8] sm:$0xff]
        %v543 = vld [vmem:[%s374 + $0xd0] sm:$0xff]
        %v544 = vld [vmem:[%s374 + $0xd8] sm:$0xff]
        %v545 = vld [vmem:[%s374 + $0xe0] sm:$0xff]
        %v546 = vld [vmem:[%s374 + $0xe8] sm:$0xff]
        %v547 = vld [vmem:[%s374 + $0xf0] sm:$0xff]
        %v548 = vld [vmem:[%s374 + $0xf8] sm:$0xff]
        %v549 = vld [vmem:[%s374 + $0x100] sm:$0xff]
        %v550 = vld [vmem:[%s374 + $0x108] sm:$0xff]
        %v551 = vld [vmem:[%s374 + $0x110] sm:$0xff]
        %v552 = vld [vmem:[%s374 + $0x118] sm:$0xff]
        %v553 = vld [vmem:[%s374 + $0x120] sm:$0xff]
        %v554 = vld [vmem:[%s374 + $0x128] sm:$0xff]
        %v555 = vld [vmem:[%s374 + $0x130] sm:$0xff]
        %v556 = vld [vmem:[%s374 + $0x138] sm:$0xff]
        %v557 = vld [vmem:[%s374 + $0x140] sm:$0xff]
        %v558 = vld [vmem:[%s374 + $0x148] sm:$0xff]
        %v559 = vld [vmem:[%s374 + $0x150] sm:$0xff]
        %v560 = vld [vmem:[%s374 + $0x158] sm:$0xff]
        %v561 = vld [vmem:[%s374 + $0x160] sm:$0xff]
        %v562 = vld [vmem:[%s374 + $0x168] sm:$0xff]
        %v563 = vld [vmem:[%s374 + $0x170] sm:$0xff]
        %v564 = vld [vmem:[%s374 + $0x178] sm:$0xff]
        %v565 = vld [vmem:[%s472] sm:$0x3f]
        %v567 = vlaneseq
        %v568 = vshrl.u32 %v567, 7
        %v569 = vsub.s32 0, %v568
        %v570 = vrot.slane %v565, %v569
        %v571 = vlaneseq
        %v572 = vshrl.u32 %v571, 7
        %v573 = vsub.s32 1, %v572
        %v574 = vrot.slane %v565, %v573
        %v575 = vlaneseq
        %v576 = vshrl.u32 %v575, 7
        %v577 = vsub.s32 2, %v576
        %v578 = vrot.slane %v565, %v577
        %v579 = vlaneseq
        %v580 = vshrl.u32 %v579, 7
        %v581 = vsub.s32 3, %v580
        %v582 = vrot.slane %v565, %v581
        %v583 = vlaneseq
        %v584 = vshrl.u32 %v583, 7
        %v585 = vsub.s32 4, %v584
        %v586 = vrot.slane %v565, %v585
        %v587 = vlaneseq
        %v588 = vshrl.u32 %v587, 7
        %v589 = vsub.s32 5, %v588
        %v590 = vrot.slane %v565, %v589
        %v605 = vunpack.c.l.b16 %v509
        %v606 = vunpack.c.l.b16 %v510
        %v607 = vunpack.c.l.b16 %v511
        %v608 = vunpack.c.l.b16 %v512
        %v609 = vunpack.c.l.b16 %v513
        %v610 = vunpack.c.l.b16 %v514
        %v611 = vunpack.c.l.b16 %v515
        %v612 = vunpack.c.l.b16 %v516
        %v613 = vpack.c.b16 %v606, %v605
        %v614 = vpack.c.b16 %v608, %v607
        %v615 = vpack.c.b16 %v610, %v609
        %v616 = vpack.c.b16 %v612, %v611
        %v669 = vunpack.c.l.b16 %v517
        %v670 = vunpack.c.h.b16 %v517
        %v671 = vunpack.c.l.b16 %v518
        %v672 = vunpack.c.h.b16 %v518
        %v673 = vunpack.c.l.b16 %v519
        %v674 = vunpack.c.h.b16 %v519
        %v675 = vunpack.c.l.b16 %v520
        %v676 = vunpack.c.h.b16 %v520
        %v677 = vunpack.c.l.b16 %v521
        %v678 = vunpack.c.h.b16 %v521
        %v679 = vunpack.c.l.b16 %v522
        %v680 = vunpack.c.h.b16 %v522
        %v681 = vunpack.c.l.b16 %v523
        %v682 = vunpack.c.h.b16 %v523
        %v683 = vunpack.c.l.b16 %v524
        %v684 = vunpack.c.h.b16 %v524
        %v685 = vunpack.c.l.b16 %v525
        %v686 = vunpack.c.h.b16 %v525
        %v687 = vunpack.c.l.b16 %v526
        %v688 = vunpack.c.h.b16 %v526
        %v689 = vunpack.c.l.b16 %v527
        %v690 = vunpack.c.h.b16 %v527
        %v691 = vunpack.c.l.b16 %v528
        %v692 = vunpack.c.h.b16 %v528
        %v693 = vunpack.c.l.b16 %v529
        %v694 = vunpack.c.h.b16 %v529
        %v695 = vunpack.c.l.b16 %v530
        %v696 = vunpack.c.h.b16 %v530
        %v697 = vunpack.c.l.b16 %v531
        %v698 = vunpack.c.h.b16 %v531
        %v699 = vunpack.c.l.b16 %v532
        %v700 = vunpack.c.h.b16 %v532
        %v701 = vunpack.c.l.b16 %v533
        %v702 = vunpack.c.h.b16 %v533
        %v703 = vunpack.c.l.b16 %v534
        %v704 = vunpack.c.h.b16 %v534
        %v705 = vunpack.c.l.b16 %v535
        %v706 = vunpack.c.h.b16 %v535
        %v707 = vunpack.c.l.b16 %v536
        %v708 = vunpack.c.h.b16 %v536
        %v709 = vunpack.c.l.b16 %v537
        %v710 = vunpack.c.h.b16 %v537
        %v711 = vunpack.c.l.b16 %v538
        %v712 = vunpack.c.h.b16 %v538
        %v713 = vunpack.c.l.b16 %v539
        %v714 = vunpack.c.h.b16 %v539
        %v715 = vunpack.c.l.b16 %v540
        %v716 = vunpack.c.h.b16 %v540
        %v717 = vunpack.c.l.b16 %v541
        %v718 = vunpack.c.h.b16 %v541
        %v719 = vunpack.c.l.b16 %v542
        %v720 = vunpack.c.h.b16 %v542
        %v721 = vunpack.c.l.b16 %v543
        %v722 = vunpack.c.h.b16 %v543
        %v723 = vunpack.c.l.b16 %v544
        %v724 = vunpack.c.h.b16 %v544
        %v725 = vunpack.c.l.b16 %v545
        %v726 = vunpack.c.h.b16 %v545
        %v727 = vunpack.c.l.b16 %v546
        %v728 = vunpack.c.h.b16 %v546
        %v729 = vunpack.c.l.b16 %v547
        %v730 = vunpack.c.h.b16 %v547
        %v731 = vunpack.c.l.b16 %v548
        %v732 = vunpack.c.h.b16 %v548
        %v733 = vunpack.c.l.b16 %v549
        %v734 = vunpack.c.h.b16 %v549
        %v735 = vunpack.c.l.b16 %v550
        %v736 = vunpack.c.h.b16 %v550
        %v737 = vunpack.c.l.b16 %v551
        %v738 = vunpack.c.h.b16 %v551
        %v739 = vunpack.c.l.b16 %v552
        %v740 = vunpack.c.h.b16 %v552
        %v741 = vunpack.c.l.b16 %v553
        %v742 = vunpack.c.h.b16 %v553
        %v743 = vunpack.c.l.b16 %v554
        %v744 = vunpack.c.h.b16 %v554
        %v745 = vunpack.c.l.b16 %v555
        %v746 = vunpack.c.h.b16 %v555
        %v747 = vunpack.c.l.b16 %v556
        %v748 = vunpack.c.h.b16 %v556
        %v749 = vunpack.c.l.b16 %v557
        %v750 = vunpack.c.h.b16 %v557
        %v751 = vunpack.c.l.b16 %v558
        %v752 = vunpack.c.h.b16 %v558
        %v753 = vunpack.c.l.b16 %v559
        %v754 = vunpack.c.h.b16 %v559
        %v755 = vunpack.c.l.b16 %v560
        %v756 = vunpack.c.h.b16 %v560
        %v757 = vunpack.c.l.b16 %v561
        %v758 = vunpack.c.h.b16 %v561
        %v759 = vunpack.c.l.b16 %v562
        %v760 = vunpack.c.h.b16 %v562
        %v761 = vunpack.c.l.b16 %v563
        %v762 = vunpack.c.h.b16 %v563
        %v763 = vunpack.c.l.b16 %v564
        %v764 = vunpack.c.h.b16 %v564
        %v765 = vpack.c.b16 %v675, %v669
        %v766 = vpack.c.b16 %v676, %v670
        %v767 = vpack.c.b16 %v677, %v671
        %v768 = vpack.c.b16 %v678, %v672
        %v769 = vpack.c.b16 %v679, %v673
        %v770 = vpack.c.b16 %v680, %v674
        %v771 = vpack.c.b16 %v687, %v681
        %v772 = vpack.c.b16 %v688, %v682
        %v773 = vpack.c.b16 %v689, %v683
        %v774 = vpack.c.b16 %v690, %v684
        %v775 = vpack.c.b16 %v691, %v685
        %v776 = vpack.c.b16 %v692, %v686
        %v777 = vpack.c.b16 %v699, %v693
        %v778 = vpack.c.b16 %v700, %v694
        %v779 = vpack.c.b16 %v701, %v695
        %v780 = vpack.c.b16 %v702, %v696
        %v781 = vpack.c.b16 %v703, %v697
        %v782 = vpack.c.b16 %v704, %v698
        %v783 = vpack.c.b16 %v711, %v705
        %v784 = vpack.c.b16 %v712, %v706
        %v785 = vpack.c.b16 %v713, %v707
        %v786 = vpack.c.b16 %v714, %v708
        %v787 = vpack.c.b16 %v715, %v709
        %v788 = vpack.c.b16 %v716, %v710
        %v789 = vpack.c.b16 %v723, %v717
        %v790 = vpack.c.b16 %v724, %v718
        %v791 = vpack.c.b16 %v725, %v719
        %v792 = vpack.c.b16 %v726, %v720
        %v793 = vpack.c.b16 %v727, %v721
        %v794 = vpack.c.b16 %v728, %v722
        %v795 = vpack.c.b16 %v735, %v729
        %v796 = vpack.c.b16 %v736, %v730
        %v797 = vpack.c.b16 %v737, %v731
        %v798 = vpack.c.b16 %v738, %v732
        %v799 = vpack.c.b16 %v739, %v733
        %v800 = vpack.c.b16 %v740, %v734
        %v801 = vpack.c.b16 %v747, %v741
        %v802 = vpack.c.b16 %v748, %v742
        %v803 = vpack.c.b16 %v749, %v743
        %v804 = vpack.c.b16 %v750, %v744
        %v805 = vpack.c.b16 %v751, %v745
        %v806 = vpack.c.b16 %v752, %v746
        %v807 = vpack.c.b16 %v759, %v753
        %v808 = vpack.c.b16 %v760, %v754
        %v809 = vpack.c.b16 %v761, %v755
        %v810 = vpack.c.b16 %v762, %v756
        %v811 = vpack.c.b16 %v763, %v757
        %v812 = vpack.c.b16 %v764, %v758
        %861 = vmatprep.subr.bf16.mxu0 %v766
        %862 = vmatpush1.bf16.msra.mxu0 %v765
        %863 = vmatprep.subr.bf16.mxu0 %v772
        %864 = vmatpush1.bf16.msra.mxu0 %v771
        %865 = vmatprep.subr.bf16.mxu0 %v778
        %866 = vmatpush1.bf16.msra.mxu0 %v777
        %867 = vmatprep.subr.bf16.mxu0 %v784
        %868 = vmatpush1.bf16.msra.mxu0 %v783
        %869 = vmatprep.subr.bf16.mxu0 %v790
        %870 = vmatpush1.bf16.msra.mxu0 %v789
        %871 = vmatprep.subr.bf16.mxu0 %v796
        %872 = vmatpush1.bf16.msra.mxu0 %v795
        %873 = vmatprep.subr.bf16.mxu0 %v802
        %874 = vmatpush1.bf16.msra.mxu0 %v801
        %875 = vmatprep.subr.bf16.mxu0 %v808
        %876 = vmatpush1.bf16.msra.mxu0 %v807
        %877 = vmatprep.subr.bf16.mxu0 0
        %878 = vmatpush1.bf16.msra.mxu0 0
        %879 = vmatprep.subr.bf16.mxu0 0
        %880 = vmatpush1.bf16.msra.mxu0 0
        %881 = vmatprep.subr.bf16.mxu0 0
        %882 = vmatpush1.bf16.msra.mxu0 0
        %883 = vmatprep.subr.bf16.mxu0 0
        %884 = vmatpush1.bf16.msra.mxu0 0
        %885 = vmatprep.subr.bf16.mxu0 0
        %886 = vmatpush1.bf16.msra.mxu0 0
        %887 = vmatprep.subr.bf16.mxu0 0
        %888 = vmatpush1.bf16.msra.mxu0 0
        %889 = vmatprep.subr.bf16.mxu0 0
        %890 = vmatpush1.bf16.msra.mxu0 0
        %891 = vmatprep.subr.bf16.mxu0 0
        %892 = vmatpush1.bf16.msra.mxu0 0
        %893 = vmatprep.mubr.bf16.mxu0 0
        %894 = vmatmul.mubr.bf16.gmra.mrb[0].mxu0 %v613
        %v895 = vpop.f32.mrb[0].mxu0
        %v896 = vadd.f32 %v570, %v895
        %v897 = vpop.f32.mrb[0].mxu0
        %v898 = vadd.f32 %v574, %v897
        %v899 = vpop.f32.mrb[0].mxu0
        %v900 = vadd.f32 %v570, %v899
        %v901 = vpop.f32.mrb[0].mxu0
        %v902 = vadd.f32 %v574, %v901
        %903 = vmatprep.mubr.bf16.mxu0 0
        %904 = vmatmul.mubr.bf16.gmra.mrb[0].mxu0 %v614
        %v905 = vpop.f32.mrb[0].mxu0
        %v906 = vadd.f32 %v570, %v905
        %v907 = vpop.f32.mrb[0].mxu0
        %v908 = vadd.f32 %v574, %v907
        %v909 = vpop.f32.mrb[0].mxu0
        %v910 = vadd.f32 %v570, %v909
        %v911 = vpop.f32.mrb[0].mxu0
        %v912 = vadd.f32 %v574, %v911
        %913 = vmatprep.mubr.bf16.mxu0 0
        %914 = vmatmul.mubr.bf16.gmra.mrb[0].mxu0 %v615
        %v915 = vpop.f32.mrb[0].mxu0
        %v916 = vadd.f32 %v570, %v915
        %v917 = vpop.f32.mrb[0].mxu0
        %v918 = vadd.f32 %v574, %v917
        %v919 = vpop.f32.mrb[0].mxu0
        %v920 = vadd.f32 %v570, %v919
        %v921 = vpop.f32.mrb[0].mxu0
        %v922 = vadd.f32 %v574, %v921
        %923 = vmatprep.mubr.bf16.mxu0 0
        %924 = vmatmul.mubr.bf16.gmra.mrb[0].mxu0 %v616
        %v925 = vpop.f32.mrb[0].mxu0
        %v926 = vadd.f32 %v570, %v925
        %v927 = vpop.f32.mrb[0].mxu0
        %v928 = vadd.f32 %v574, %v927
        %v929 = vpop.f32.mrb[0].mxu0
        %v930 = vadd.f32 %v570, %v929
        %v931 = vpop.f32.mrb[0].mxu0
        %v932 = vadd.f32 %v574, %v931
        %933 = vdwg.mxu0
        %934 = vmatprep.subr.bf16.mxu0 %v768
        %935 = vmatpush1.bf16.msra.mxu0 %v767
        %936 = vmatprep.subr.bf16.mxu0 %v774
        %937 = vmatpush1.bf16.msra.mxu0 %v773
        %938 = vmatprep.subr.bf16.mxu0 %v780
        %939 = vmatpush1.bf16.msra.mxu0 %v779
        %940 = vmatprep.subr.bf16.mxu0 %v786
        %941 = vmatpush1.bf16.msra.mxu0 %v785
        %942 = vmatprep.subr.bf16.mxu0 %v792
        %943 = vmatpush1.bf16.msra.mxu0 %v791
        %944 = vmatprep.subr.bf16.mxu0 %v798
        %945 = vmatpush1.bf16.msra.mxu0 %v797
        %946 = vmatprep.subr.bf16.mxu0 %v804
        %947 = vmatpush1.bf16.msra.mxu0 %v803
        %948 = vmatprep.subr.bf16.mxu0 %v810
        %949 = vmatpush1.bf16.msra.mxu0 %v809
        %950 = vmatprep.subr.bf16.mxu0 0
        %951 = vmatpush1.bf16.msra.mxu0 0
        %952 = vmatprep.subr.bf16.mxu0 0
        %953 = vmatpush1.bf16.msra.mxu0 0
        %954 = vmatprep.subr.bf16.mxu0 0
        %955 = vmatpush1.bf16.msra.mxu0 0
        %956 = vmatprep.subr.bf16.mxu0 0
        %957 = vmatpush1.bf16.msra.mxu0 0
        %958 = vmatprep.subr.bf16.mxu0 0
        %959 = vmatpush1.bf16.msra.mxu0 0
        %960 = vmatprep.subr.bf16.mxu0 0
        %961 = vmatpush1.bf16.msra.mxu0 0
        %962 = vmatprep.subr.bf16.mxu0 0
        %963 = vmatpush1.bf16.msra.mxu0 0
        %964 = vmatprep.subr.bf16.mxu0 0
        %965 = vmatpush1.bf16.msra.mxu0 0
        %966 = vmatprep.mubr.bf16.mxu0 0
        %967 = vmatmul.mubr.bf16.gmra.mrb[0].mxu0 %v613
        %v968 = vpop.f32.mrb[0].mxu0
        %v969 = vadd.f32 %v578, %v968
        %v970 = vpop.f32.mrb[0].mxu0
        %v971 = vadd.f32 %v582, %v970
        %v972 = vpop.f32.mrb[0].mxu0
        %v973 = vadd.f32 %v578, %v972
        %v974 = vpop.f32.mrb[0].mxu0
        %v975 = vadd.f32 %v582, %v974
        %976 = vmatprep.mubr.bf16.mxu0 0
        %977 = vmatmul.mubr.bf16.gmra.mrb[0].mxu0 %v614
        %v978 = vpop.f32.mrb[0].mxu0
        %v979 = vadd.f32 %v578, %v978
        %v980 = vpop.f32.mrb[0].mxu0
        %v981 = vadd.f32 %v582, %v980
        %v982 = vpop.f32.mrb[0].mxu0
        %v983 = vadd.f32 %v578, %v982
        %v984 = vpop.f32.mrb[0].mxu0
        %v985 = vadd.f32 %v582, %v984
        %986 = vmatprep.mubr.bf16.mxu0 0
        %987 = vmatmul.mubr.bf16.gmra.mrb[0].mxu0 %v615
        %v988 = vpop.f32.mrb[0].mxu0
        %v989 = vadd.f32 %v578, %v988
        %v990 = vpop.f32.mrb[0].mxu0
        %v991 = vadd.f32 %v582, %v990
        %v992 = vpop.f32.mrb[0].mxu0
        %v993 = vadd.f32 %v578, %v992
        %v994 = vpop.f32.mrb[0].mxu0
        %v995 = vadd.f32 %v582, %v994
        %996 = vmatprep.mubr.bf16.mxu0 0
        %997 = vmatmul.mubr.bf16.gmra.mrb[0].mxu0 %v616
        %v998 = vpop.f32.mrb[0].mxu0
        %v999 = vadd.f32 %v578, %v998
        %v1000 = vpop.f32.mrb[0].mxu0
        %v1001 = vadd.f32 %v582, %v1000
        %v1002 = vpop.f32.mrb[0].mxu0
        %v1003 = vadd.f32 %v578, %v1002
        %v1004 = vpop.f32.mrb[0].mxu0
        %v1005 = vadd.f32 %v582, %v1004
        %1006 = vdwg.mxu0
        %1007 = vmatprep.subr.bf16.mxu0 %v770
        %1008 = vmatpush1.bf16.msra.mxu0 %v769
        %1009 = vmatprep.subr.bf16.mxu0 %v776
        %1010 = vmatpush1.bf16.msra.mxu0 %v775
        %1011 = vmatprep.subr.bf16.mxu0 %v782
        %1012 = vmatpush1.bf16.msra.mxu0 %v781
        %1013 = vmatprep.subr.bf16.mxu0 %v788
        %1014 = vmatpush1.bf16.msra.mxu0 %v787
        %1015 = vmatprep.subr.bf16.mxu0 %v794
        %1016 = vmatpush1.bf16.msra.mxu0 %v793
        %1017 = vmatprep.subr.bf16.mxu0 %v800
        %1018 = vmatpush1.bf16.msra.mxu0 %v799
        %1019 = vmatprep.subr.bf16.mxu0 %v806
        %1020 = vmatpush1.bf16.msra.mxu0 %v805
        %1021 = vmatprep.subr.bf16.mxu0 %v812
        %1022 = vmatpush1.bf16.msra.mxu0 %v811
        %1023 = vmatprep.subr.bf16.mxu0 0
        %1024 = vmatpush1.bf16.msra.mxu0 0
        %1025 = vmatprep.subr.bf16.mxu0 0
        %1026 = vmatpush1.bf16.msra.mxu0 0
        %1027 = vmatprep.subr.bf16.mxu0 0
        %1028 = vmatpush1.bf16.msra.mxu0 0
        %1029 = vmatprep.subr.bf16.mxu0 0
        %1030 = vmatpush1.bf16.msra.mxu0 0
        %1031 = vmatprep.subr.bf16.mxu0 0
        %1032 = vmatpush1.bf16.msra.mxu0 0
        %1033 = vmatprep.subr.bf16.mxu0 0
        %1034 = vmatpush1.bf16.msra.mxu0 0
        %1035 = vmatprep.subr.bf16.mxu0 0
        %1036 = vmatpush1.bf16.msra.mxu0 0
        %1037 = vmatprep.subr.bf16.mxu0 0
        %1038 = vmatpush1.bf16.msra.mxu0 0
        %1039 = vmatprep.mubr.bf16.mxu0 0
        %1040 = vmatmul.mubr.bf16.gmra.mrb[0].mxu0 %v613
        %v1041 = vpop.f32.mrb[0].mxu0
        %v1042 = vadd.f32 %v586, %v1041
        %v1043 = vpop.f32.mrb[0].mxu0
        %v1044 = vadd.f32 %v590, %v1043
        %v1045 = vpop.f32.mrb[0].mxu0
        %v1046 = vadd.f32 %v586, %v1045
        %v1047 = vpop.f32.mrb[0].mxu0
        %v1048 = vadd.f32 %v590, %v1047
        %1049 = vmatprep.mubr.bf16.mxu0 0
        %1050 = vmatmul.mubr.bf16.gmra.mrb[0].mxu0 %v614
        %v1051 = vpop.f32.mrb[0].mxu0
        %v1052 = vadd.f32 %v586, %v1051
        %v1053 = vpop.f32.mrb[0].mxu0
        %v1054 = vadd.f32 %v590, %v1053
        %v1055 = vpop.f32.mrb[0].mxu0
        %v1056 = vadd.f32 %v586, %v1055
        %v1057 = vpop.f32.mrb[0].mxu0
        %v1058 = vadd.f32 %v590, %v1057
        %1059 = vmatprep.mubr.bf16.mxu0 0
        %1060 = vmatmul.mubr.bf16.gmra.mrb[0].mxu0 %v615
        %v1061 = vpop.f32.mrb[0].mxu0
        %v1062 = vadd.f32 %v586, %v1061
        %v1063 = vpop.f32.mrb[0].mxu0
        %v1064 = vadd.f32 %v590, %v1063
        %v1065 = vpop.f32.mrb[0].mxu0
        %v1066 = vadd.f32 %v586, %v1065
        %v1067 = vpop.f32.mrb[0].mxu0
        %v1068 = vadd.f32 %v590, %v1067
        %1069 = vmatprep.mubr.bf16.mxu0 0
        %1070 = vmatmul.mubr.bf16.gmra.mrb[0].mxu0 %v616
        %v1071 = vpop.f32.mrb[0].mxu0
        %v1072 = vadd.f32 %v586, %v1071
        %v1073 = vpop.f32.mrb[0].mxu0
        %v1074 = vadd.f32 %v590, %v1073
        %v1075 = vpop.f32.mrb[0].mxu0
        %v1076 = vadd.f32 %v586, %v1075
        %v1077 = vpop.f32.mrb[0].mxu0
        %v1078 = vadd.f32 %v590, %v1077
        %1079 = vdwg.mxu0
        %1080 = vst [vmem:[#allocation2] sm:$0xff] %v896
        %1081 = vst [vmem:[#allocation2 + $0x8] sm:$0xff] %v898
        %1082 = vst [vmem:[#allocation2 + $0x10] sm:$0xff] %v969
        %1083 = vst [vmem:[#allocation2 + $0x18] sm:$0xff] %v971
        %1084 = vst [vmem:[#allocation2 + $0x20] sm:$0xff] %v1042
        %1085 = vst [vmem:[#allocation2 + $0x28] sm:$0xff] %v1044
        %1086 = vst [vmem:[#allocation2 + $0x30] sm:$0xff] %v900
        %1087 = vst [vmem:[#allocation2 + $0x38] sm:$0xff] %v902
        %1088 = vst [vmem:[#allocation2 + $0x40] sm:$0xff] %v973
        %1089 = vst [vmem:[#allocation2 + $0x48] sm:$0xff] %v975
        %1090 = vst [vmem:[#allocation2 + $0x50] sm:$0xff] %v1046
        %1091 = vst [vmem:[#allocation2 + $0x58] sm:$0xff] %v1048
        %1092 = vst [vmem:[#allocation2 + $0x60] sm:$0xff] %v906
        %1093 = vst [vmem:[#allocation2 + $0x68] sm:$0xff] %v908
        %1094 = vst [vmem:[#allocation2 + $0x70] sm:$0xff] %v979
        %1095 = vst [vmem:[#allocation2 + $0x78] sm:$0xff] %v981
        %1096 = vst [vmem:[#allocation2 + $0x80] sm:$0xff] %v1052
        %1097 = vst [vmem:[#allocation2 + $0x88] sm:$0xff] %v1054
        %1098 = vst [vmem:[#allocation2 + $0x90] sm:$0xff] %v910
        %1099 = vst [vmem:[#allocation2 + $0x98] sm:$0xff] %v912
        %1100 = vst [vmem:[#allocation2 + $0xa0] sm:$0xff] %v983
        %1101 = vst [vmem:[#allocation2 + $0xa8] sm:$0xff] %v985
        %1102 = vst [vmem:[#allocation2 + $0xb0] sm:$0xff] %v1056
        %1103 = vst [vmem:[#allocation2 + $0xb8] sm:$0xff] %v1058
        %1104 = vst [vmem:[#allocation2 + $0xc0] sm:$0xff] %v916
        %1105 = vst [vmem:[#allocation2 + $0xc8] sm:$0xff] %v918
        %1106 = vst [vmem:[#allocation2 + $0xd0] sm:$0xff] %v989
        %1107 = vst [vmem:[#allocation2 + $0xd8] sm:$0xff] %v991
        %1108 = vst [vmem:[#allocation2 + $0xe0] sm:$0xff] %v1062
        %1109 = vst [vmem:[#allocation2 + $0xe8] sm:$0xff] %v1064
        %1110 = vst [vmem:[#allocation2 + $0xf0] sm:$0xff] %v920
        %1111 = vst [vmem:[#allocation2 + $0xf8] sm:$0xff] %v922
        %1112 = vst [vmem:[#allocation2 + $0x100] sm:$0xff] %v993
        %1113 = vst [vmem:[#allocation2 + $0x108] sm:$0xff] %v995
        %1114 = vst [vmem:[#allocation2 + $0x110] sm:$0xff] %v1066
        %1115 = vst [vmem:[#allocation2 + $0x118] sm:$0xff] %v1068
        %1116 = vst [vmem:[#allocation2 + $0x120] sm:$0xff] %v926
        %1117 = vst [vmem:[#allocation2 + $0x128] sm:$0xff] %v928
        %1118 = vst [vmem:[#allocation2 + $0x130] sm:$0xff] %v999
        %1119 = vst [vmem:[#allocation2 + $0x138] sm:$0xff] %v1001
        %1120 = vst [vmem:[#allocation2 + $0x140] sm:$0xff] %v1072
        %1121 = vst [vmem:[#allocation2 + $0x148] sm:$0xff] %v1074
        %1122 = vst [vmem:[#allocation2 + $0x150] sm:$0xff] %v930
        %1123 = vst [vmem:[#allocation2 + $0x158] sm:$0xff] %v932
        %1124 = vst [vmem:[#allocation2 + $0x160] sm:$0xff] %v1003
        %1125 = vst [vmem:[#allocation2 + $0x168] sm:$0xff] %v1005
        %1126 = vst [vmem:[#allocation2 + $0x170] sm:$0xff] %v1076
        %1127 = vst [vmem:[#allocation2 + $0x178] sm:$0xff] %v1078
        %v1128 = vld [vmem:[%s453] sm:$0xff]
        %v1129 = vld [vmem:[%s476] sm:$0x3]
        %v1131 = vlaneseq
        %v1132 = vshrl.u32 %v1131, 7
        %v1133 = vsub.s32 0, %v1132
        %v1134 = vrot.slane %v1129, %v1133
        %v1135 = vlaneseq
        %v1136 = vshrl.u32 %v1135, 7
        %v1137 = vsub.s32 1, %v1136
        %v1138 = vrot.slane %v1129, %v1137
        %s1141 = smul.u32 %s29, 2
        %s1142 = ssub.s32 1, %s1141
        %s1143 = smul.u32 %s1142, %s31
        %s1144 = smul.u32 %s1143, 8
        %v1145 = vld [vmem:[#allocation3] sm:$0xff]
        %v1146 = vld [vmem:[#allocation3 + $0x8] sm:$0xff]
        %s1147 = smul.u32 %s29, 7
        %s1148 = sadd.s32 %s1144, %s1147
        %s1149 = smul.u32 %s1147, 6
        %s1150 = smul.addr %s1149, 8
        %s1151 = scalar_lea.vmem [#allocation2], %s1150
        %v1152 = vld [vmem:[%s1151] sm:$0xff]
        %v1153 = vld [vmem:[%s1151 + $0x8] sm:$0xff]
        %v1154 = vld [vmem:[%s1151 + $0x10] sm:$0xff]
        %v1155 = vld [vmem:[%s1151 + $0x18] sm:$0xff]
        %v1156 = vld [vmem:[%s1151 + $0x20] sm:$0xff]
        %v1157 = vld [vmem:[%s1151 + $0x28] sm:$0xff]
        %v1158 = vpack.c.bf16 %v1145, %v1145
        %v1159 = vpack.c.bf16 %v1146, %v1146
        %v1160 = vld [vmem:[%s383] sm:$0xff]
        %v1161 = vld [vmem:[%s383 + $0x8] sm:$0xff]
        %v1162 = vld [vmem:[%s383 + $0x10] sm:$0xff]
        %v1163 = vld [vmem:[%s383 + $0x18] sm:$0xff]
        %v1164 = vld [vmem:[%s383 + $0x20] sm:$0xff]
        %v1165 = vld [vmem:[%s383 + $0x28] sm:$0xff]
        %v1166 = vld [vmem:[%s383 + $0x30] sm:$0xff]
        %v1167 = vld [vmem:[%s383 + $0x38] sm:$0xff]
        %v1168 = vld [vmem:[%s383 + $0x40] sm:$0xff]
        %v1169 = vld [vmem:[%s383 + $0x48] sm:$0xff]
        %v1170 = vld [vmem:[%s383 + $0x50] sm:$0xff]
        %v1171 = vld [vmem:[%s383 + $0x58] sm:$0xff]
        %v1172 = vld [vmem:[%s383 + $0x60] sm:$0xff]
        %v1173 = vld [vmem:[%s383 + $0x68] sm:$0xff]
        %v1174 = vld [vmem:[%s383 + $0x70] sm:$0xff]
        %v1175 = vld [vmem:[%s383 + $0x78] sm:$0xff]
        %v1176 = vld [vmem:[%s383 + $0x80] sm:$0xff]
        %v1177 = vld [vmem:[%s383 + $0x88] sm:$0xff]
        %v1178 = vld [vmem:[%s383 + $0x90] sm:$0xff]
        %v1179 = vld [vmem:[%s383 + $0x98] sm:$0xff]
        %v1180 = vld [vmem:[%s383 + $0xa0] sm:$0xff]
        %v1181 = vld [vmem:[%s383 + $0xa8] sm:$0xff]
        %v1182 = vld [vmem:[%s383 + $0xb0] sm:$0xff]
        %v1183 = vld [vmem:[%s383 + $0xb8] sm:$0xff]
        %v1184 = vld [vmem:[%s383 + $0xc0] sm:$0xff]
        %v1185 = vld [vmem:[%s383 + $0xc8] sm:$0xff]
        %v1186 = vld [vmem:[%s383 + $0xd0] sm:$0xff]
        %v1187 = vld [vmem:[%s383 + $0xd8] sm:$0xff]
        %v1188 = vld [vmem:[%s383 + $0xe0] sm:$0xff]
        %v1189 = vld [vmem:[%s383 + $0xe8] sm:$0xff]
        %v1190 = vld [vmem:[%s383 + $0xf0] sm:$0xff]
        %v1191 = vld [vmem:[%s383 + $0xf8] sm:$0xff]
        %v1192 = vld [vmem:[%s383 + $0x100] sm:$0xff]
        %v1193 = vld [vmem:[%s383 + $0x108] sm:$0xff]
        %v1194 = vld [vmem:[%s383 + $0x110] sm:$0xff]
        %v1195 = vld [vmem:[%s383 + $0x118] sm:$0xff]
        %v1196 = vld [vmem:[%s383 + $0x120] sm:$0xff]
        %v1197 = vld [vmem:[%s383 + $0x128] sm:$0xff]
        %v1198 = vld [vmem:[%s383 + $0x130] sm:$0xff]
        %v1199 = vld [vmem:[%s383 + $0x138] sm:$0xff]
        %v1200 = vld [vmem:[%s383 + $0x140] sm:$0xff]
        %v1201 = vld [vmem:[%s383 + $0x148] sm:$0xff]
        %v1202 = vld [vmem:[%s383 + $0x150] sm:$0xff]
        %v1203 = vld [vmem:[%s383 + $0x158] sm:$0xff]
        %v1204 = vld [vmem:[%s383 + $0x160] sm:$0xff]
        %v1205 = vld [vmem:[%s383 + $0x168] sm:$0xff]
        %v1206 = vld [vmem:[%s383 + $0x170] sm:$0xff]
        %v1207 = vld [vmem:[%s383 + $0x178] sm:$0xff]
        %v1208 = vld [vmem:[%s383 + $0x180] sm:$0xff]
        %v1209 = vld [vmem:[%s383 + $0x188] sm:$0xff]
        %v1210 = vld [vmem:[%s383 + $0x190] sm:$0xff]
        %v1211 = vld [vmem:[%s383 + $0x198] sm:$0xff]
        %v1212 = vld [vmem:[%s383 + $0x1a0] sm:$0xff]
        %v1213 = vld [vmem:[%s383 + $0x1a8] sm:$0xff]
        %v1214 = vld [vmem:[%s383 + $0x1b0] sm:$0xff]
        %v1215 = vld [vmem:[%s383 + $0x1b8] sm:$0xff]
        %v1216 = vld [vmem:[%s383 + $0x1c0] sm:$0xff]
        %v1217 = vld [vmem:[%s383 + $0x1c8] sm:$0xff]
        %v1218 = vld [vmem:[%s383 + $0x1d0] sm:$0xff]
        %v1219 = vld [vmem:[%s383 + $0x1d8] sm:$0xff]
        %v1220 = vld [vmem:[%s383 + $0x1e0] sm:$0xff]
        %v1221 = vld [vmem:[%s383 + $0x1e8] sm:$0xff]
        %v1222 = vld [vmem:[%s383 + $0x1f0] sm:$0xff]
        %v1223 = vld [vmem:[%s383 + $0x1f8] sm:$0xff]
        %v1224 = vld [vmem:[%s383 + $0x200] sm:$0xff]
        %v1225 = vld [vmem:[%s383 + $0x208] sm:$0xff]
        %v1226 = vld [vmem:[%s383 + $0x210] sm:$0xff]
        %v1227 = vld [vmem:[%s383 + $0x218] sm:$0xff]
        %v1228 = vld [vmem:[%s383 + $0x220] sm:$0xff]
        %v1229 = vld [vmem:[%s383 + $0x228] sm:$0xff]
        %v1230 = vld [vmem:[%s383 + $0x230] sm:$0xff]
        %v1231 = vld [vmem:[%s383 + $0x238] sm:$0xff]
        %v1232 = vld [vmem:[%s383 + $0x240] sm:$0xff]
        %v1233 = vld [vmem:[%s383 + $0x248] sm:$0xff]
        %v1234 = vld [vmem:[%s383 + $0x250] sm:$0xff]
        %v1235 = vld [vmem:[%s383 + $0x258] sm:$0xff]
        %v1236 = vld [vmem:[%s383 + $0x260] sm:$0xff]
        %v1237 = vld [vmem:[%s383 + $0x268] sm:$0xff]
        %v1238 = vld [vmem:[%s383 + $0x270] sm:$0xff]
        %v1239 = vld [vmem:[%s383 + $0x278] sm:$0xff]
        %v1240 = vld [vmem:[%s383 + $0x280] sm:$0xff]
        %v1241 = vld [vmem:[%s383 + $0x288] sm:$0xff]
        %v1242 = vld [vmem:[%s383 + $0x290] sm:$0xff]
        %v1243 = vld [vmem:[%s383 + $0x298] sm:$0xff]
        %v1244 = vld [vmem:[%s383 + $0x2a0] sm:$0xff]
        %v1245 = vld [vmem:[%s383 + $0x2a8] sm:$0xff]
        %v1246 = vld [vmem:[%s383 + $0x2b0] sm:$0xff]
        %v1247 = vld [vmem:[%s383 + $0x2b8] sm:$0xff]
        %v1248 = vld [vmem:[%s383 + $0x2c0] sm:$0xff]
        %v1249 = vld [vmem:[%s383 + $0x2c8] sm:$0xff]
        %v1250 = vld [vmem:[%s383 + $0x2d0] sm:$0xff]
        %v1251 = vld [vmem:[%s383 + $0x2d8] sm:$0xff]
        %v1252 = vld [vmem:[%s383 + $0x2e0] sm:$0xff]
        %v1253 = vld [vmem:[%s383 + $0x2e8] sm:$0xff]
        %v1254 = vld [vmem:[%s383 + $0x2f0] sm:$0xff]
        %v1255 = vld [vmem:[%s383 + $0x2f8] sm:$0xff]
        %v1352 = vunpack.c.l.b16 %v1160
        %v1353 = vunpack.c.h.b16 %v1160
        %v1354 = vunpack.c.l.b16 %v1161
        %v1355 = vunpack.c.h.b16 %v1161
        %v1356 = vunpack.c.l.b16 %v1162
        %v1357 = vunpack.c.h.b16 %v1162
        %v1358 = vunpack.c.l.b16 %v1163
        %v1359 = vunpack.c.h.b16 %v1163
        %v1360 = vunpack.c.l.b16 %v1164
        %v1361 = vunpack.c.h.b16 %v1164
        %v1362 = vunpack.c.l.b16 %v1165
        %v1363 = vunpack.c.h.b16 %v1165
        %v1364 = vunpack.c.l.b16 %v1166
        %v1365 = vunpack.c.h.b16 %v1166
        %v1366 = vunpack.c.l.b16 %v1167
        %v1367 = vunpack.c.h.b16 %v1167
        %v1368 = vunpack.c.l.b16 %v1168
        %v1369 = vunpack.c.h.b16 %v1168
        %v1370 = vunpack.c.l.b16 %v1169
        %v1371 = vunpack.c.h.b16 %v1169
        %v1372 = vunpack.c.l.b16 %v1170
        %v1373 = vunpack.c.h.b16 %v1170
        %v1374 = vunpack.c.l.b16 %v1171
        %v1375 = vunpack.c.h.b16 %v1171
        %v1376 = vunpack.c.l.b16 %v1172
        %v1377 = vunpack.c.h.b16 %v1172
        %v1378 = vunpack.c.l.b16 %v1173
        %v1379 = vunpack.c.h.b16 %v1173
        %v1380 = vunpack.c.l.b16 %v1174
        %v1381 = vunpack.c.h.b16 %v1174
        %v1382 = vunpack.c.l.b16 %v1175
        %v1383 = vunpack.c.h.b16 %v1175
        %v1384 = vunpack.c.l.b16 %v1176
        %v1385 = vunpack.c.h.b16 %v1176
        %v1386 = vunpack.c.l.b16 %v1177
        %v1387 = vunpack.c.h.b16 %v1177
        %v1388 = vunpack.c.l.b16 %v1178
        %v1389 = vunpack.c.h.b16 %v1178
        %v1390 = vunpack.c.l.b16 %v1179
        %v1391 = vunpack.c.h.b16 %v1179
        %v1392 = vunpack.c.l.b16 %v1180
        %v1393 = vunpack.c.h.b16 %v1180
        %v1394 = vunpack.c.l.b16 %v1181
        %v1395 = vunpack.c.h.b16 %v1181
        %v1396 = vunpack.c.l.b16 %v1182
        %v1397 = vunpack.c.h.b16 %v1182
        %v1398 = vunpack.c.l.b16 %v1183
        %v1399 = vunpack.c.h.b16 %v1183
        %v1400 = vunpack.c.l.b16 %v1184
        %v1401 = vunpack.c.h.b16 %v1184
        %v1402 = vunpack.c.l.b16 %v1185
        %v1403 = vunpack.c.h.b16 %v1185
        %v1404 = vunpack.c.l.b16 %v1186
        %v1405 = vunpack.c.h.b16 %v1186
        %v1406 = vunpack.c.l.b16 %v1187
        %v1407 = vunpack.c.h.b16 %v1187
        %v1408 = vunpack.c.l.b16 %v1188
        %v1409 = vunpack.c.h.b16 %v1188
        %v1410 = vunpack.c.l.b16 %v1189
        %v1411 = vunpack.c.h.b16 %v1189
        %v1412 = vunpack.c.l.b16 %v1190
        %v1413 = vunpack.c.h.b16 %v1190
        %v1414 = vunpack.c.l.b16 %v1191
        %v1415 = vunpack.c.h.b16 %v1191
        %v1416 = vunpack.c.l.b16 %v1192
        %v1417 = vunpack.c.h.b16 %v1192
        %v1418 = vunpack.c.l.b16 %v1193
        %v1419 = vunpack.c.h.b16 %v1193
        %v1420 = vunpack.c.l.b16 %v1194
        %v1421 = vunpack.c.h.b16 %v1194
        %v1422 = vunpack.c.l.b16 %v1195
        %v1423 = vunpack.c.h.b16 %v1195
        %v1424 = vunpack.c.l.b16 %v1196
        %v1425 = vunpack.c.h.b16 %v1196
        %v1426 = vunpack.c.l.b16 %v1197
        %v1427 = vunpack.c.h.b16 %v1197
        %v1428 = vunpack.c.l.b16 %v1198
        %v1429 = vunpack.c.h.b16 %v1198
        %v1430 = vunpack.c.l.b16 %v1199
        %v1431 = vunpack.c.h.b16 %v1199
        %v1432 = vunpack.c.l.b16 %v1200
        %v1433 = vunpack.c.h.b16 %v1200
        %v1434 = vunpack.c.l.b16 %v1201
        %v1435 = vunpack.c.h.b16 %v1201
        %v1436 = vunpack.c.l.b16 %v1202
        %v1437 = vunpack.c.h.b16 %v1202
        %v1438 = vunpack.c.l.b16 %v1203
        %v1439 = vunpack.c.h.b16 %v1203
        %v1440 = vunpack.c.l.b16 %v1204
        %v1441 = vunpack.c.h.b16 %v1204
        %v1442 = vunpack.c.l.b16 %v1205
        %v1443 = vunpack.c.h.b16 %v1205
        %v1444 = vunpack.c.l.b16 %v1206
        %v1445 = vunpack.c.h.b16 %v1206
        %v1446 = vunpack.c.l.b16 %v1207
        %v1447 = vunpack.c.h.b16 %v1207
        %v1448 = vunpack.c.l.b16 %v1208
        %v1449 = vunpack.c.h.b16 %v1208
        %v1450 = vunpack.c.l.b16 %v1209
        %v1451 = vunpack.c.h.b16 %v1209
        %v1452 = vunpack.c.l.b16 %v1210
        %v1453 = vunpack.c.h.b16 %v1210
        %v1454 = vunpack.c.l.b16 %v1211
        %v1455 = vunpack.c.h.b16 %v1211
        %v1456 = vunpack.c.l.b16 %v1212
        %v1457 = vunpack.c.h.b16 %v1212
        %v1458 = vunpack.c.l.b16 %v1213
        %v1459 = vunpack.c.h.b16 %v1213
        %v1460 = vunpack.c.l.b16 %v1214
        %v1461 = vunpack.c.h.b16 %v1214
        %v1462 = vunpack.c.l.b16 %v1215
        %v1463 = vunpack.c.h.b16 %v1215
        %v1464 = vunpack.c.l.b16 %v1216
        %v1465 = vunpack.c.h.b16 %v1216
        %v1466 = vunpack.c.l.b16 %v1217
        %v1467 = vunpack.c.h.b16 %v1217
        %v1468 = vunpack.c.l.b16 %v1218
        %v1469 = vunpack.c.h.b16 %v1218
        %v1470 = vunpack.c.l.b16 %v1219
        %v1471 = vunpack.c.h.b16 %v1219
        %v1472 = vunpack.c.l.b16 %v1220
        %v1473 = vunpack.c.h.b16 %v1220
        %v1474 = vunpack.c.l.b16 %v1221
        %v1475 = vunpack.c.h.b16 %v1221
        %v1476 = vunpack.c.l.b16 %v1222
        %v1477 = vunpack.c.h.b16 %v1222
        %v1478 = vunpack.c.l.b16 %v1223
        %v1479 = vunpack.c.h.b16 %v1223
        %v1480 = vunpack.c.l.b16 %v1224
        %v1481 = vunpack.c.h.b16 %v1224
        %v1482 = vunpack.c.l.b16 %v1225
        %v1483 = vunpack.c.h.b16 %v1225
        %v1484 = vunpack.c.l.b16 %v1226
        %v1485 = vunpack.c.h.b16 %v1226
        %v1486 = vunpack.c.l.b16 %v1227
        %v1487 = vunpack.c.h.b16 %v1227
        %v1488 = vunpack.c.l.b16 %v1228
        %v1489 = vunpack.c.h.b16 %v1228
        %v1490 = vunpack.c.l.b16 %v1229
        %v1491 = vunpack.c.h.b16 %v1229
        %v1492 = vunpack.c.l.b16 %v1230
        %v1493 = vunpack.c.h.b16 %v1230
        %v1494 = vunpack.c.l.b16 %v1231
        %v1495 = vunpack.c.h.b16 %v1231
        %v1496 = vunpack.c.l.b16 %v1232
        %v1497 = vunpack.c.h.b16 %v1232
        %v1498 = vunpack.c.l.b16 %v1233
        %v1499 = vunpack.c.h.b16 %v1233
        %v1500 = vunpack.c.l.b16 %v1234
        %v1501 = vunpack.c.h.b16 %v1234
        %v1502 = vunpack.c.l.b16 %v1235
        %v1503 = vunpack.c.h.b16 %v1235
        %v1504 = vunpack.c.l.b16 %v1236
        %v1505 = vunpack.c.h.b16 %v1236
        %v1506 = vunpack.c.l.b16 %v1237
        %v1507 = vunpack.c.h.b16 %v1237
        %v1508 = vunpack.c.l.b16 %v1238
        %v1509 = vunpack.c.h.b16 %v1238
        %v1510 = vunpack.c.l.b16 %v1239
        %v1511 = vunpack.c.h.b16 %v1239
        %v1512 = vunpack.c.l.b16 %v1240
        %v1513 = vunpack.c.h.b16 %v1240
        %v1514 = vunpack.c.l.b16 %v1241
        %v1515 = vunpack.c.h.b16 %v1241
        %v1516 = vunpack.c.l.b16 %v1242
        %v1517 = vunpack.c.h.b16 %v1242
        %v1518 = vunpack.c.l.b16 %v1243
        %v1519 = vunpack.c.h.b16 %v1243
        %v1520 = vunpack.c.l.b16 %v1244
        %v1521 = vunpack.c.h.b16 %v1244
        %v1522 = vunpack.c.l.b16 %v1245
        %v1523 = vunpack.c.h.b16 %v1245
        %v1524 = vunpack.c.l.b16 %v1246
        %v1525 = vunpack.c.h.b16 %v1246
        %v1526 = vunpack.c.l.b16 %v1247
        %v1527 = vunpack.c.h.b16 %v1247
        %v1528 = vunpack.c.l.b16 %v1248
        %v1529 = vunpack.c.h.b16 %v1248
        %v1530 = vunpack.c.l.b16 %v1249
        %v1531 = vunpack.c.h.b16 %v1249
        %v1532 = vunpack.c.l.b16 %v1250
        %v1533 = vunpack.c.h.b16 %v1250
        %v1534 = vunpack.c.l.b16 %v1251
        %v1535 = vunpack.c.h.b16 %v1251
        %v1536 = vunpack.c.l.b16 %v1252
        %v1537 = vunpack.c.h.b16 %v1252
        %v1538 = vunpack.c.l.b16 %v1253
        %v1539 = vunpack.c.h.b16 %v1253
        %v1540 = vunpack.c.l.b16 %v1254
        %v1541 = vunpack.c.h.b16 %v1254
        %v1542 = vunpack.c.l.b16 %v1255
        %v1543 = vunpack.c.h.b16 %v1255
        %v1544 = vpack.c.b16 %v1358, %v1352
        %v1545 = vpack.c.b16 %v1359, %v1353
        %v1546 = vpack.c.b16 %v1360, %v1354
        %v1547 = vpack.c.b16 %v1361, %v1355
        %v1548 = vpack.c.b16 %v1362, %v1356
        %v1549 = vpack.c.b16 %v1363, %v1357
        %v1550 = vpack.c.b16 %v1370, %v1364
        %v1551 = vpack.c.b16 %v1371, %v1365
        %v1552 = vpack.c.b16 %v1372, %v1366
        %v1553 = vpack.c.b16 %v1373, %v1367
        %v1554 = vpack.c.b16 %v1374, %v1368
        %v1555 = vpack.c.b16 %v1375, %v1369
        %v1556 = vpack.c.b16 %v1382, %v1376
        %v1557 = vpack.c.b16 %v1383, %v1377
        %v1558 = vpack.c.b16 %v1384, %v1378
        %v1559 = vpack.c.b16 %v1385, %v1379
        %v1560 = vpack.c.b16 %v1386, %v1380
        %v1561 = vpack.c.b16 %v1387, %v1381
        %v1562 = vpack.c.b16 %v1394, %v1388
        %v1563 = vpack.c.b16 %v1395, %v1389
        %v1564 = vpack.c.b16 %v1396, %v1390
        %v1565 = vpack.c.b16 %v1397, %v1391
        %v1566 = vpack.c.b16 %v1398, %v1392
        %v1567 = vpack.c.b16 %v1399, %v1393
        %v1568 = vpack.c.b16 %v1406, %v1400
        %v1569 = vpack.c.b16 %v1407, %v1401
        %v1570 = vpack.c.b16 %v1408, %v1402
        %v1571 = vpack.c.b16 %v1409, %v1403
        %v1572 = vpack.c.b16 %v1410, %v1404
        %v1573 = vpack.c.b16 %v1411, %v1405
        %v1574 = vpack.c.b16 %v1418, %v1412
        %v1575 = vpack.c.b16 %v1419, %v1413
        %v1576 = vpack.c.b16 %v1420, %v1414
        %v1577 = vpack.c.b16 %v1421, %v1415
        %v1578 = vpack.c.b16 %v1422, %v1416
        %v1579 = vpack.c.b16 %v1423, %v1417
        %v1580 = vpack.c.b16 %v1430, %v1424
        %v1581 = vpack.c.b16 %v1431, %v1425
        %v1582 = vpack.c.b16 %v1432, %v1426
        %v1583 = vpack.c.b16 %v1433, %v1427
        %v1584 = vpack.c.b16 %v1434, %v1428
        %v1585 = vpack.c.b16 %v1435, %v1429
        %v1586 = vpack.c.b16 %v1442, %v1436
        %v1587 = vpack.c.b16 %v1443, %v1437
        %v1588 = vpack.c.b16 %v1444, %v1438
        %v1589 = vpack.c.b16 %v1445, %v1439
        %v1590 = vpack.c.b16 %v1446, %v1440
        %v1591 = vpack.c.b16 %v1447, %v1441
        %v1592 = vpack.c.b16 %v1454, %v1448
        %v1593 = vpack.c.b16 %v1455, %v1449
        %v1594 = vpack.c.b16 %v1456, %v1450
        %v1595 = vpack.c.b16 %v1457, %v1451
        %v1596 = vpack.c.b16 %v1458, %v1452
        %v1597 = vpack.c.b16 %v1459, %v1453
        %v1598 = vpack.c.b16 %v1466, %v1460
        %v1599 = vpack.c.b16 %v1467, %v1461
        %v1600 = vpack.c.b16 %v1468, %v1462
        %v1601 = vpack.c.b16 %v1469, %v1463
        %v1602 = vpack.c.b16 %v1470, %v1464
        %v1603 = vpack.c.b16 %v1471, %v1465
        %v1604 = vpack.c.b16 %v1478, %v1472
        %v1605 = vpack.c.b16 %v1479, %v1473
        %v1606 = vpack.c.b16 %v1480, %v1474
        %v1607 = vpack.c.b16 %v1481, %v1475
        %v1608 = vpack.c.b16 %v1482, %v1476
        %v1609 = vpack.c.b16 %v1483, %v1477
        %v1610 = vpack.c.b16 %v1490, %v1484
        %v1611 = vpack.c.b16 %v1491, %v1485
        %v1612 = vpack.c.b16 %v1492, %v1486
        %v1613 = vpack.c.b16 %v1493, %v1487
        %v1614 = vpack.c.b16 %v1494, %v1488
        %v1615 = vpack.c.b16 %v1495, %v1489
        %v1616 = vpack.c.b16 %v1502, %v1496
        %v1617 = vpack.c.b16 %v1503, %v1497
        %v1618 = vpack.c.b16 %v1504, %v1498
        %v1619 = vpack.c.b16 %v1505, %v1499
        %v1620 = vpack.c.b16 %v1506, %v1500
        %v1621 = vpack.c.b16 %v1507, %v1501
        %v1622 = vpack.c.b16 %v1514, %v1508
        %v1623 = vpack.c.b16 %v1515, %v1509
        %v1624 = vpack.c.b16 %v1516, %v1510
        %v1625 = vpack.c.b16 %v1517, %v1511
        %v1626 = vpack.c.b16 %v1518, %v1512
        %v1627 = vpack.c.b16 %v1519, %v1513
        %v1628 = vpack.c.b16 %v1526, %v1520
        %v1629 = vpack.c.b16 %v1527, %v1521
        %v1630 = vpack.c.b16 %v1528, %v1522
        %v1631 = vpack.c.b16 %v1529, %v1523
        %v1632 = vpack.c.b16 %v1530, %v1524
        %v1633 = vpack.c.b16 %v1531, %v1525
        %v1634 = vpack.c.b16 %v1538, %v1532
        %v1635 = vpack.c.b16 %v1539, %v1533
        %v1636 = vpack.c.b16 %v1540, %v1534
        %v1637 = vpack.c.b16 %v1541, %v1535
        %v1638 = vpack.c.b16 %v1542, %v1536
        %v1639 = vpack.c.b16 %v1543, %v1537
        %1736 = vmatprep.subr.bf16.mxu0 %v1545
        %1737 = vmatpush1.bf16.msra.mxu0 %v1544
        %1738 = vmatprep.subr.bf16.mxu0 %v1551
        %1739 = vmatpush1.bf16.msra.mxu0 %v1550
        %1740 = vmatprep.subr.bf16.mxu0 %v1557
        %1741 = vmatpush1.bf16.msra.mxu0 %v1556
        %1742 = vmatprep.subr.bf16.mxu0 %v1563
        %1743 = vmatpush1.bf16.msra.mxu0 %v1562
        %1744 = vmatprep.subr.bf16.mxu0 %v1569
        %1745 = vmatpush1.bf16.msra.mxu0 %v1568
        %1746 = vmatprep.subr.bf16.mxu0 %v1575
        %1747 = vmatpush1.bf16.msra.mxu0 %v1574
        %1748 = vmatprep.subr.bf16.mxu0 %v1581
        %1749 = vmatpush1.bf16.msra.mxu0 %v1580
        %1750 = vmatprep.subr.bf16.mxu0 %v1587
        %1751 = vmatpush1.bf16.msra.mxu0 %v1586
        %1752 = vmatprep.subr.bf16.mxu0 %v1593
        %1753 = vmatpush1.bf16.msra.mxu0 %v1592
        %1754 = vmatprep.subr.bf16.mxu0 %v1599
        %1755 = vmatpush1.bf16.msra.mxu0 %v1598
        %1756 = vmatprep.subr.bf16.mxu0 %v1605
        %1757 = vmatpush1.bf16.msra.mxu0 %v1604
        %1758 = vmatprep.subr.bf16.mxu0 %v1611
        %1759 = vmatpush1.bf16.msra.mxu0 %v1610
        %1760 = vmatprep.subr.bf16.mxu0 %v1617
        %1761 = vmatpush1.bf16.msra.mxu0 %v1616
        %1762 = vmatprep.subr.bf16.mxu0 %v1623
        %1763 = vmatpush1.bf16.msra.mxu0 %v1622
        %1764 = vmatprep.subr.bf16.mxu0 %v1629
        %1765 = vmatpush1.bf16.msra.mxu0 %v1628
        %1766 = vmatprep.subr.bf16.mxu0 %v1635
        %1767 = vmatpush1.bf16.msra.mxu0 %v1634
        %1768 = vmatprep.mubr.bf16.mxu0 %v1159
        %1769 = vmatmul.mubr.bf16.gmra.mrb[0].mxu0 %v1158
        %v1770 = vpop.f32.mrb[0].mxu0
        %v1771 = vadd.f32 0.0, %v1770
        %v1772 = vpop.f32.mrb[0].mxu0
        %v1773 = vadd.f32 0.0, %v1772
        %v1774 = vpop.f32.mrb[0].mxu0
        %v1775 = vpop.f32.mrb[0].mxu0
        %1776 = vdwg.mxu0
        %1777 = vmatprep.subr.bf16.mxu0 %v1547
        %1778 = vmatpush1.bf16.msra.mxu0 %v1546
        %1779 = vmatprep.subr.bf16.mxu0 %v1553
        %1780 = vmatpush1.bf16.msra.mxu0 %v1552
        %1781 = vmatprep.subr.bf16.mxu0 %v1559
        %1782 = vmatpush1.bf16.msra.mxu0 %v1558
        %1783 = vmatprep.subr.bf16.mxu0 %v1565
        %1784 = vmatpush1.bf16.msra.mxu0 %v1564
        %1785 = vmatprep.subr.bf16.mxu0 %v1571
        %1786 = vmatpush1.bf16.msra.mxu0 %v1570
        %1787 = vmatprep.subr.bf16.mxu0 %v1577
        %1788 = vmatpush1.bf16.msra.mxu0 %v1576
        %1789 = vmatprep.subr.bf16.mxu0 %v1583
        %1790 = vmatpush1.bf16.msra.mxu0 %v1582
        %1791 = vmatprep.subr.bf16.mxu0 %v1589
        %1792 = vmatpush1.bf16.msra.mxu0 %v1588
        %1793 = vmatprep.subr.bf16.mxu0 %v1595
        %1794 = vmatpush1.bf16.msra.mxu0 %v1594
        %1795 = vmatprep.subr.bf16.mxu0 %v1601
        %1796 = vmatpush1.bf16.msra.mxu0 %v1600
        %1797 = vmatprep.subr.bf16.mxu0 %v1607
        %1798 = vmatpush1.bf16.msra.mxu0 %v1606
        %1799 = vmatprep.subr.bf16.mxu0 %v1613
        %1800 = vmatpush1.bf16.msra.mxu0 %v1612
        %1801 = vmatprep.subr.bf16.mxu0 %v1619
        %1802 = vmatpush1.bf16.msra.mxu0 %v1618
        %1803 = vmatprep.subr.bf16.mxu0 %v1625
        %1804 = vmatpush1.bf16.msra.mxu0 %v1624
        %1805 = vmatprep.subr.bf16.mxu0 %v1631
        %1806 = vmatpush1.bf16.msra.mxu0 %v1630
        %1807 = vmatprep.subr.bf16.mxu0 %v1637
        %1808 = vmatpush1.bf16.msra.mxu0 %v1636
        %1809 = vmatprep.mubr.bf16.mxu0 %v1159
        %1810 = vmatmul.mubr.bf16.gmra.mrb[0].mxu0 %v1158
        %v1811 = vpop.f32.mrb[0].mxu0
        %v1812 = vadd.f32 0.0, %v1811
        %v1813 = vpop.f32.mrb[0].mxu0
        %v1814 = vadd.f32 0.0, %v1813
        %v1815 = vpop.f32.mrb[0].mxu0
        %v1816 = vpop.f32.mrb[0].mxu0
        %1817 = vdwg.mxu0
        %1818 = vmatprep.subr.bf16.mxu0 %v1549
        %1819 = vmatpush1.bf16.msra.mxu0 %v1548
        %1820 = vmatprep.subr.bf16.mxu0 %v1555
        %1821 = vmatpush1.bf16.msra.mxu0 %v1554
        %1822 = vmatprep.subr.bf16.mxu0 %v1561
        %1823 = vmatpush1.bf16.msra.mxu0 %v1560
        %1824 = vmatprep.subr.bf16.mxu0 %v1567
        %1825 = vmatpush1.bf16.msra.mxu0 %v1566
        %1826 = vmatprep.subr.bf16.mxu0 %v1573
        %1827 = vmatpush1.bf16.msra.mxu0 %v1572
        %1828 = vmatprep.subr.bf16.mxu0 %v1579
        %1829 = vmatpush1.bf16.msra.mxu0 %v1578
        %1830 = vmatprep.subr.bf16.mxu0 %v1585
        %1831 = vmatpush1.bf16.msra.mxu0 %v1584
        %1832 = vmatprep.subr.bf16.mxu0 %v1591
        %1833 = vmatpush1.bf16.msra.mxu0 %v1590
        %1834 = vmatprep.subr.bf16.mxu0 %v1597
        %1835 = vmatpush1.bf16.msra.mxu0 %v1596
        %1836 = vmatprep.subr.bf16.mxu0 %v1603
        %1837 = vmatpush1.bf16.msra.mxu0 %v1602
        %1838 = vmatprep.subr.bf16.mxu0 %v1609
        %1839 = vmatpush1.bf16.msra.mxu0 %v1608
        %1840 = vmatprep.subr.bf16.mxu0 %v1615
        %1841 = vmatpush1.bf16.msra.mxu0 %v1614
        %1842 = vmatprep.subr.bf16.mxu0 %v1621
        %1843 = vmatpush1.bf16.msra.mxu0 %v1620
        %1844 = vmatprep.subr.bf16.mxu0 %v1627
        %1845 = vmatpush1.bf16.msra.mxu0 %v1626
        %1846 = vmatprep.subr.bf16.mxu0 %v1633
        %1847 = vmatpush1.bf16.msra.mxu0 %v1632
        %1848 = vmatprep.subr.bf16.mxu0 %v1639
        %1849 = vmatpush1.bf16.msra.mxu0 %v1638
        %1850 = vmatprep.mubr.bf16.mxu0 %v1159
        %1851 = vmatmul.mubr.bf16.gmra.mrb[0].mxu0 %v1158
        %v1852 = vpop.f32.mrb[0].mxu0
        %v1853 = vadd.f32 0.0, %v1852
        %v1854 = vpop.f32.mrb[0].mxu0
        %v1855 = vadd.f32 0.0, %v1854
        %v1856 = vpop.f32.mrb[0].mxu0
        %v1857 = vpop.f32.mrb[0].mxu0
        %1858 = vdwg.mxu0
        %v1859 = vadd.f32 %v1152, %v1771
        %v1860 = vadd.f32 %v1153, %v1773
        %v1861 = vmul.f32 %v1859, 0.5
        %v1862 = vmul.f32 %v1860, 0.5
        %v1863 = vtanh.pop %v1861
        %v1864 = vtanh.pop %v1862
        %v1865 = vadd.f32 %v1863, 1.0
        %v1866 = vadd.f32 %v1864, 1.0
        %v1867 = vmul.f32 %v1865, 0.5
        %v1868 = vmul.f32 %v1866, 0.5
        %v1869 = vadd.f32 %v1154, %v1812
        %v1870 = vadd.f32 %v1155, %v1814
        %v1871 = vmul.f32 %v1869, 0.5
        %v1872 = vmul.f32 %v1870, 0.5
        %v1873 = vtanh.pop %v1871
        %v1874 = vtanh.pop %v1872
        %v1875 = vadd.f32 %v1873, 1.0
        %v1876 = vadd.f32 %v1874, 1.0
        %v1877 = vmul.f32 %v1875, 0.5
        %v1878 = vmul.f32 %v1876, 0.5
        %v1879 = vadd.f32 %v1853, %v1134
        %v1880 = vadd.f32 %v1855, %v1138
        %v1881 = vmul.f32 %v1867, %v1879
        %v1882 = vmul.f32 %v1868, %v1880
        %v1883 = vadd.f32 %v1156, %v1881
        %v1884 = vadd.f32 %v1157, %v1882
        %v1885 = vtanh.pop %v1883
        %v1886 = vtanh.pop %v1884
        %v1887 = vsub.f32 1.0, %v1877
        %v1888 = vsub.f32 1.0, %v1878
        %v1889 = vmul.f32 %v1887, %v1885
        %v1890 = vmul.f32 %v1888, %v1886
        %v1891 = vmul.f32 %v1877, %v1145
        %v1892 = vmul.f32 %v1878, %v1146
        %v1893 = vadd.f32 %v1889, %v1891
        %v1894 = vadd.f32 %v1890, %v1892
        %v1895 = vstv %s1148
        %vm1896 = vcmp.lt.s32.totalorder %v1895, %v1128
        %v1897 = vsel %vm1896, 1, 0
        %1898 = vset.pattern.permute.xlu0 0
        %1899 = vperm.xlu0 %1898, %v1897
        %v1900 = vpop.permute.xlu0 %1899
        %vm1901 = vcmp.eq.s32.totalorder %v1900, 1
        %v1902 = vsel %vm1901, %v1893, %v1145
        %v1903 = vsel %vm1901, %v1894, %v1146
        %s1904 = sadd.s32 %s1147, %s1142
        %s1905 = sadd.s32 %s1144, %s1904
        %s1906 = smul.u32 %s1904, 6
        %s1907 = smul.addr %s1906, 8
        %s1908 = scalar_lea.vmem [#allocation2], %s1907
        %v1909 = vld [vmem:[%s1908] sm:$0xff]
        %v1910 = vld [vmem:[%s1908 + $0x8] sm:$0xff]
        %v1911 = vld [vmem:[%s1908 + $0x10] sm:$0xff]
        %v1912 = vld [vmem:[%s1908 + $0x18] sm:$0xff]
        %v1913 = vld [vmem:[%s1908 + $0x20] sm:$0xff]
        %v1914 = vld [vmem:[%s1908 + $0x28] sm:$0xff]
        %v1915 = vpack.c.bf16 %v1902, %v1902
        %v1916 = vpack.c.bf16 %v1903, %v1903
        %1917 = vmatprep.subr.bf16.mxu0 %v1545
        %1918 = vmatpush1.bf16.msra.mxu0 %v1544
        %1919 = vmatprep.subr.bf16.mxu0 %v1551
        %1920 = vmatpush1.bf16.msra.mxu0 %v1550
        %1921 = vmatprep.subr.bf16.mxu0 %v1557
        %1922 = vmatpush1.bf16.msra.mxu0 %v1556
        %1923 = vmatprep.subr.bf16.mxu0 %v1563
        %1924 = vmatpush1.bf16.msra.mxu0 %v1562
        %1925 = vmatprep.subr.bf16.mxu0 %v1569
        %1926 = vmatpush1.bf16.msra.mxu0 %v1568
        %1927 = vmatprep.subr.bf16.mxu0 %v1575
        %1928 = vmatpush1.bf16.msra.mxu0 %v1574
        %1929 = vmatprep.subr.bf16.mxu0 %v1581
        %1930 = vmatpush1.bf16.msra.mxu0 %v1580
        %1931 = vmatprep.subr.bf16.mxu0 %v1587
        %1932 = vmatpush1.bf16.msra.mxu0 %v1586
        %1933 = vmatprep.subr.bf16.mxu0 %v1593
        %1934 = vmatpush1.bf16.msra.mxu0 %v1592
        %1935 = vmatprep.subr.bf16.mxu0 %v1599
        %1936 = vmatpush1.bf16.msra.mxu0 %v1598
        %1937 = vmatprep.subr.bf16.mxu0 %v1605
        %1938 = vmatpush1.bf16.msra.mxu0 %v1604
        %1939 = vmatprep.subr.bf16.mxu0 %v1611
        %1940 = vmatpush1.bf16.msra.mxu0 %v1610
        %1941 = vmatprep.subr.bf16.mxu0 %v1617
        %1942 = vmatpush1.bf16.msra.mxu0 %v1616
        %1943 = vmatprep.subr.bf16.mxu0 %v1623
        %1944 = vmatpush1.bf16.msra.mxu0 %v1622
        %1945 = vmatprep.subr.bf16.mxu0 %v1629
        %1946 = vmatpush1.bf16.msra.mxu0 %v1628
        %1947 = vmatprep.subr.bf16.mxu0 %v1635
        %1948 = vmatpush1.bf16.msra.mxu0 %v1634
        %1949 = vmatprep.mubr.bf16.mxu0 %v1916
        %1950 = vmatmul.mubr.bf16.gmra.mrb[0].mxu0 %v1915
        %v1951 = vpop.f32.mrb[0].mxu0
        %v1952 = vadd.f32 0.0, %v1951
        %v1953 = vpop.f32.mrb[0].mxu0
        %v1954 = vadd.f32 0.0, %v1953
        %v1955 = vpop.f32.mrb[0].mxu0
        %v1956 = vpop.f32.mrb[0].mxu0
        %1957 = vdwg.mxu0
        %1958 = vmatprep.subr.bf16.mxu0 %v1547
        %1959 = vmatpush1.bf16.msra.mxu0 %v1546
        %1960 = vmatprep.subr.bf16.mxu0 %v1553
        %1961 = vmatpush1.bf16.msra.mxu0 %v1552
        %1962 = vmatprep.subr.bf16.mxu0 %v1559
        %1963 = vmatpush1.bf16.msra.mxu0 %v1558
        %1964 = vmatprep.subr.bf16.mxu0 %v1565
        %1965 = vmatpush1.bf16.msra.mxu0 %v1564
        %1966 = vmatprep.subr.bf16.mxu0 %v1571
        %1967 = vmatpush1.bf16.msra.mxu0 %v1570
        %1968 = vmatprep.subr.bf16.mxu0 %v1577
        %1969 = vmatpush1.bf16.msra.mxu0 %v1576
        %1970 = vmatprep.subr.bf16.mxu0 %v1583
        %1971 = vmatpush1.bf16.msra.mxu0 %v1582
        %1972 = vmatprep.subr.bf16.mxu0 %v1589
        %1973 = vmatpush1.bf16.msra.mxu0 %v1588
        %1974 = vmatprep.subr.bf16.mxu0 %v1595
        %1975 = vmatpush1.bf16.msra.mxu0 %v1594
        %1976 = vmatprep.subr.bf16.mxu0 %v1601
        %1977 = vmatpush1.bf16.msra.mxu0 %v1600
        %1978 = vmatprep.subr.bf16.mxu0 %v1607
        %1979 = vmatpush1.bf16.msra.mxu0 %v1606
        %1980 = vmatprep.subr.bf16.mxu0 %v1613
        %1981 = vmatpush1.bf16.msra.mxu0 %v1612
        %1982 = vmatprep.subr.bf16.mxu0 %v1619
        %1983 = vmatpush1.bf16.msra.mxu0 %v1618
        %1984 = vmatprep.subr.bf16.mxu0 %v1625
        %1985 = vmatpush1.bf16.msra.mxu0 %v1624
        %1986 = vmatprep.subr.bf16.mxu0 %v1631
        %1987 = vmatpush1.bf16.msra.mxu0 %v1630
        %1988 = vmatprep.subr.bf16.mxu0 %v1637
        %1989 = vmatpush1.bf16.msra.mxu0 %v1636
        %1990 = vmatprep.mubr.bf16.mxu0 %v1916
        %1991 = vmatmul.mubr.bf16.gmra.mrb[0].mxu0 %v1915
        %v1992 = vpop.f32.mrb[0].mxu0
        %v1993 = vadd.f32 0.0, %v1992
        %v1994 = vpop.f32.mrb[0].mxu0
        %v1995 = vadd.f32 0.0, %v1994
        %v1996 = vpop.f32.mrb[0].mxu0
        %v1997 = vpop.f32.mrb[0].mxu0
        %1998 = vdwg.mxu0
        %1999 = vmatprep.subr.bf16.mxu0 %v1549
        %2000 = vmatpush1.bf16.msra.mxu0 %v1548
        %2001 = vmatprep.subr.bf16.mxu0 %v1555
        %2002 = vmatpush1.bf16.msra.mxu0 %v1554
        %2003 = vmatprep.subr.bf16.mxu0 %v1561
        %2004 = vmatpush1.bf16.msra.mxu0 %v1560
        %2005 = vmatprep.subr.bf16.mxu0 %v1567
        %2006 = vmatpush1.bf16.msra.mxu0 %v1566
        %2007 = vmatprep.subr.bf16.mxu0 %v1573
        %2008 = vmatpush1.bf16.msra.mxu0 %v1572
        %2009 = vmatprep.subr.bf16.mxu0 %v1579
        %2010 = vmatpush1.bf16.msra.mxu0 %v1578
        %2011 = vmatprep.subr.bf16.mxu0 %v1585
        %2012 = vmatpush1.bf16.msra.mxu0 %v1584
        %2013 = vmatprep.subr.bf16.mxu0 %v1591
        %2014 = vmatpush1.bf16.msra.mxu0 %v1590
        %2015 = vmatprep.subr.bf16.mxu0 %v1597
        %2016 = vmatpush1.bf16.msra.mxu0 %v1596
        %2017 = vmatprep.subr.bf16.mxu0 %v1603
        %2018 = vmatpush1.bf16.msra.mxu0 %v1602
        %2019 = vmatprep.subr.bf16.mxu0 %v1609
        %2020 = vmatpush1.bf16.msra.mxu0 %v1608
        %2021 = vmatprep.subr.bf16.mxu0 %v1615
        %2022 = vmatpush1.bf16.msra.mxu0 %v1614
        %2023 = vmatprep.subr.bf16.mxu0 %v1621
        %2024 = vmatpush1.bf16.msra.mxu0 %v1620
        %2025 = vmatprep.subr.bf16.mxu0 %v1627
        %2026 = vmatpush1.bf16.msra.mxu0 %v1626
        %2027 = vmatprep.subr.bf16.mxu0 %v1633
        %2028 = vmatpush1.bf16.msra.mxu0 %v1632
        %2029 = vmatprep.subr.bf16.mxu0 %v1639
        %2030 = vmatpush1.bf16.msra.mxu0 %v1638
        %2031 = vmatprep.mubr.bf16.mxu0 %v1916
        %2032 = vmatmul.mubr.bf16.gmra.mrb[0].mxu0 %v1915
        %v2033 = vpop.f32.mrb[0].mxu0
        %v2034 = vadd.f32 0.0, %v2033
        %v2035 = vpop.f32.mrb[0].mxu0
        %v2036 = vadd.f32 0.0, %v2035
        %v2037 = vpop.f32.mrb[0].mxu0
        %v2038 = vpop.f32.mrb[0].mxu0
        %2039 = vdwg.mxu0
        %v2040 = vadd.f32 %v1909, %v1952
        %v2041 = vadd.f32 %v1910, %v1954
        %v2042 = vmul.f32 %v2040, 0.5
        %v2043 = vmul.f32 %v2041, 0.5
        %v2044 = vtanh.pop %v2042
        %v2045 = vtanh.pop %v2043
        %v2046 = vadd.f32 %v2044, 1.0
        %v2047 = vadd.f32 %v2045, 1.0
        %v2048 = vmul.f32 %v2046, 0.5
        %v2049 = vmul.f32 %v2047, 0.5
        %v2050 = vadd.f32 %v1911, %v1993
        %v2051 = vadd.f32 %v1912, %v1995
        %v2052 = vmul.f32 %v2050, 0.5
        %v2053 = vmul.f32 %v2051, 0.5
        %v2054 = vtanh.pop %v2052
        %v2055 = vtanh.pop %v2053
        %v2056 = vadd.f32 %v2054, 1.0
        %v2057 = vadd.f32 %v2055, 1.0
        %v2058 = vmul.f32 %v2056, 0.5
        %v2059 = vmul.f32 %v2057, 0.5
        %v2060 = vadd.f32 %v2034, %v1134
        %v2061 = vadd.f32 %v2036, %v1138
        %v2062 = vmul.f32 %v2048, %v2060
        %v2063 = vmul.f32 %v2049, %v2061
        %v2064 = vadd.f32 %v1913, %v2062
        %v2065 = vadd.f32 %v1914, %v2063
        %v2066 = vtanh.pop %v2064
        %v2067 = vtanh.pop %v2065
        %v2068 = vsub.f32 1.0, %v2058
        %v2069 = vsub.f32 1.0, %v2059
        %v2070 = vmul.f32 %v2068, %v2066
        %v2071 = vmul.f32 %v2069, %v2067
        %v2072 = vmul.f32 %v2058, %v1902
        %v2073 = vmul.f32 %v2059, %v1903
        %v2074 = vadd.f32 %v2070, %v2072
        %v2075 = vadd.f32 %v2071, %v2073
        %v2076 = vstv %s1905
        %vm2077 = vcmp.lt.s32.totalorder %v2076, %v1128
        %v2078 = vsel %vm2077, 1, 0
        %2079 = vset.pattern.permute.xlu0 0
        %2080 = vperm.xlu0 %2079, %v2078
        %v2081 = vpop.permute.xlu0 %2080
        %vm2082 = vcmp.eq.s32.totalorder %v2081, 1
        %v2083 = vsel %vm2082, %v2074, %v1902
        %v2084 = vsel %vm2082, %v2075, %v1903
        %s2085 = smul.u32 %s1142, 2
        %s2086 = sadd.s32 %s1147, %s2085
        %s2087 = sadd.s32 %s1144, %s2086
        %s2088 = smul.u32 %s2086, 6
        %s2089 = smul.addr %s2088, 8
        %s2090 = scalar_lea.vmem [#allocation2], %s2089
        %v2091 = vld [vmem:[%s2090] sm:$0xff]
        %v2092 = vld [vmem:[%s2090 + $0x8] sm:$0xff]
        %v2093 = vld [vmem:[%s2090 + $0x10] sm:$0xff]
        %v2094 = vld [vmem:[%s2090 + $0x18] sm:$0xff]
        %v2095 = vld [vmem:[%s2090 + $0x20] sm:$0xff]
        %v2096 = vld [vmem:[%s2090 + $0x28] sm:$0xff]
        %v2097 = vpack.c.bf16 %v2083, %v2083
        %v2098 = vpack.c.bf16 %v2084, %v2084
        %2099 = vmatprep.subr.bf16.mxu0 %v1545
        %2100 = vmatpush1.bf16.msra.mxu0 %v1544
        %2101 = vmatprep.subr.bf16.mxu0 %v1551
        %2102 = vmatpush1.bf16.msra.mxu0 %v1550
        %2103 = vmatprep.subr.bf16.mxu0 %v1557
        %2104 = vmatpush1.bf16.msra.mxu0 %v1556
        %2105 = vmatprep.subr.bf16.mxu0 %v1563
        %2106 = vmatpush1.bf16.msra.mxu0 %v1562
        %2107 = vmatprep.subr.bf16.mxu0 %v1569
        %2108 = vmatpush1.bf16.msra.mxu0 %v1568
        %2109 = vmatprep.subr.bf16.mxu0 %v1575
        %2110 = vmatpush1.bf16.msra.mxu0 %v1574
        %2111 = vmatprep.subr.bf16.mxu0 %v1581
        %2112 = vmatpush1.bf16.msra.mxu0 %v1580
        %2113 = vmatprep.subr.bf16.mxu0 %v1587
        %2114 = vmatpush1.bf16.msra.mxu0 %v1586
        %2115 = vmatprep.subr.bf16.mxu0 %v1593
        %2116 = vmatpush1.bf16.msra.mxu0 %v1592
        %2117 = vmatprep.subr.bf16.mxu0 %v1599
        %2118 = vmatpush1.bf16.msra.mxu0 %v1598
        %2119 = vmatprep.subr.bf16.mxu0 %v1605
        %2120 = vmatpush1.bf16.msra.mxu0 %v1604
        %2121 = vmatprep.subr.bf16.mxu0 %v1611
        %2122 = vmatpush1.bf16.msra.mxu0 %v1610
        %2123 = vmatprep.subr.bf16.mxu0 %v1617
        %2124 = vmatpush1.bf16.msra.mxu0 %v1616
        %2125 = vmatprep.subr.bf16.mxu0 %v1623
        %2126 = vmatpush1.bf16.msra.mxu0 %v1622
        %2127 = vmatprep.subr.bf16.mxu0 %v1629
        %2128 = vmatpush1.bf16.msra.mxu0 %v1628
        %2129 = vmatprep.subr.bf16.mxu0 %v1635
        %2130 = vmatpush1.bf16.msra.mxu0 %v1634
        %2131 = vmatprep.mubr.bf16.mxu0 %v2098
        %2132 = vmatmul.mubr.bf16.gmra.mrb[0].mxu0 %v2097
        %v2133 = vpop.f32.mrb[0].mxu0
        %v2134 = vadd.f32 0.0, %v2133
        %v2135 = vpop.f32.mrb[0].mxu0
        %v2136 = vadd.f32 0.0, %v2135
        %v2137 = vpop.f32.mrb[0].mxu0
        %v2138 = vpop.f32.mrb[0].mxu0
        %2139 = vdwg.mxu0
        %2140 = vmatprep.subr.bf16.mxu0 %v1547
        %2141 = vmatpush1.bf16.msra.mxu0 %v1546
        %2142 = vmatprep.subr.bf16.mxu0 %v1553
        %2143 = vmatpush1.bf16.msra.mxu0 %v1552
        %2144 = vmatprep.subr.bf16.mxu0 %v1559
        %2145 = vmatpush1.bf16.msra.mxu0 %v1558
        %2146 = vmatprep.subr.bf16.mxu0 %v1565
        %2147 = vmatpush1.bf16.msra.mxu0 %v1564
        %2148 = vmatprep.subr.bf16.mxu0 %v1571
        %2149 = vmatpush1.bf16.msra.mxu0 %v1570
        %2150 = vmatprep.subr.bf16.mxu0 %v1577
        %2151 = vmatpush1.bf16.msra.mxu0 %v1576
        %2152 = vmatprep.subr.bf16.mxu0 %v1583
        %2153 = vmatpush1.bf16.msra.mxu0 %v1582
        %2154 = vmatprep.subr.bf16.mxu0 %v1589
        %2155 = vmatpush1.bf16.msra.mxu0 %v1588
        %2156 = vmatprep.subr.bf16.mxu0 %v1595
        %2157 = vmatpush1.bf16.msra.mxu0 %v1594
        %2158 = vmatprep.subr.bf16.mxu0 %v1601
        %2159 = vmatpush1.bf16.msra.mxu0 %v1600
        %2160 = vmatprep.subr.bf16.mxu0 %v1607
        %2161 = vmatpush1.bf16.msra.mxu0 %v1606
        %2162 = vmatprep.subr.bf16.mxu0 %v1613
        %2163 = vmatpush1.bf16.msra.mxu0 %v1612
        %2164 = vmatprep.subr.bf16.mxu0 %v1619
        %2165 = vmatpush1.bf16.msra.mxu0 %v1618
        %2166 = vmatprep.subr.bf16.mxu0 %v1625
        %2167 = vmatpush1.bf16.msra.mxu0 %v1624
        %2168 = vmatprep.subr.bf16.mxu0 %v1631
        %2169 = vmatpush1.bf16.msra.mxu0 %v1630
        %2170 = vmatprep.subr.bf16.mxu0 %v1637
        %2171 = vmatpush1.bf16.msra.mxu0 %v1636
        %2172 = vmatprep.mubr.bf16.mxu0 %v2098
        %2173 = vmatmul.mubr.bf16.gmra.mrb[0].mxu0 %v2097
        %v2174 = vpop.f32.mrb[0].mxu0
        %v2175 = vadd.f32 0.0, %v2174
        %v2176 = vpop.f32.mrb[0].mxu0
        %v2177 = vadd.f32 0.0, %v2176
        %v2178 = vpop.f32.mrb[0].mxu0
        %v2179 = vpop.f32.mrb[0].mxu0
        %2180 = vdwg.mxu0
        %2181 = vmatprep.subr.bf16.mxu0 %v1549
        %2182 = vmatpush1.bf16.msra.mxu0 %v1548
        %2183 = vmatprep.subr.bf16.mxu0 %v1555
        %2184 = vmatpush1.bf16.msra.mxu0 %v1554
        %2185 = vmatprep.subr.bf16.mxu0 %v1561
        %2186 = vmatpush1.bf16.msra.mxu0 %v1560
        %2187 = vmatprep.subr.bf16.mxu0 %v1567
        %2188 = vmatpush1.bf16.msra.mxu0 %v1566
        %2189 = vmatprep.subr.bf16.mxu0 %v1573
        %2190 = vmatpush1.bf16.msra.mxu0 %v1572
        %2191 = vmatprep.subr.bf16.mxu0 %v1579
        %2192 = vmatpush1.bf16.msra.mxu0 %v1578
        %2193 = vmatprep.subr.bf16.mxu0 %v1585
        %2194 = vmatpush1.bf16.msra.mxu0 %v1584
        %2195 = vmatprep.subr.bf16.mxu0 %v1591
        %2196 = vmatpush1.bf16.msra.mxu0 %v1590
        %2197 = vmatprep.subr.bf16.mxu0 %v1597
        %2198 = vmatpush1.bf16.msra.mxu0 %v1596
        %2199 = vmatprep.subr.bf16.mxu0 %v1603
        %2200 = vmatpush1.bf16.msra.mxu0 %v1602
        %2201 = vmatprep.subr.bf16.mxu0 %v1609
        %2202 = vmatpush1.bf16.msra.mxu0 %v1608
        %2203 = vmatprep.subr.bf16.mxu0 %v1615
        %2204 = vmatpush1.bf16.msra.mxu0 %v1614
        %2205 = vmatprep.subr.bf16.mxu0 %v1621
        %2206 = vmatpush1.bf16.msra.mxu0 %v1620
        %2207 = vmatprep.subr.bf16.mxu0 %v1627
        %2208 = vmatpush1.bf16.msra.mxu0 %v1626
        %2209 = vmatprep.subr.bf16.mxu0 %v1633
        %2210 = vmatpush1.bf16.msra.mxu0 %v1632
        %2211 = vmatprep.subr.bf16.mxu0 %v1639
        %2212 = vmatpush1.bf16.msra.mxu0 %v1638
        %2213 = vmatprep.mubr.bf16.mxu0 %v2098
        %2214 = vmatmul.mubr.bf16.gmra.mrb[0].mxu0 %v2097
        %v2215 = vpop.f32.mrb[0].mxu0
        %v2216 = vadd.f32 0.0, %v2215
        %v2217 = vpop.f32.mrb[0].mxu0
        %v2218 = vadd.f32 0.0, %v2217
        %v2219 = vpop.f32.mrb[0].mxu0
        %v2220 = vpop.f32.mrb[0].mxu0
        %2221 = vdwg.mxu0
        %v2222 = vadd.f32 %v2091, %v2134
        %v2223 = vadd.f32 %v2092, %v2136
        %v2224 = vmul.f32 %v2222, 0.5
        %v2225 = vmul.f32 %v2223, 0.5
        %v2226 = vtanh.pop %v2224
        %v2227 = vtanh.pop %v2225
        %v2228 = vadd.f32 %v2226, 1.0
        %v2229 = vadd.f32 %v2227, 1.0
        %v2230 = vmul.f32 %v2228, 0.5
        %v2231 = vmul.f32 %v2229, 0.5
        %v2232 = vadd.f32 %v2093, %v2175
        %v2233 = vadd.f32 %v2094, %v2177
        %v2234 = vmul.f32 %v2232, 0.5
        %v2235 = vmul.f32 %v2233, 0.5
        %v2236 = vtanh.pop %v2234
        %v2237 = vtanh.pop %v2235
        %v2238 = vadd.f32 %v2236, 1.0
        %v2239 = vadd.f32 %v2237, 1.0
        %v2240 = vmul.f32 %v2238, 0.5
        %v2241 = vmul.f32 %v2239, 0.5
        %v2242 = vadd.f32 %v2216, %v1134
        %v2243 = vadd.f32 %v2218, %v1138
        %v2244 = vmul.f32 %v2230, %v2242
        %v2245 = vmul.f32 %v2231, %v2243
        %v2246 = vadd.f32 %v2095, %v2244
        %v2247 = vadd.f32 %v2096, %v2245
        %v2248 = vtanh.pop %v2246
        %v2249 = vtanh.pop %v2247
        %v2250 = vsub.f32 1.0, %v2240
        %v2251 = vsub.f32 1.0, %v2241
        %v2252 = vmul.f32 %v2250, %v2248
        %v2253 = vmul.f32 %v2251, %v2249
        %v2254 = vmul.f32 %v2240, %v2083
        %v2255 = vmul.f32 %v2241, %v2084
        %v2256 = vadd.f32 %v2252, %v2254
        %v2257 = vadd.f32 %v2253, %v2255
        %v2258 = vstv %s2087
        %vm2259 = vcmp.lt.s32.totalorder %v2258, %v1128
        %v2260 = vsel %vm2259, 1, 0
        %2261 = vset.pattern.permute.xlu0 0
        %2262 = vperm.xlu0 %2261, %v2260
        %v2263 = vpop.permute.xlu0 %2262
        %vm2264 = vcmp.eq.s32.totalorder %v2263, 1
        %v2265 = vsel %vm2264, %v2256, %v2083
        %v2266 = vsel %vm2264, %v2257, %v2084
        %s2267 = smul.u32 %s1142, 3
        %s2268 = sadd.s32 %s1147, %s2267
        %s2269 = sadd.s32 %s1144, %s2268
        %s2270 = smul.u32 %s2268, 6
        %s2271 = smul.addr %s2270, 8
        %s2272 = scalar_lea.vmem [#allocation2], %s2271
        %v2273 = vld [vmem:[%s2272] sm:$0xff]
        %v2274 = vld [vmem:[%s2272 + $0x8] sm:$0xff]
        %v2275 = vld [vmem:[%s2272 + $0x10] sm:$0xff]
        %v2276 = vld [vmem:[%s2272 + $0x18] sm:$0xff]
        %v2277 = vld [vmem:[%s2272 + $0x20] sm:$0xff]
        %v2278 = vld [vmem:[%s2272 + $0x28] sm:$0xff]
        %v2279 = vpack.c.bf16 %v2265, %v2265
        %v2280 = vpack.c.bf16 %v2266, %v2266
        %2281 = vmatprep.subr.bf16.mxu0 %v1545
        %2282 = vmatpush1.bf16.msra.mxu0 %v1544
        %2283 = vmatprep.subr.bf16.mxu0 %v1551
        %2284 = vmatpush1.bf16.msra.mxu0 %v1550
        %2285 = vmatprep.subr.bf16.mxu0 %v1557
        %2286 = vmatpush1.bf16.msra.mxu0 %v1556
        %2287 = vmatprep.subr.bf16.mxu0 %v1563
        %2288 = vmatpush1.bf16.msra.mxu0 %v1562
        %2289 = vmatprep.subr.bf16.mxu0 %v1569
        %2290 = vmatpush1.bf16.msra.mxu0 %v1568
        %2291 = vmatprep.subr.bf16.mxu0 %v1575
        %2292 = vmatpush1.bf16.msra.mxu0 %v1574
        %2293 = vmatprep.subr.bf16.mxu0 %v1581
        %2294 = vmatpush1.bf16.msra.mxu0 %v1580
        %2295 = vmatprep.subr.bf16.mxu0 %v1587
        %2296 = vmatpush1.bf16.msra.mxu0 %v1586
        %2297 = vmatprep.subr.bf16.mxu0 %v1593
        %2298 = vmatpush1.bf16.msra.mxu0 %v1592
        %2299 = vmatprep.subr.bf16.mxu0 %v1599
        %2300 = vmatpush1.bf16.msra.mxu0 %v1598
        %2301 = vmatprep.subr.bf16.mxu0 %v1605
        %2302 = vmatpush1.bf16.msra.mxu0 %v1604
        %2303 = vmatprep.subr.bf16.mxu0 %v1611
        %2304 = vmatpush1.bf16.msra.mxu0 %v1610
        %2305 = vmatprep.subr.bf16.mxu0 %v1617
        %2306 = vmatpush1.bf16.msra.mxu0 %v1616
        %2307 = vmatprep.subr.bf16.mxu0 %v1623
        %2308 = vmatpush1.bf16.msra.mxu0 %v1622
        %2309 = vmatprep.subr.bf16.mxu0 %v1629
        %2310 = vmatpush1.bf16.msra.mxu0 %v1628
        %2311 = vmatprep.subr.bf16.mxu0 %v1635
        %2312 = vmatpush1.bf16.msra.mxu0 %v1634
        %2313 = vmatprep.mubr.bf16.mxu0 %v2280
        %2314 = vmatmul.mubr.bf16.gmra.mrb[0].mxu0 %v2279
        %v2315 = vpop.f32.mrb[0].mxu0
        %v2316 = vadd.f32 0.0, %v2315
        %v2317 = vpop.f32.mrb[0].mxu0
        %v2318 = vadd.f32 0.0, %v2317
        %v2319 = vpop.f32.mrb[0].mxu0
        %v2320 = vpop.f32.mrb[0].mxu0
        %2321 = vdwg.mxu0
        %2322 = vmatprep.subr.bf16.mxu0 %v1547
        %2323 = vmatpush1.bf16.msra.mxu0 %v1546
        %2324 = vmatprep.subr.bf16.mxu0 %v1553
        %2325 = vmatpush1.bf16.msra.mxu0 %v1552
        %2326 = vmatprep.subr.bf16.mxu0 %v1559
        %2327 = vmatpush1.bf16.msra.mxu0 %v1558
        %2328 = vmatprep.subr.bf16.mxu0 %v1565
        %2329 = vmatpush1.bf16.msra.mxu0 %v1564
        %2330 = vmatprep.subr.bf16.mxu0 %v1571
        %2331 = vmatpush1.bf16.msra.mxu0 %v1570
        %2332 = vmatprep.subr.bf16.mxu0 %v1577
        %2333 = vmatpush1.bf16.msra.mxu0 %v1576
        %2334 = vmatprep.subr.bf16.mxu0 %v1583
        %2335 = vmatpush1.bf16.msra.mxu0 %v1582
        %2336 = vmatprep.subr.bf16.mxu0 %v1589
        %2337 = vmatpush1.bf16.msra.mxu0 %v1588
        %2338 = vmatprep.subr.bf16.mxu0 %v1595
        %2339 = vmatpush1.bf16.msra.mxu0 %v1594
        %2340 = vmatprep.subr.bf16.mxu0 %v1601
        %2341 = vmatpush1.bf16.msra.mxu0 %v1600
        %2342 = vmatprep.subr.bf16.mxu0 %v1607
        %2343 = vmatpush1.bf16.msra.mxu0 %v1606
        %2344 = vmatprep.subr.bf16.mxu0 %v1613
        %2345 = vmatpush1.bf16.msra.mxu0 %v1612
        %2346 = vmatprep.subr.bf16.mxu0 %v1619
        %2347 = vmatpush1.bf16.msra.mxu0 %v1618
        %2348 = vmatprep.subr.bf16.mxu0 %v1625
        %2349 = vmatpush1.bf16.msra.mxu0 %v1624
        %2350 = vmatprep.subr.bf16.mxu0 %v1631
        %2351 = vmatpush1.bf16.msra.mxu0 %v1630
        %2352 = vmatprep.subr.bf16.mxu0 %v1637
        %2353 = vmatpush1.bf16.msra.mxu0 %v1636
        %2354 = vmatprep.mubr.bf16.mxu0 %v2280
        %2355 = vmatmul.mubr.bf16.gmra.mrb[0].mxu0 %v2279
        %v2356 = vpop.f32.mrb[0].mxu0
        %v2357 = vadd.f32 0.0, %v2356
        %v2358 = vpop.f32.mrb[0].mxu0
        %v2359 = vadd.f32 0.0, %v2358
        %v2360 = vpop.f32.mrb[0].mxu0
        %v2361 = vpop.f32.mrb[0].mxu0
        %2362 = vdwg.mxu0
        %2363 = vmatprep.subr.bf16.mxu0 %v1549
        %2364 = vmatpush1.bf16.msra.mxu0 %v1548
        %2365 = vmatprep.subr.bf16.mxu0 %v1555
        %2366 = vmatpush1.bf16.msra.mxu0 %v1554
        %2367 = vmatprep.subr.bf16.mxu0 %v1561
        %2368 = vmatpush1.bf16.msra.mxu0 %v1560
        %2369 = vmatprep.subr.bf16.mxu0 %v1567
        %2370 = vmatpush1.bf16.msra.mxu0 %v1566
        %2371 = vmatprep.subr.bf16.mxu0 %v1573
        %2372 = vmatpush1.bf16.msra.mxu0 %v1572
        %2373 = vmatprep.subr.bf16.mxu0 %v1579
        %2374 = vmatpush1.bf16.msra.mxu0 %v1578
        %2375 = vmatprep.subr.bf16.mxu0 %v1585
        %2376 = vmatpush1.bf16.msra.mxu0 %v1584
        %2377 = vmatprep.subr.bf16.mxu0 %v1591
        %2378 = vmatpush1.bf16.msra.mxu0 %v1590
        %2379 = vmatprep.subr.bf16.mxu0 %v1597
        %2380 = vmatpush1.bf16.msra.mxu0 %v1596
        %2381 = vmatprep.subr.bf16.mxu0 %v1603
        %2382 = vmatpush1.bf16.msra.mxu0 %v1602
        %2383 = vmatprep.subr.bf16.mxu0 %v1609
        %2384 = vmatpush1.bf16.msra.mxu0 %v1608
        %2385 = vmatprep.subr.bf16.mxu0 %v1615
        %2386 = vmatpush1.bf16.msra.mxu0 %v1614
        %2387 = vmatprep.subr.bf16.mxu0 %v1621
        %2388 = vmatpush1.bf16.msra.mxu0 %v1620
        %2389 = vmatprep.subr.bf16.mxu0 %v1627
        %2390 = vmatpush1.bf16.msra.mxu0 %v1626
        %2391 = vmatprep.subr.bf16.mxu0 %v1633
        %2392 = vmatpush1.bf16.msra.mxu0 %v1632
        %2393 = vmatprep.subr.bf16.mxu0 %v1639
        %2394 = vmatpush1.bf16.msra.mxu0 %v1638
        %2395 = vmatprep.mubr.bf16.mxu0 %v2280
        %2396 = vmatmul.mubr.bf16.gmra.mrb[0].mxu0 %v2279
        %v2397 = vpop.f32.mrb[0].mxu0
        %v2398 = vadd.f32 0.0, %v2397
        %v2399 = vpop.f32.mrb[0].mxu0
        %v2400 = vadd.f32 0.0, %v2399
        %v2401 = vpop.f32.mrb[0].mxu0
        %v2402 = vpop.f32.mrb[0].mxu0
        %2403 = vdwg.mxu0
        %v2404 = vadd.f32 %v2273, %v2316
        %v2405 = vadd.f32 %v2274, %v2318
        %v2406 = vmul.f32 %v2404, 0.5
        %v2407 = vmul.f32 %v2405, 0.5
        %v2408 = vtanh.pop %v2406
        %v2409 = vtanh.pop %v2407
        %v2410 = vadd.f32 %v2408, 1.0
        %v2411 = vadd.f32 %v2409, 1.0
        %v2412 = vmul.f32 %v2410, 0.5
        %v2413 = vmul.f32 %v2411, 0.5
        %v2414 = vadd.f32 %v2275, %v2357
        %v2415 = vadd.f32 %v2276, %v2359
        %v2416 = vmul.f32 %v2414, 0.5
        %v2417 = vmul.f32 %v2415, 0.5
        %v2418 = vtanh.pop %v2416
        %v2419 = vtanh.pop %v2417
        %v2420 = vadd.f32 %v2418, 1.0
        %v2421 = vadd.f32 %v2419, 1.0
        %v2422 = vmul.f32 %v2420, 0.5
        %v2423 = vmul.f32 %v2421, 0.5
        %v2424 = vadd.f32 %v2398, %v1134
        %v2425 = vadd.f32 %v2400, %v1138
        %v2426 = vmul.f32 %v2412, %v2424
        %v2427 = vmul.f32 %v2413, %v2425
        %v2428 = vadd.f32 %v2277, %v2426
        %v2429 = vadd.f32 %v2278, %v2427
        %v2430 = vtanh.pop %v2428
        %v2431 = vtanh.pop %v2429
        %v2432 = vsub.f32 1.0, %v2422
        %v2433 = vsub.f32 1.0, %v2423
        %v2434 = vmul.f32 %v2432, %v2430
        %v2435 = vmul.f32 %v2433, %v2431
        %v2436 = vmul.f32 %v2422, %v2265
        %v2437 = vmul.f32 %v2423, %v2266
        %v2438 = vadd.f32 %v2434, %v2436
        %v2439 = vadd.f32 %v2435, %v2437
        %v2440 = vstv %s2269
        %vm2441 = vcmp.lt.s32.totalorder %v2440, %v1128
        %v2442 = vsel %vm2441, 1, 0
        %2443 = vset.pattern.permute.xlu0 0
        %2444 = vperm.xlu0 %2443, %v2442
        %v2445 = vpop.permute.xlu0 %2444
        %vm2446 = vcmp.eq.s32.totalorder %v2445, 1
        %v2447 = vsel %vm2446, %v2438, %v2265
        %v2448 = vsel %vm2446, %v2439, %v2266
        %s2449 = smul.u32 %s1142, 4
        %s2450 = sadd.s32 %s1147, %s2449
        %s2451 = sadd.s32 %s1144, %s2450
        %s2452 = smul.u32 %s2450, 6
        %s2453 = smul.addr %s2452, 8
        %s2454 = scalar_lea.vmem [#allocation2], %s2453
        %v2455 = vld [vmem:[%s2454] sm:$0xff]
        %v2456 = vld [vmem:[%s2454 + $0x8] sm:$0xff]
        %v2457 = vld [vmem:[%s2454 + $0x10] sm:$0xff]
        %v2458 = vld [vmem:[%s2454 + $0x18] sm:$0xff]
        %v2459 = vld [vmem:[%s2454 + $0x20] sm:$0xff]
        %v2460 = vld [vmem:[%s2454 + $0x28] sm:$0xff]
        %v2461 = vpack.c.bf16 %v2447, %v2447
        %v2462 = vpack.c.bf16 %v2448, %v2448
        %2463 = vmatprep.subr.bf16.mxu0 %v1545
        %2464 = vmatpush1.bf16.msra.mxu0 %v1544
        %2465 = vmatprep.subr.bf16.mxu0 %v1551
        %2466 = vmatpush1.bf16.msra.mxu0 %v1550
        %2467 = vmatprep.subr.bf16.mxu0 %v1557
        %2468 = vmatpush1.bf16.msra.mxu0 %v1556
        %2469 = vmatprep.subr.bf16.mxu0 %v1563
        %2470 = vmatpush1.bf16.msra.mxu0 %v1562
        %2471 = vmatprep.subr.bf16.mxu0 %v1569
        %2472 = vmatpush1.bf16.msra.mxu0 %v1568
        %2473 = vmatprep.subr.bf16.mxu0 %v1575
        %2474 = vmatpush1.bf16.msra.mxu0 %v1574
        %2475 = vmatprep.subr.bf16.mxu0 %v1581
        %2476 = vmatpush1.bf16.msra.mxu0 %v1580
        %2477 = vmatprep.subr.bf16.mxu0 %v1587
        %2478 = vmatpush1.bf16.msra.mxu0 %v1586
        %2479 = vmatprep.subr.bf16.mxu0 %v1593
        %2480 = vmatpush1.bf16.msra.mxu0 %v1592
        %2481 = vmatprep.subr.bf16.mxu0 %v1599
        %2482 = vmatpush1.bf16.msra.mxu0 %v1598
        %2483 = vmatprep.subr.bf16.mxu0 %v1605
        %2484 = vmatpush1.bf16.msra.mxu0 %v1604
        %2485 = vmatprep.subr.bf16.mxu0 %v1611
        %2486 = vmatpush1.bf16.msra.mxu0 %v1610
        %2487 = vmatprep.subr.bf16.mxu0 %v1617
        %2488 = vmatpush1.bf16.msra.mxu0 %v1616
        %2489 = vmatprep.subr.bf16.mxu0 %v1623
        %2490 = vmatpush1.bf16.msra.mxu0 %v1622
        %2491 = vmatprep.subr.bf16.mxu0 %v1629
        %2492 = vmatpush1.bf16.msra.mxu0 %v1628
        %2493 = vmatprep.subr.bf16.mxu0 %v1635
        %2494 = vmatpush1.bf16.msra.mxu0 %v1634
        %2495 = vmatprep.mubr.bf16.mxu0 %v2462
        %2496 = vmatmul.mubr.bf16.gmra.mrb[0].mxu0 %v2461
        %v2497 = vpop.f32.mrb[0].mxu0
        %v2498 = vadd.f32 0.0, %v2497
        %v2499 = vpop.f32.mrb[0].mxu0
        %v2500 = vadd.f32 0.0, %v2499
        %v2501 = vpop.f32.mrb[0].mxu0
        %v2502 = vpop.f32.mrb[0].mxu0
        %2503 = vdwg.mxu0
        %2504 = vmatprep.subr.bf16.mxu0 %v1547
        %2505 = vmatpush1.bf16.msra.mxu0 %v1546
        %2506 = vmatprep.subr.bf16.mxu0 %v1553
        %2507 = vmatpush1.bf16.msra.mxu0 %v1552
        %2508 = vmatprep.subr.bf16.mxu0 %v1559
        %2509 = vmatpush1.bf16.msra.mxu0 %v1558
        %2510 = vmatprep.subr.bf16.mxu0 %v1565
        %2511 = vmatpush1.bf16.msra.mxu0 %v1564
        %2512 = vmatprep.subr.bf16.mxu0 %v1571
        %2513 = vmatpush1.bf16.msra.mxu0 %v1570
        %2514 = vmatprep.subr.bf16.mxu0 %v1577
        %2515 = vmatpush1.bf16.msra.mxu0 %v1576
        %2516 = vmatprep.subr.bf16.mxu0 %v1583
        %2517 = vmatpush1.bf16.msra.mxu0 %v1582
        %2518 = vmatprep.subr.bf16.mxu0 %v1589
        %2519 = vmatpush1.bf16.msra.mxu0 %v1588
        %2520 = vmatprep.subr.bf16.mxu0 %v1595
        %2521 = vmatpush1.bf16.msra.mxu0 %v1594
        %2522 = vmatprep.subr.bf16.mxu0 %v1601
        %2523 = vmatpush1.bf16.msra.mxu0 %v1600
        %2524 = vmatprep.subr.bf16.mxu0 %v1607
        %2525 = vmatpush1.bf16.msra.mxu0 %v1606
        %2526 = vmatprep.subr.bf16.mxu0 %v1613
        %2527 = vmatpush1.bf16.msra.mxu0 %v1612
        %2528 = vmatprep.subr.bf16.mxu0 %v1619
        %2529 = vmatpush1.bf16.msra.mxu0 %v1618
        %2530 = vmatprep.subr.bf16.mxu0 %v1625
        %2531 = vmatpush1.bf16.msra.mxu0 %v1624
        %2532 = vmatprep.subr.bf16.mxu0 %v1631
        %2533 = vmatpush1.bf16.msra.mxu0 %v1630
        %2534 = vmatprep.subr.bf16.mxu0 %v1637
        %2535 = vmatpush1.bf16.msra.mxu0 %v1636
        %2536 = vmatprep.mubr.bf16.mxu0 %v2462
        %2537 = vmatmul.mubr.bf16.gmra.mrb[0].mxu0 %v2461
        %v2538 = vpop.f32.mrb[0].mxu0
        %v2539 = vadd.f32 0.0, %v2538
        %v2540 = vpop.f32.mrb[0].mxu0
        %v2541 = vadd.f32 0.0, %v2540
        %v2542 = vpop.f32.mrb[0].mxu0
        %v2543 = vpop.f32.mrb[0].mxu0
        %2544 = vdwg.mxu0
        %2545 = vmatprep.subr.bf16.mxu0 %v1549
        %2546 = vmatpush1.bf16.msra.mxu0 %v1548
        %2547 = vmatprep.subr.bf16.mxu0 %v1555
        %2548 = vmatpush1.bf16.msra.mxu0 %v1554
        %2549 = vmatprep.subr.bf16.mxu0 %v1561
        %2550 = vmatpush1.bf16.msra.mxu0 %v1560
        %2551 = vmatprep.subr.bf16.mxu0 %v1567
        %2552 = vmatpush1.bf16.msra.mxu0 %v1566
        %2553 = vmatprep.subr.bf16.mxu0 %v1573
        %2554 = vmatpush1.bf16.msra.mxu0 %v1572
        %2555 = vmatprep.subr.bf16.mxu0 %v1579
        %2556 = vmatpush1.bf16.msra.mxu0 %v1578
        %2557 = vmatprep.subr.bf16.mxu0 %v1585
        %2558 = vmatpush1.bf16.msra.mxu0 %v1584
        %2559 = vmatprep.subr.bf16.mxu0 %v1591
        %2560 = vmatpush1.bf16.msra.mxu0 %v1590
        %2561 = vmatprep.subr.bf16.mxu0 %v1597
        %2562 = vmatpush1.bf16.msra.mxu0 %v1596
        %2563 = vmatprep.subr.bf16.mxu0 %v1603
        %2564 = vmatpush1.bf16.msra.mxu0 %v1602
        %2565 = vmatprep.subr.bf16.mxu0 %v1609
        %2566 = vmatpush1.bf16.msra.mxu0 %v1608
        %2567 = vmatprep.subr.bf16.mxu0 %v1615
        %2568 = vmatpush1.bf16.msra.mxu0 %v1614
        %2569 = vmatprep.subr.bf16.mxu0 %v1621
        %2570 = vmatpush1.bf16.msra.mxu0 %v1620
        %2571 = vmatprep.subr.bf16.mxu0 %v1627
        %2572 = vmatpush1.bf16.msra.mxu0 %v1626
        %2573 = vmatprep.subr.bf16.mxu0 %v1633
        %2574 = vmatpush1.bf16.msra.mxu0 %v1632
        %2575 = vmatprep.subr.bf16.mxu0 %v1639
        %2576 = vmatpush1.bf16.msra.mxu0 %v1638
        %2577 = vmatprep.mubr.bf16.mxu0 %v2462
        %2578 = vmatmul.mubr.bf16.gmra.mrb[0].mxu0 %v2461
        %v2579 = vpop.f32.mrb[0].mxu0
        %v2580 = vadd.f32 0.0, %v2579
        %v2581 = vpop.f32.mrb[0].mxu0
        %v2582 = vadd.f32 0.0, %v2581
        %v2583 = vpop.f32.mrb[0].mxu0
        %v2584 = vpop.f32.mrb[0].mxu0
        %2585 = vdwg.mxu0
        %v2586 = vadd.f32 %v2455, %v2498
        %v2587 = vadd.f32 %v2456, %v2500
        %v2588 = vmul.f32 %v2586, 0.5
        %v2589 = vmul.f32 %v2587, 0.5
        %v2590 = vtanh.pop %v2588
        %v2591 = vtanh.pop %v2589
        %v2592 = vadd.f32 %v2590, 1.0
        %v2593 = vadd.f32 %v2591, 1.0
        %v2594 = vmul.f32 %v2592, 0.5
        %v2595 = vmul.f32 %v2593, 0.5
        %v2596 = vadd.f32 %v2457, %v2539
        %v2597 = vadd.f32 %v2458, %v2541
        %v2598 = vmul.f32 %v2596, 0.5
        %v2599 = vmul.f32 %v2597, 0.5
        %v2600 = vtanh.pop %v2598
        %v2601 = vtanh.pop %v2599
        %v2602 = vadd.f32 %v2600, 1.0
        %v2603 = vadd.f32 %v2601, 1.0
        %v2604 = vmul.f32 %v2602, 0.5
        %v2605 = vmul.f32 %v2603, 0.5
        %v2606 = vadd.f32 %v2580, %v1134
        %v2607 = vadd.f32 %v2582, %v1138
        %v2608 = vmul.f32 %v2594, %v2606
        %v2609 = vmul.f32 %v2595, %v2607
        %v2610 = vadd.f32 %v2459, %v2608
        %v2611 = vadd.f32 %v2460, %v2609
        %v2612 = vtanh.pop %v2610
        %v2613 = vtanh.pop %v2611
        %v2614 = vsub.f32 1.0, %v2604
        %v2615 = vsub.f32 1.0, %v2605
        %v2616 = vmul.f32 %v2614, %v2612
        %v2617 = vmul.f32 %v2615, %v2613
        %v2618 = vmul.f32 %v2604, %v2447
        %v2619 = vmul.f32 %v2605, %v2448
        %v2620 = vadd.f32 %v2616, %v2618
        %v2621 = vadd.f32 %v2617, %v2619
        %v2622 = vstv %s2451
        %vm2623 = vcmp.lt.s32.totalorder %v2622, %v1128
        %v2624 = vsel %vm2623, 1, 0
        %2625 = vset.pattern.permute.xlu0 0
        %2626 = vperm.xlu0 %2625, %v2624
        %v2627 = vpop.permute.xlu0 %2626
        %vm2628 = vcmp.eq.s32.totalorder %v2627, 1
        %v2629 = vsel %vm2628, %v2620, %v2447
        %v2630 = vsel %vm2628, %v2621, %v2448
        %s2631 = smul.u32 %s1142, 5
        %s2632 = sadd.s32 %s1147, %s2631
        %s2633 = sadd.s32 %s1144, %s2632
        %s2634 = smul.u32 %s2632, 6
        %s2635 = smul.addr %s2634, 8
        %s2636 = scalar_lea.vmem [#allocation2], %s2635
        %v2637 = vld [vmem:[%s2636] sm:$0xff]
        %v2638 = vld [vmem:[%s2636 + $0x8] sm:$0xff]
        %v2639 = vld [vmem:[%s2636 + $0x10] sm:$0xff]
        %v2640 = vld [vmem:[%s2636 + $0x18] sm:$0xff]
        %v2641 = vld [vmem:[%s2636 + $0x20] sm:$0xff]
        %v2642 = vld [vmem:[%s2636 + $0x28] sm:$0xff]
        %v2643 = vpack.c.bf16 %v2629, %v2629
        %v2644 = vpack.c.bf16 %v2630, %v2630
        %2645 = vmatprep.subr.bf16.mxu0 %v1545
        %2646 = vmatpush1.bf16.msra.mxu0 %v1544
        %2647 = vmatprep.subr.bf16.mxu0 %v1551
        %2648 = vmatpush1.bf16.msra.mxu0 %v1550
        %2649 = vmatprep.subr.bf16.mxu0 %v1557
        %2650 = vmatpush1.bf16.msra.mxu0 %v1556
        %2651 = vmatprep.subr.bf16.mxu0 %v1563
        %2652 = vmatpush1.bf16.msra.mxu0 %v1562
        %2653 = vmatprep.subr.bf16.mxu0 %v1569
        %2654 = vmatpush1.bf16.msra.mxu0 %v1568
        %2655 = vmatprep.subr.bf16.mxu0 %v1575
        %2656 = vmatpush1.bf16.msra.mxu0 %v1574
        %2657 = vmatprep.subr.bf16.mxu0 %v1581
        %2658 = vmatpush1.bf16.msra.mxu0 %v1580
        %2659 = vmatprep.subr.bf16.mxu0 %v1587
        %2660 = vmatpush1.bf16.msra.mxu0 %v1586
        %2661 = vmatprep.subr.bf16.mxu0 %v1593
        %2662 = vmatpush1.bf16.msra.mxu0 %v1592
        %2663 = vmatprep.subr.bf16.mxu0 %v1599
        %2664 = vmatpush1.bf16.msra.mxu0 %v1598
        %2665 = vmatprep.subr.bf16.mxu0 %v1605
        %2666 = vmatpush1.bf16.msra.mxu0 %v1604
        %2667 = vmatprep.subr.bf16.mxu0 %v1611
        %2668 = vmatpush1.bf16.msra.mxu0 %v1610
        %2669 = vmatprep.subr.bf16.mxu0 %v1617
        %2670 = vmatpush1.bf16.msra.mxu0 %v1616
        %2671 = vmatprep.subr.bf16.mxu0 %v1623
        %2672 = vmatpush1.bf16.msra.mxu0 %v1622
        %2673 = vmatprep.subr.bf16.mxu0 %v1629
        %2674 = vmatpush1.bf16.msra.mxu0 %v1628
        %2675 = vmatprep.subr.bf16.mxu0 %v1635
        %2676 = vmatpush1.bf16.msra.mxu0 %v1634
        %2677 = vmatprep.mubr.bf16.mxu0 %v2644
        %2678 = vmatmul.mubr.bf16.gmra.mrb[0].mxu0 %v2643
        %v2679 = vpop.f32.mrb[0].mxu0
        %v2680 = vadd.f32 0.0, %v2679
        %v2681 = vpop.f32.mrb[0].mxu0
        %v2682 = vadd.f32 0.0, %v2681
        %v2683 = vpop.f32.mrb[0].mxu0
        %v2684 = vpop.f32.mrb[0].mxu0
        %2685 = vdwg.mxu0
        %2686 = vmatprep.subr.bf16.mxu0 %v1547
        %2687 = vmatpush1.bf16.msra.mxu0 %v1546
        %2688 = vmatprep.subr.bf16.mxu0 %v1553
        %2689 = vmatpush1.bf16.msra.mxu0 %v1552
        %2690 = vmatprep.subr.bf16.mxu0 %v1559
        %2691 = vmatpush1.bf16.msra.mxu0 %v1558
        %2692 = vmatprep.subr.bf16.mxu0 %v1565
        %2693 = vmatpush1.bf16.msra.mxu0 %v1564
        %2694 = vmatprep.subr.bf16.mxu0 %v1571
        %2695 = vmatpush1.bf16.msra.mxu0 %v1570
        %2696 = vmatprep.subr.bf16.mxu0 %v1577
        %2697 = vmatpush1.bf16.msra.mxu0 %v1576
        %2698 = vmatprep.subr.bf16.mxu0 %v1583
        %2699 = vmatpush1.bf16.msra.mxu0 %v1582
        %2700 = vmatprep.subr.bf16.mxu0 %v1589
        %2701 = vmatpush1.bf16.msra.mxu0 %v1588
        %2702 = vmatprep.subr.bf16.mxu0 %v1595
        %2703 = vmatpush1.bf16.msra.mxu0 %v1594
        %2704 = vmatprep.subr.bf16.mxu0 %v1601
        %2705 = vmatpush1.bf16.msra.mxu0 %v1600
        %2706 = vmatprep.subr.bf16.mxu0 %v1607
        %2707 = vmatpush1.bf16.msra.mxu0 %v1606
        %2708 = vmatprep.subr.bf16.mxu0 %v1613
        %2709 = vmatpush1.bf16.msra.mxu0 %v1612
        %2710 = vmatprep.subr.bf16.mxu0 %v1619
        %2711 = vmatpush1.bf16.msra.mxu0 %v1618
        %2712 = vmatprep.subr.bf16.mxu0 %v1625
        %2713 = vmatpush1.bf16.msra.mxu0 %v1624
        %2714 = vmatprep.subr.bf16.mxu0 %v1631
        %2715 = vmatpush1.bf16.msra.mxu0 %v1630
        %2716 = vmatprep.subr.bf16.mxu0 %v1637
        %2717 = vmatpush1.bf16.msra.mxu0 %v1636
        %2718 = vmatprep.mubr.bf16.mxu0 %v2644
        %2719 = vmatmul.mubr.bf16.gmra.mrb[0].mxu0 %v2643
        %v2720 = vpop.f32.mrb[0].mxu0
        %v2721 = vadd.f32 0.0, %v2720
        %v2722 = vpop.f32.mrb[0].mxu0
        %v2723 = vadd.f32 0.0, %v2722
        %v2724 = vpop.f32.mrb[0].mxu0
        %v2725 = vpop.f32.mrb[0].mxu0
        %2726 = vdwg.mxu0
        %2727 = vmatprep.subr.bf16.mxu0 %v1549
        %2728 = vmatpush1.bf16.msra.mxu0 %v1548
        %2729 = vmatprep.subr.bf16.mxu0 %v1555
        %2730 = vmatpush1.bf16.msra.mxu0 %v1554
        %2731 = vmatprep.subr.bf16.mxu0 %v1561
        %2732 = vmatpush1.bf16.msra.mxu0 %v1560
        %2733 = vmatprep.subr.bf16.mxu0 %v1567
        %2734 = vmatpush1.bf16.msra.mxu0 %v1566
        %2735 = vmatprep.subr.bf16.mxu0 %v1573
        %2736 = vmatpush1.bf16.msra.mxu0 %v1572
        %2737 = vmatprep.subr.bf16.mxu0 %v1579
        %2738 = vmatpush1.bf16.msra.mxu0 %v1578
        %2739 = vmatprep.subr.bf16.mxu0 %v1585
        %2740 = vmatpush1.bf16.msra.mxu0 %v1584
        %2741 = vmatprep.subr.bf16.mxu0 %v1591
        %2742 = vmatpush1.bf16.msra.mxu0 %v1590
        %2743 = vmatprep.subr.bf16.mxu0 %v1597
        %2744 = vmatpush1.bf16.msra.mxu0 %v1596
        %2745 = vmatprep.subr.bf16.mxu0 %v1603
        %2746 = vmatpush1.bf16.msra.mxu0 %v1602
        %2747 = vmatprep.subr.bf16.mxu0 %v1609
        %2748 = vmatpush1.bf16.msra.mxu0 %v1608
        %2749 = vmatprep.subr.bf16.mxu0 %v1615
        %2750 = vmatpush1.bf16.msra.mxu0 %v1614
        %2751 = vmatprep.subr.bf16.mxu0 %v1621
        %2752 = vmatpush1.bf16.msra.mxu0 %v1620
        %2753 = vmatprep.subr.bf16.mxu0 %v1627
        %2754 = vmatpush1.bf16.msra.mxu0 %v1626
        %2755 = vmatprep.subr.bf16.mxu0 %v1633
        %2756 = vmatpush1.bf16.msra.mxu0 %v1632
        %2757 = vmatprep.subr.bf16.mxu0 %v1639
        %2758 = vmatpush1.bf16.msra.mxu0 %v1638
        %2759 = vmatprep.mubr.bf16.mxu0 %v2644
        %2760 = vmatmul.mubr.bf16.gmra.mrb[0].mxu0 %v2643
        %v2761 = vpop.f32.mrb[0].mxu0
        %v2762 = vadd.f32 0.0, %v2761
        %v2763 = vpop.f32.mrb[0].mxu0
        %v2764 = vadd.f32 0.0, %v2763
        %v2765 = vpop.f32.mrb[0].mxu0
        %v2766 = vpop.f32.mrb[0].mxu0
        %2767 = vdwg.mxu0
        %v2768 = vadd.f32 %v2637, %v2680
        %v2769 = vadd.f32 %v2638, %v2682
        %v2770 = vmul.f32 %v2768, 0.5
        %v2771 = vmul.f32 %v2769, 0.5
        %v2772 = vtanh.pop %v2770
        %v2773 = vtanh.pop %v2771
        %v2774 = vadd.f32 %v2772, 1.0
        %v2775 = vadd.f32 %v2773, 1.0
        %v2776 = vmul.f32 %v2774, 0.5
        %v2777 = vmul.f32 %v2775, 0.5
        %v2778 = vadd.f32 %v2639, %v2721
        %v2779 = vadd.f32 %v2640, %v2723
        %v2780 = vmul.f32 %v2778, 0.5
        %v2781 = vmul.f32 %v2779, 0.5
        %v2782 = vtanh.pop %v2780
        %v2783 = vtanh.pop %v2781
        %v2784 = vadd.f32 %v2782, 1.0
        %v2785 = vadd.f32 %v2783, 1.0
        %v2786 = vmul.f32 %v2784, 0.5
        %v2787 = vmul.f32 %v2785, 0.5
        %v2788 = vadd.f32 %v2762, %v1134
        %v2789 = vadd.f32 %v2764, %v1138
        %v2790 = vmul.f32 %v2776, %v2788
        %v2791 = vmul.f32 %v2777, %v2789
        %v2792 = vadd.f32 %v2641, %v2790
        %v2793 = vadd.f32 %v2642, %v2791
        %v2794 = vtanh.pop %v2792
        %v2795 = vtanh.pop %v2793
        %v2796 = vsub.f32 1.0, %v2786
        %v2797 = vsub.f32 1.0, %v2787
        %v2798 = vmul.f32 %v2796, %v2794
        %v2799 = vmul.f32 %v2797, %v2795
        %v2800 = vmul.f32 %v2786, %v2629
        %v2801 = vmul.f32 %v2787, %v2630
        %v2802 = vadd.f32 %v2798, %v2800
        %v2803 = vadd.f32 %v2799, %v2801
        %v2804 = vstv %s2633
        %vm2805 = vcmp.lt.s32.totalorder %v2804, %v1128
        %v2806 = vsel %vm2805, 1, 0
        %2807 = vset.pattern.permute.xlu0 0
        %2808 = vperm.xlu0 %2807, %v2806
        %v2809 = vpop.permute.xlu0 %2808
        %vm2810 = vcmp.eq.s32.totalorder %v2809, 1
        %v2811 = vsel %vm2810, %v2802, %v2629
        %v2812 = vsel %vm2810, %v2803, %v2630
        %s2813 = smul.u32 %s1142, 6
        %s2814 = sadd.s32 %s1147, %s2813
        %s2815 = sadd.s32 %s1144, %s2814
        %s2816 = smul.u32 %s2814, 6
        %s2817 = smul.addr %s2816, 8
        %s2818 = scalar_lea.vmem [#allocation2], %s2817
        %v2819 = vld [vmem:[%s2818] sm:$0xff]
        %v2820 = vld [vmem:[%s2818 + $0x8] sm:$0xff]
        %v2821 = vld [vmem:[%s2818 + $0x10] sm:$0xff]
        %v2822 = vld [vmem:[%s2818 + $0x18] sm:$0xff]
        %v2823 = vld [vmem:[%s2818 + $0x20] sm:$0xff]
        %v2824 = vld [vmem:[%s2818 + $0x28] sm:$0xff]
        %v2825 = vpack.c.bf16 %v2811, %v2811
        %v2826 = vpack.c.bf16 %v2812, %v2812
        %2827 = vmatprep.subr.bf16.mxu0 %v1545
        %2828 = vmatpush1.bf16.msra.mxu0 %v1544
        %2829 = vmatprep.subr.bf16.mxu0 %v1551
        %2830 = vmatpush1.bf16.msra.mxu0 %v1550
        %2831 = vmatprep.subr.bf16.mxu0 %v1557
        %2832 = vmatpush1.bf16.msra.mxu0 %v1556
        %2833 = vmatprep.subr.bf16.mxu0 %v1563
        %2834 = vmatpush1.bf16.msra.mxu0 %v1562
        %2835 = vmatprep.subr.bf16.mxu0 %v1569
        %2836 = vmatpush1.bf16.msra.mxu0 %v1568
        %2837 = vmatprep.subr.bf16.mxu0 %v1575
        %2838 = vmatpush1.bf16.msra.mxu0 %v1574
        %2839 = vmatprep.subr.bf16.mxu0 %v1581
        %2840 = vmatpush1.bf16.msra.mxu0 %v1580
        %2841 = vmatprep.subr.bf16.mxu0 %v1587
        %2842 = vmatpush1.bf16.msra.mxu0 %v1586
        %2843 = vmatprep.subr.bf16.mxu0 %v1593
        %2844 = vmatpush1.bf16.msra.mxu0 %v1592
        %2845 = vmatprep.subr.bf16.mxu0 %v1599
        %2846 = vmatpush1.bf16.msra.mxu0 %v1598
        %2847 = vmatprep.subr.bf16.mxu0 %v1605
        %2848 = vmatpush1.bf16.msra.mxu0 %v1604
        %2849 = vmatprep.subr.bf16.mxu0 %v1611
        %2850 = vmatpush1.bf16.msra.mxu0 %v1610
        %2851 = vmatprep.subr.bf16.mxu0 %v1617
        %2852 = vmatpush1.bf16.msra.mxu0 %v1616
        %2853 = vmatprep.subr.bf16.mxu0 %v1623
        %2854 = vmatpush1.bf16.msra.mxu0 %v1622
        %2855 = vmatprep.subr.bf16.mxu0 %v1629
        %2856 = vmatpush1.bf16.msra.mxu0 %v1628
        %2857 = vmatprep.subr.bf16.mxu0 %v1635
        %2858 = vmatpush1.bf16.msra.mxu0 %v1634
        %2859 = vmatprep.mubr.bf16.mxu0 %v2826
        %2860 = vmatmul.mubr.bf16.gmra.mrb[0].mxu0 %v2825
        %v2861 = vpop.f32.mrb[0].mxu0
        %v2862 = vadd.f32 0.0, %v2861
        %v2863 = vpop.f32.mrb[0].mxu0
        %v2864 = vadd.f32 0.0, %v2863
        %v2865 = vpop.f32.mrb[0].mxu0
        %v2866 = vpop.f32.mrb[0].mxu0
        %2867 = vdwg.mxu0
        %2868 = vmatprep.subr.bf16.mxu0 %v1547
        %2869 = vmatpush1.bf16.msra.mxu0 %v1546
        %2870 = vmatprep.subr.bf16.mxu0 %v1553
        %2871 = vmatpush1.bf16.msra.mxu0 %v1552
        %2872 = vmatprep.subr.bf16.mxu0 %v1559
        %2873 = vmatpush1.bf16.msra.mxu0 %v1558
        %2874 = vmatprep.subr.bf16.mxu0 %v1565
        %2875 = vmatpush1.bf16.msra.mxu0 %v1564
        %2876 = vmatprep.subr.bf16.mxu0 %v1571
        %2877 = vmatpush1.bf16.msra.mxu0 %v1570
        %2878 = vmatprep.subr.bf16.mxu0 %v1577
        %2879 = vmatpush1.bf16.msra.mxu0 %v1576
        %2880 = vmatprep.subr.bf16.mxu0 %v1583
        %2881 = vmatpush1.bf16.msra.mxu0 %v1582
        %2882 = vmatprep.subr.bf16.mxu0 %v1589
        %2883 = vmatpush1.bf16.msra.mxu0 %v1588
        %2884 = vmatprep.subr.bf16.mxu0 %v1595
        %2885 = vmatpush1.bf16.msra.mxu0 %v1594
        %2886 = vmatprep.subr.bf16.mxu0 %v1601
        %2887 = vmatpush1.bf16.msra.mxu0 %v1600
        %2888 = vmatprep.subr.bf16.mxu0 %v1607
        %2889 = vmatpush1.bf16.msra.mxu0 %v1606
        %2890 = vmatprep.subr.bf16.mxu0 %v1613
        %2891 = vmatpush1.bf16.msra.mxu0 %v1612
        %2892 = vmatprep.subr.bf16.mxu0 %v1619
        %2893 = vmatpush1.bf16.msra.mxu0 %v1618
        %2894 = vmatprep.subr.bf16.mxu0 %v1625
        %2895 = vmatpush1.bf16.msra.mxu0 %v1624
        %2896 = vmatprep.subr.bf16.mxu0 %v1631
        %2897 = vmatpush1.bf16.msra.mxu0 %v1630
        %2898 = vmatprep.subr.bf16.mxu0 %v1637
        %2899 = vmatpush1.bf16.msra.mxu0 %v1636
        %2900 = vmatprep.mubr.bf16.mxu0 %v2826
        %2901 = vmatmul.mubr.bf16.gmra.mrb[0].mxu0 %v2825
        %v2902 = vpop.f32.mrb[0].mxu0
        %v2903 = vadd.f32 0.0, %v2902
        %v2904 = vpop.f32.mrb[0].mxu0
        %v2905 = vadd.f32 0.0, %v2904
        %v2906 = vpop.f32.mrb[0].mxu0
        %v2907 = vpop.f32.mrb[0].mxu0
        %2908 = vdwg.mxu0
        %2909 = vmatprep.subr.bf16.mxu0 %v1549
        %2910 = vmatpush1.bf16.msra.mxu0 %v1548
        %2911 = vmatprep.subr.bf16.mxu0 %v1555
        %2912 = vmatpush1.bf16.msra.mxu0 %v1554
        %2913 = vmatprep.subr.bf16.mxu0 %v1561
        %2914 = vmatpush1.bf16.msra.mxu0 %v1560
        %2915 = vmatprep.subr.bf16.mxu0 %v1567
        %2916 = vmatpush1.bf16.msra.mxu0 %v1566
        %2917 = vmatprep.subr.bf16.mxu0 %v1573
        %2918 = vmatpush1.bf16.msra.mxu0 %v1572
        %2919 = vmatprep.subr.bf16.mxu0 %v1579
        %2920 = vmatpush1.bf16.msra.mxu0 %v1578
        %2921 = vmatprep.subr.bf16.mxu0 %v1585
        %2922 = vmatpush1.bf16.msra.mxu0 %v1584
        %2923 = vmatprep.subr.bf16.mxu0 %v1591
        %2924 = vmatpush1.bf16.msra.mxu0 %v1590
        %2925 = vmatprep.subr.bf16.mxu0 %v1597
        %2926 = vmatpush1.bf16.msra.mxu0 %v1596
        %2927 = vmatprep.subr.bf16.mxu0 %v1603
        %2928 = vmatpush1.bf16.msra.mxu0 %v1602
        %2929 = vmatprep.subr.bf16.mxu0 %v1609
        %2930 = vmatpush1.bf16.msra.mxu0 %v1608
        %2931 = vmatprep.subr.bf16.mxu0 %v1615
        %2932 = vmatpush1.bf16.msra.mxu0 %v1614
        %2933 = vmatprep.subr.bf16.mxu0 %v1621
        %2934 = vmatpush1.bf16.msra.mxu0 %v1620
        %2935 = vmatprep.subr.bf16.mxu0 %v1627
        %2936 = vmatpush1.bf16.msra.mxu0 %v1626
        %2937 = vmatprep.subr.bf16.mxu0 %v1633
        %2938 = vmatpush1.bf16.msra.mxu0 %v1632
        %2939 = vmatprep.subr.bf16.mxu0 %v1639
        %2940 = vmatpush1.bf16.msra.mxu0 %v1638
        %2941 = vmatprep.mubr.bf16.mxu0 %v2826
        %2942 = vmatmul.mubr.bf16.gmra.mrb[0].mxu0 %v2825
        %v2943 = vpop.f32.mrb[0].mxu0
        %v2944 = vadd.f32 0.0, %v2943
        %v2945 = vpop.f32.mrb[0].mxu0
        %v2946 = vadd.f32 0.0, %v2945
        %v2947 = vpop.f32.mrb[0].mxu0
        %v2948 = vpop.f32.mrb[0].mxu0
        %2949 = vdwg.mxu0
        %v2950 = vadd.f32 %v2819, %v2862
        %v2951 = vadd.f32 %v2820, %v2864
        %v2952 = vmul.f32 %v2950, 0.5
        %v2953 = vmul.f32 %v2951, 0.5
        %v2954 = vtanh.pop %v2952
        %v2955 = vtanh.pop %v2953
        %v2956 = vadd.f32 %v2954, 1.0
        %v2957 = vadd.f32 %v2955, 1.0
        %v2958 = vmul.f32 %v2956, 0.5
        %v2959 = vmul.f32 %v2957, 0.5
        %v2960 = vadd.f32 %v2821, %v2903
        %v2961 = vadd.f32 %v2822, %v2905
        %v2962 = vmul.f32 %v2960, 0.5
        %v2963 = vmul.f32 %v2961, 0.5
        %v2964 = vtanh.pop %v2962
        %v2965 = vtanh.pop %v2963
        %v2966 = vadd.f32 %v2964, 1.0
        %v2967 = vadd.f32 %v2965, 1.0
        %v2968 = vmul.f32 %v2966, 0.5
        %v2969 = vmul.f32 %v2967, 0.5
        %v2970 = vadd.f32 %v2944, %v1134
        %v2971 = vadd.f32 %v2946, %v1138
        %v2972 = vmul.f32 %v2958, %v2970
        %v2973 = vmul.f32 %v2959, %v2971
        %v2974 = vadd.f32 %v2823, %v2972
        %v2975 = vadd.f32 %v2824, %v2973
        %v2976 = vtanh.pop %v2974
        %v2977 = vtanh.pop %v2975
        %v2978 = vsub.f32 1.0, %v2968
        %v2979 = vsub.f32 1.0, %v2969
        %v2980 = vmul.f32 %v2978, %v2976
        %v2981 = vmul.f32 %v2979, %v2977
        %v2982 = vmul.f32 %v2968, %v2811
        %v2983 = vmul.f32 %v2969, %v2812
        %v2984 = vadd.f32 %v2980, %v2982
        %v2985 = vadd.f32 %v2981, %v2983
        %v2986 = vstv %s2815
        %vm2987 = vcmp.lt.s32.totalorder %v2986, %v1128
        %v2988 = vsel %vm2987, 1, 0
        %2989 = vset.pattern.permute.xlu0 0
        %2990 = vperm.xlu0 %2989, %v2988
        %v2991 = vpop.permute.xlu0 %2990
        %vm2992 = vcmp.eq.s32.totalorder %v2991, 1
        %v2993 = vsel %vm2992, %v2984, %v2811
        %v2994 = vsel %vm2992, %v2985, %v2812
        %s2995 = smul.u32 %s1142, 7
        %s2996 = sadd.s32 %s1147, %s2995
        %s2997 = sadd.s32 %s1144, %s2996
        %s2998 = smul.u32 %s2996, 6
        %s2999 = smul.addr %s2998, 8
        %s3000 = scalar_lea.vmem [#allocation2], %s2999
        %v3001 = vld [vmem:[%s3000] sm:$0xff]
        %v3002 = vld [vmem:[%s3000 + $0x8] sm:$0xff]
        %v3003 = vld [vmem:[%s3000 + $0x10] sm:$0xff]
        %v3004 = vld [vmem:[%s3000 + $0x18] sm:$0xff]
        %v3005 = vld [vmem:[%s3000 + $0x20] sm:$0xff]
        %v3006 = vld [vmem:[%s3000 + $0x28] sm:$0xff]
        %v3007 = vpack.c.bf16 %v2993, %v2993
        %v3008 = vpack.c.bf16 %v2994, %v2994
        %3009 = vmatprep.subr.bf16.mxu0 %v1545
        %3010 = vmatpush1.bf16.msra.mxu0 %v1544
        %3011 = vmatprep.subr.bf16.mxu0 %v1551
        %3012 = vmatpush1.bf16.msra.mxu0 %v1550
        %3013 = vmatprep.subr.bf16.mxu0 %v1557
        %3014 = vmatpush1.bf16.msra.mxu0 %v1556
        %3015 = vmatprep.subr.bf16.mxu0 %v1563
        %3016 = vmatpush1.bf16.msra.mxu0 %v1562
        %3017 = vmatprep.subr.bf16.mxu0 %v1569
        %3018 = vmatpush1.bf16.msra.mxu0 %v1568
        %3019 = vmatprep.subr.bf16.mxu0 %v1575
        %3020 = vmatpush1.bf16.msra.mxu0 %v1574
        %3021 = vmatprep.subr.bf16.mxu0 %v1581
        %3022 = vmatpush1.bf16.msra.mxu0 %v1580
        %3023 = vmatprep.subr.bf16.mxu0 %v1587
        %3024 = vmatpush1.bf16.msra.mxu0 %v1586
        %3025 = vmatprep.subr.bf16.mxu0 %v1593
        %3026 = vmatpush1.bf16.msra.mxu0 %v1592
        %3027 = vmatprep.subr.bf16.mxu0 %v1599
        %3028 = vmatpush1.bf16.msra.mxu0 %v1598
        %3029 = vmatprep.subr.bf16.mxu0 %v1605
        %3030 = vmatpush1.bf16.msra.mxu0 %v1604
        %3031 = vmatprep.subr.bf16.mxu0 %v1611
        %3032 = vmatpush1.bf16.msra.mxu0 %v1610
        %3033 = vmatprep.subr.bf16.mxu0 %v1617
        %3034 = vmatpush1.bf16.msra.mxu0 %v1616
        %3035 = vmatprep.subr.bf16.mxu0 %v1623
        %3036 = vmatpush1.bf16.msra.mxu0 %v1622
        %3037 = vmatprep.subr.bf16.mxu0 %v1629
        %3038 = vmatpush1.bf16.msra.mxu0 %v1628
        %3039 = vmatprep.subr.bf16.mxu0 %v1635
        %3040 = vmatpush1.bf16.msra.mxu0 %v1634
        %3041 = vmatprep.mubr.bf16.mxu0 %v3008
        %3042 = vmatmul.mubr.bf16.gmra.mrb[0].mxu0 %v3007
        %v3043 = vpop.f32.mrb[0].mxu0
        %v3044 = vadd.f32 0.0, %v3043
        %v3045 = vpop.f32.mrb[0].mxu0
        %v3046 = vadd.f32 0.0, %v3045
        %v3047 = vpop.f32.mrb[0].mxu0
        %v3048 = vpop.f32.mrb[0].mxu0
        %3049 = vdwg.mxu0
        %3050 = vmatprep.subr.bf16.mxu0 %v1547
        %3051 = vmatpush1.bf16.msra.mxu0 %v1546
        %3052 = vmatprep.subr.bf16.mxu0 %v1553
        %3053 = vmatpush1.bf16.msra.mxu0 %v1552
        %3054 = vmatprep.subr.bf16.mxu0 %v1559
        %3055 = vmatpush1.bf16.msra.mxu0 %v1558
        %3056 = vmatprep.subr.bf16.mxu0 %v1565
        %3057 = vmatpush1.bf16.msra.mxu0 %v1564
        %3058 = vmatprep.subr.bf16.mxu0 %v1571
        %3059 = vmatpush1.bf16.msra.mxu0 %v1570
        %3060 = vmatprep.subr.bf16.mxu0 %v1577
        %3061 = vmatpush1.bf16.msra.mxu0 %v1576
        %3062 = vmatprep.subr.bf16.mxu0 %v1583
        %3063 = vmatpush1.bf16.msra.mxu0 %v1582
        %3064 = vmatprep.subr.bf16.mxu0 %v1589
        %3065 = vmatpush1.bf16.msra.mxu0 %v1588
        %3066 = vmatprep.subr.bf16.mxu0 %v1595
        %3067 = vmatpush1.bf16.msra.mxu0 %v1594
        %3068 = vmatprep.subr.bf16.mxu0 %v1601
        %3069 = vmatpush1.bf16.msra.mxu0 %v1600
        %3070 = vmatprep.subr.bf16.mxu0 %v1607
        %3071 = vmatpush1.bf16.msra.mxu0 %v1606
        %3072 = vmatprep.subr.bf16.mxu0 %v1613
        %3073 = vmatpush1.bf16.msra.mxu0 %v1612
        %3074 = vmatprep.subr.bf16.mxu0 %v1619
        %3075 = vmatpush1.bf16.msra.mxu0 %v1618
        %3076 = vmatprep.subr.bf16.mxu0 %v1625
        %3077 = vmatpush1.bf16.msra.mxu0 %v1624
        %3078 = vmatprep.subr.bf16.mxu0 %v1631
        %3079 = vmatpush1.bf16.msra.mxu0 %v1630
        %3080 = vmatprep.subr.bf16.mxu0 %v1637
        %3081 = vmatpush1.bf16.msra.mxu0 %v1636
        %3082 = vmatprep.mubr.bf16.mxu0 %v3008
        %3083 = vmatmul.mubr.bf16.gmra.mrb[0].mxu0 %v3007
        %v3084 = vpop.f32.mrb[0].mxu0
        %v3085 = vadd.f32 0.0, %v3084
        %v3086 = vpop.f32.mrb[0].mxu0
        %v3087 = vadd.f32 0.0, %v3086
        %v3088 = vpop.f32.mrb[0].mxu0
        %v3089 = vpop.f32.mrb[0].mxu0
        %3090 = vdwg.mxu0
        %3091 = vmatprep.subr.bf16.mxu0 %v1549
        %3092 = vmatpush1.bf16.msra.mxu0 %v1548
        %3093 = vmatprep.subr.bf16.mxu0 %v1555
        %3094 = vmatpush1.bf16.msra.mxu0 %v1554
        %3095 = vmatprep.subr.bf16.mxu0 %v1561
        %3096 = vmatpush1.bf16.msra.mxu0 %v1560
        %3097 = vmatprep.subr.bf16.mxu0 %v1567
        %3098 = vmatpush1.bf16.msra.mxu0 %v1566
        %3099 = vmatprep.subr.bf16.mxu0 %v1573
        %3100 = vmatpush1.bf16.msra.mxu0 %v1572
        %3101 = vmatprep.subr.bf16.mxu0 %v1579
        %3102 = vmatpush1.bf16.msra.mxu0 %v1578
        %3103 = vmatprep.subr.bf16.mxu0 %v1585
        %3104 = vmatpush1.bf16.msra.mxu0 %v1584
        %3105 = vmatprep.subr.bf16.mxu0 %v1591
        %3106 = vmatpush1.bf16.msra.mxu0 %v1590
        %3107 = vmatprep.subr.bf16.mxu0 %v1597
        %3108 = vmatpush1.bf16.msra.mxu0 %v1596
        %3109 = vmatprep.subr.bf16.mxu0 %v1603
        %3110 = vmatpush1.bf16.msra.mxu0 %v1602
        %3111 = vmatprep.subr.bf16.mxu0 %v1609
        %3112 = vmatpush1.bf16.msra.mxu0 %v1608
        %3113 = vmatprep.subr.bf16.mxu0 %v1615
        %3114 = vmatpush1.bf16.msra.mxu0 %v1614
        %3115 = vmatprep.subr.bf16.mxu0 %v1621
        %3116 = vmatpush1.bf16.msra.mxu0 %v1620
        %3117 = vmatprep.subr.bf16.mxu0 %v1627
        %3118 = vmatpush1.bf16.msra.mxu0 %v1626
        %3119 = vmatprep.subr.bf16.mxu0 %v1633
        %3120 = vmatpush1.bf16.msra.mxu0 %v1632
        %3121 = vmatprep.subr.bf16.mxu0 %v1639
        %3122 = vmatpush1.bf16.msra.mxu0 %v1638
        %3123 = vmatprep.mubr.bf16.mxu0 %v3008
        %3124 = vmatmul.mubr.bf16.gmra.mrb[0].mxu0 %v3007
        %v3125 = vpop.f32.mrb[0].mxu0
        %v3126 = vadd.f32 0.0, %v3125
        %v3127 = vpop.f32.mrb[0].mxu0
        %v3128 = vadd.f32 0.0, %v3127
        %v3129 = vpop.f32.mrb[0].mxu0
        %v3130 = vpop.f32.mrb[0].mxu0
        %3131 = vdwg.mxu0
        %v3132 = vadd.f32 %v3001, %v3044
        %v3133 = vadd.f32 %v3002, %v3046
        %v3134 = vmul.f32 %v3132, 0.5
        %v3135 = vmul.f32 %v3133, 0.5
        %v3136 = vtanh.pop %v3134
        %v3137 = vtanh.pop %v3135
        %v3138 = vadd.f32 %v3136, 1.0
        %v3139 = vadd.f32 %v3137, 1.0
        %v3140 = vmul.f32 %v3138, 0.5
        %v3141 = vmul.f32 %v3139, 0.5
        %v3142 = vadd.f32 %v3003, %v3085
        %v3143 = vadd.f32 %v3004, %v3087
        %v3144 = vmul.f32 %v3142, 0.5
        %v3145 = vmul.f32 %v3143, 0.5
        %v3146 = vtanh.pop %v3144
        %v3147 = vtanh.pop %v3145
        %v3148 = vadd.f32 %v3146, 1.0
        %v3149 = vadd.f32 %v3147, 1.0
        %v3150 = vmul.f32 %v3148, 0.5
        %v3151 = vmul.f32 %v3149, 0.5
        %v3152 = vadd.f32 %v3126, %v1134
        %v3153 = vadd.f32 %v3128, %v1138
        %v3154 = vmul.f32 %v3140, %v3152
        %v3155 = vmul.f32 %v3141, %v3153
        %v3156 = vadd.f32 %v3005, %v3154
        %v3157 = vadd.f32 %v3006, %v3155
        %v3158 = vtanh.pop %v3156
        %v3159 = vtanh.pop %v3157
        %v3160 = vsub.f32 1.0, %v3150
        %v3161 = vsub.f32 1.0, %v3151
        %v3162 = vmul.f32 %v3160, %v3158
        %v3163 = vmul.f32 %v3161, %v3159
        %v3164 = vmul.f32 %v3150, %v2993
        %v3165 = vmul.f32 %v3151, %v2994
        %v3166 = vadd.f32 %v3162, %v3164
        %v3167 = vadd.f32 %v3163, %v3165
        %v3168 = vstv %s2997
        %vm3169 = vcmp.lt.s32.totalorder %v3168, %v1128
        %v3170 = vsel %vm3169, 1, 0
        %3171 = vset.pattern.permute.xlu0 0
        %3172 = vperm.xlu0 %3171, %v3170
        %v3173 = vpop.permute.xlu0 %3172
        %vm3174 = vcmp.eq.s32.totalorder %v3173, 1
        %v3175 = vsel %vm3174, %v3166, %v2993
        %v3176 = vsel %vm3174, %v3167, %v2994
        %3177 = vst [vmem:[#allocation3] sm:$0xff] %v3175
        %3178 = vst [vmem:[#allocation3 + $0x8] sm:$0xff] %v3176
        // Predicated region
        $region61: #{baseline_gru_forward.2} parent=47 // pred_check
          %p3179 = pneg %p491
        $region62: #{baseline_gru_forward.2} parent=47 // pred_check_branch
          %3181 = sbr.rel (%p3179) target = $region64
        $region63: #{baseline_gru_forward.2} parent=47 // pred_region
          %3182 = vst [vmem:[%s489] sm:$0xff] %v3175
          %3183 = vst [vmem:[%s489 + $0x8] sm:$0xff] %v3176
        $region64: #{baseline_gru_forward.2} parent=47 // pred_fallthru
          _
        %p3184 = scmp.lt.s32.totalorder %s29, 1
        %s3185 = scalar_select %p3184, %s29, 1
        %p3186 = scmp.lt.s32.totalorder %s30, 0
        %s3187 = scalar_select %p3186, %s30, 0
        %s3188 = smul.addr %s3187, 2
        %s3189 = smul.addr %s3185, 2
        %s3190 = sadd.s32 %s3188, %s3189
        %s3191 = smul.addr %s3190, 8
        %s3192 = scalar_lea.vmem %s7, %s3191
        // Predicated region
        $region65: #{baseline_gru_forward.2} parent=47 // pred_check
          %p3193 = pneg %p253
        $region66: #{baseline_gru_forward.2} parent=47 // pred_check_branch
          %3195 = sbr.rel (%p3193) target = $region68
        $region67: #{baseline_gru_forward.2} parent=47 // pred_region
          _
        $region68: #{baseline_gru_forward.2} parent=47 // pred_fallthru
          _
      $region48: #{baseline_gru_forward.2} parent=5 // pred_fallthru
        _
      %p3196 = scmp.le.s32.totalorder 2, %s19
      // Predicated region
      $region69: #{baseline_gru_forward.2} parent=5 // pred_check
        %p3197 = pneg %p3196
      $region70: #{baseline_gru_forward.2} parent=5 // pred_check_branch
        %3199 = sbr.rel (%p3197) target = $region72
      $region71: #{baseline_gru_forward.2} parent=5 // pred_region
        %s3200 = ssub.s32 %s19, 2
        // Predicated region
        $region73: #{baseline_gru_forward.2} parent=71 // pred_check
          %p3201 = pneg %p259
        $region74: #{baseline_gru_forward.2} parent=71 // pred_check_branch
          %3203 = sbr.rel (%p3201) target = $region76
        $region75: #{baseline_gru_forward.2} parent=71 // pred_region
          %p3204 = scmp.lt.s32.totalorder %s32, 1
          %s3205 = scalar_select %p3204, %s32, 1
          %p3206 = scmp.lt.s32.totalorder %s33, 0
          %s3207 = scalar_select %p3206, %s33, 0
          %s3208 = smul.addr %s3207, 2
          %s3209 = smul.addr %s3205, 2
          %s3210 = sadd.s32 %s3208, %s3209
          %s3211 = smul.addr %s3210, 8
          %s3212 = scalar_lea.vmem %s7, %s3211
        $region76: #{baseline_gru_forward.2} parent=71 // pred_fallthru
          _
      $region72: #{baseline_gru_forward.2} parent=5 // pred_fallthru
        _
    $region6: #{baseline_gru_forward.2} parent=1 // loop_footer
      %s23 = sadd.s32 1, %s19
    $region7: #{baseline_gru_forward.2} parent=1 // loop_footer_branch
      %18 = sbr.rel target = $region3
    $region8: #{baseline_gru_forward.2} parent=1 // loop_exit
      _
    %3213 = vsyncpa [#allocation5], 1
    %s3214 = scalar_lea.sflag [#allocation5], 1
    %3215 = vsyncpa %s3214, 1
    %3216 = vsyncpa [#allocation7], 1
    %s3217 = scalar_lea.sflag [#allocation7], 1
    %3218 = vsyncpa %s3217, 1

</llo_original>
